<compile_context>
chip_gen: v7x
topology: tpu7x:2x2x1
jax: 0.10.0
libtpu: 0.0.40
codegen_flags: <defaults>
</compile_context>

<pallas_src>
import functools

import jax
import jax.numpy as jnp
from jax.experimental import pallas as pl
from jax.experimental.pallas import tpu as pltpu


def _round_up(x, m):
    return ((x + m - 1) // m) * m


# -----------------------------------------------------------------------------
# The fused kernel: 5 SAGE layers (grid steps) + pooling + MLP head + log_softmax
# -----------------------------------------------------------------------------
def _graph_cnn_kernel(
    a_ref,            # (N, N)        bf16  resident: exact edge-count adjacency
    invdeg_ref,       # (N, 1)        f32   resident: 1 / in-degree
    x0_ref,           # (N, Fpad)     bf16  resident: padded input features
    w0_ref,           # (2*Fpad, H)   bf16  resident: layer-0 stacked [W_l ; W_r]
    wrest_ref,        # (1, 2H, H)    bf16  streamed per layer (layers 1..L-1)
    b_ref,            # (L, 1, H)     f32   resident: lin_l biases
    pool_onehot_ref,  # (G, N)        bf16  resident: exact 0/1 membership
    pool_invcnt_ref,  # (G, 1)        f32   resident: 1 / node count per graph
    pool_maskT_ref,   # (N, G)        f32   resident: membership mask, transposed
    w1_ref, b1_ref,   # (2H, H) bf16 / (1, H) f32
    w2_ref, b2_ref,   # (H, H)  bf16 / (1, H) f32
    w3_ref, b3_ref,   # (H, C)  bf16 / (1, C) f32
    out_ref,          # (G, C)        f32   log-softmax output
    h_ref,            # scratch (N, H) bf16 node activations (persist across layers)
):
    layer = pl.program_id(0)
    last = pl.num_programs(0) - 1
    hidden = h_ref.shape[1]
    f_pad = w0_ref.shape[0] // 2

    def sage(h_bf16, wl_bf16, wr_bf16, bias_f32):
        # mean aggregation: exact bf16 0/1 A on the MXU, f32 1/deg scale on the VPU
        agg = (jnp.dot(a_ref[...], h_bf16, preferred_element_type=jnp.float32)
               * invdeg_ref[...]).astype(jnp.bfloat16)
        # two accumulating dots sharing one f32 accumulator (no (N, 2H) concat copy)
        y = (jnp.dot(h_bf16, wr_bf16, preferred_element_type=jnp.float32)
             + jnp.dot(agg, wl_bf16, preferred_element_type=jnp.float32)
             + bias_f32)
        return jnp.tanh(y).astype(jnp.bfloat16)        # f32 tanh (v5e-safe), bf16 store

    @pl.when(layer == 0)
    def _():
        h_ref[...] = sage(x0_ref[...], w0_ref[:f_pad, :], w0_ref[f_pad:, :], b_ref[0])

    @pl.when(layer > 0)
    def _():
        h_ref[...] = sage(h_ref[...],
                          wrest_ref[0, :hidden, :],
                          wrest_ref[0, hidden:, :],
                          b_ref[layer])

    @pl.when(layer == last)
    def _():
        h_bf = h_ref[...]                                  # (N, H) bf16
        h_f32 = h_bf.astype(jnp.float32)
        g_count = pool_onehot_ref.shape[0]

        # global mean pool: one MXU matmul (exact 0/1 bf16) + f32 inverse-count scale
        mean_pool = (jnp.dot(pool_onehot_ref[...], h_bf,
                             preferred_element_type=jnp.float32)
                     * pool_invcnt_ref[...])               # (G, H) f32

        # global max pool: per-graph masked reduce; working set stays (N, H).
        # Empty graphs yield ~-1e30 (reference gives -inf -> NaN through the MLP).
        neg = jnp.float32(-1e30)
        rows = []
        for g in range(g_count):                           # static unroll over graphs
            m = pool_maskT_ref[:, g:g + 1] > 0.0           # (N, 1) lane slice
            rows.append(jnp.max(jnp.where(m, h_f32, neg), axis=0, keepdims=True))
        max_pool = jnp.concatenate(rows, axis=0)           # (G, H) f32

        # Dropout(p=0.5) is identity in eval mode.
        # lin1 on cat([max, mean]) as two accumulating dots (no concat copy).
        z1 = jnp.tanh(
            jnp.dot(max_pool.astype(jnp.bfloat16), w1_ref[:hidden, :],
                    preferred_element_type=jnp.float32)
            + jnp.dot(mean_pool.astype(jnp.bfloat16), w1_ref[hidden:, :],
                      preferred_element_type=jnp.float32)
            + b1_ref[...])
        z2 = jnp.tanh(jnp.dot(z1.astype(jnp.bfloat16), w2_ref[...],
                              preferred_element_type=jnp.float32) + b2_ref[...])
        logits = jnp.dot(z2.astype(jnp.bfloat16), w3_ref[...],
                         preferred_element_type=jnp.float32) + b3_ref[...]

        shifted = logits - jnp.max(logits, axis=1, keepdims=True)
        lse = jnp.log(jnp.sum(jnp.exp(shifted), axis=1, keepdims=True))
        out_ref[...] = shifted - lse


# -----------------------------------------------------------------------------
# Wrapper: input prep (bf16 casts, padding, weight stacking) + pallas_call
# -----------------------------------------------------------------------------
def graph_cnn_forward(params, x, edge_index, batch_index, num_graphs,
                      single_buffer_resident=True):
    n, f = x.shape
    hidden = params["sage"][0][0].shape[1]
    num_classes = params["lin3"][0].shape[1]
    num_layers = len(params["sage"])
    f_pad = _round_up(max(f, 128), 128)

    # exact edge-count adjacency (bf16-exact small ints) + f32 inverse in-degree
    a_cnt, inv_deg = build_adjacency(edge_index, n)
    a_bf = a_cnt.astype(jnp.bfloat16)

    # pad the input feature dim up to a full 128-lane multiple
    x0 = jnp.zeros((n, f_pad), jnp.float32).at[:, :f].set(x).astype(jnp.bfloat16)

    # layer 0: stacked [W_l ; W_r], fan-in rows zero-padded to f_pad
    wl0, _, wr0 = params["sage"][0]
    w0 = (jnp.zeros((2 * f_pad, hidden), jnp.float32)
          .at[:f, :].set(wl0)
          .at[f_pad:f_pad + f, :].set(wr0)
          .astype(jnp.bfloat16))

    # layers 1..L-1: stacked [W_l ; W_r] -> (L-1, 2H, H), streamed one per grid step
    w_rest = jnp.stack(
        [jnp.concatenate([wl, wr], axis=0) for (wl, _, wr) in params["sage"][1:]],
        axis=0).astype(jnp.bfloat16)

    # all lin_l biases -> (L, 1, H), f32
    b_all = jnp.stack([bl for (_, bl, _) in params["sage"]], axis=0)

    # pooling operands
    onehot = (batch_index[None, :] == jnp.arange(num_graphs)[:, None]).astype(jnp.float32)
    counts = jnp.clip(onehot.sum(axis=1, keepdims=True), 1.0, None)
    pool_onehot = onehot.astype(jnp.bfloat16)          # exact 0/1
    pool_invcnt = 1.0 / counts                         # (G, 1) f32
    pool_maskT = onehot.T                              # (N, G) f32

    (w1, b1), (w2, b2), (w3, b3) = params["lin1"], params["lin2"], params["lin3"]
    w1b, w2b, w3b = (w.astype(jnp.bfloat16) for w in (w1, w2, w3))

    inputs = (a_bf, inv_deg, x0, w0, w_rest, b_all,
              pool_onehot, pool_invcnt, pool_maskT,
              w1b, b1, w2b, b2, w3b, b3)

    # Resident operands (constant block index): request single buffering so they
    # don't burn a second VMEM copy. Streamed per-layer weights keep default depth 2.
    res_mode = pl.Buffered(1) if single_buffer_resident else None

    def resident(arr):
        nd = arr.ndim
        return pl.BlockSpec(arr.shape, lambda l, _z=(0,) * nd: _z,
                            pipeline_mode=res_mode)

    in_specs = [
        resident(a_bf), resident(inv_deg), resident(x0), resident(w0),
        pl.BlockSpec((1, 2 * hidden, hidden),
                     lambda l: (jnp.maximum(l - 1, 0), 0, 0)),
        resident(b_all), resident(pool_onehot), resident(pool_invcnt),
        resident(pool_maskT),
        resident(w1b), resident(b1), resident(w2b), resident(b2),
        resident(w3b), resident(b3),
    ]
    out_spec = pl.BlockSpec((num_graphs, num_classes), lambda l: (0, 0))

    # --- VMEM budget: derived from the actual buffers, clamped per generation ----
    def nbytes(a):
        return int(a.size) * a.dtype.itemsize

    buf_mult = 1 if single_buffer_resident else 2
    resident_bytes = buf_mult * (sum(nbytes(a) for a in inputs) - nbytes(w_rest))
    streamed_bytes = 2 * (2 * hidden * hidden * 2)            # double-buffered bf16 block
    scratch_bytes = n * hidden * 2                            # bf16 h scratch
    temp_bytes = 6 * n * max(hidden, f_pad) * 4               # matmul / elementwise temps
    out_bytes = 2 * num_graphs * num_classes * 4
    vmem_needed = resident_bytes + streamed_bytes + scratch_bytes + temp_bytes + out_bytes

    try:
        cap = int(getattr(pltpu.get_tpu_info(), "vmem_capacity_bytes", 0)) or (64 << 20)
    except Exception:  # pragma: no cover - conservative default if query unavailable
        cap = 64 << 20
    vmem_limit = int(min(max(vmem_needed + (4 << 20), 32 << 20),
                         max(cap - (8 << 20), 32 << 20)))

    # --- advisory cost estimate -------------------------------------------------
    flops = (2 * n * n * f_pad + 2 * n * (2 * f_pad) * hidden
             + (num_layers - 1) * (2 * n * n * hidden + 2 * n * (2 * hidden) * hidden)
             + 2 * num_graphs * n * hidden
             + 2 * num_graphs * (2 * hidden) * hidden
             + 2 * num_graphs * hidden * hidden
             + 2 * num_graphs * hidden * num_classes)
    transcendentals = (num_layers * n * hidden + 2 * num_graphs * hidden
                       + num_graphs * num_classes)
    bytes_accessed = (sum(nbytes(a) for a in inputs)
                      + num_graphs * num_classes * 4)

    return pl.pallas_call(
        _graph_cnn_kernel,
        out_shape=jax.ShapeDtypeStruct((num_graphs, num_classes), jnp.float32),
        grid_spec=pltpu.PrefetchScalarGridSpec(
            num_scalar_prefetch=0,
            grid=(num_layers,),
            in_specs=in_specs,
            out_specs=out_spec,
            scratch_shapes=[pltpu.VMEM((n, hidden), jnp.bfloat16)]),
        compiler_params=pltpu.CompilerParams(
            dimension_semantics=("arbitrary",),      # layer-to-layer dependency
            vmem_limit_bytes=vmem_limit),
        cost_estimate=pl.CostEstimate(flops=flops,
                                      transcendentals=transcendentals,
                                      bytes_accessed=bytes_accessed),
    )(*inputs)


# -----------------------------------------------------------------------------
# Parameter init + graph preprocessing (plain JAX)
# -----------------------------------------------------------------------------
def linear_params(key, fan_in, fan_out, bias=True):
    """Deterministic Linear-like init: U(-1/sqrt(fan_in), 1/sqrt(fan_in))."""
    k_w, k_b = jax.random.split(key)
    bound = 1.0 / jnp.sqrt(jnp.float32(fan_in))
    w = jax.random.uniform(k_w, (fan_in, fan_out), jnp.float32, -bound, bound)
    b = (jax.random.uniform(k_b, (1, fan_out), jnp.float32, -bound, bound)
         if bias else None)
    return w, b


def init_graph_cnn_params(key, num_features, hidden, num_classes):
    keys = jax.random.split(key, 16)
    params = {}
    dims = [(num_features, hidden)] + [(hidden, hidden)] * 4
    sage = []
    for i, (cin, cout) in enumerate(dims):
        wl, bl = linear_params(keys[2 * i], cin, cout, bias=True)      # lin_l (+bias)
        wr, _ = linear_params(keys[2 * i + 1], cin, cout, bias=False)  # lin_r
        sage.append((wl, bl, wr))
    params["sage"] = sage
    params["lin1"] = linear_params(keys[10], 2 * hidden, hidden)
    params["lin2"] = linear_params(keys[11], hidden, hidden)
    params["lin3"] = linear_params(keys[12], hidden, num_classes)
    return params


def build_adjacency(edge_index, num_nodes):
    """Dense edge-count adjacency A[i, j] = #edges j->i, plus 1/in-degree column."""
    src, dst = edge_index[0], edge_index[1]
    a = jnp.zeros((num_nodes, num_nodes), jnp.float32)
    a = a.at[dst, src].add(1.0)
    deg = jnp.clip(a.sum(axis=1, keepdims=True), 1.0, None)
    return a, 1.0 / deg


def graph_cnn_reference(params, x, edge_index, batch_index, num_graphs):
    """Pure-JAX f32 reference of the same forward pass."""
    a, inv_deg = build_adjacency(edge_index, x.shape[0])
    a = a * inv_deg
    h = x
    for wl, bl, wr in params["sage"]:
        h = jnp.tanh((a @ h) @ wl + bl + h @ wr)
    onehot = (batch_index[None, :] == jnp.arange(num_graphs)[:, None]).astype(jnp.float32)
    counts = jnp.clip(onehot.sum(axis=1, keepdims=True), 1.0, None)
    mean_pool = (onehot / counts) @ h
    max_pool = jnp.max(jnp.where(onehot[:, :, None] > 0, h[None], -jnp.inf), axis=1)
    z = jnp.concatenate([max_pool, mean_pool], axis=1)
    (w1, b1), (w2, b2), (w3, b3) = params["lin1"], params["lin2"], params["lin3"]
    z = jnp.tanh(z @ w1 + b1)
    z = jnp.tanh(z @ w2 + b2)
    logits = z @ w3 + b3
    return jax.nn.log_softmax(logits, axis=1)


# -----------------------------------------------------------------------------
if __name__ == "__main__":
    # Small demo shapes consistent with the module
    # (num_features -> hidden x5 SAGE -> pooled 2*hidden -> hidden -> hidden -> classes).
    NUM_NODES = 128
    NUM_FEATURES = 16
    HIDDEN = 128          # module uses hidden_channels=512; kept small for the demo
    NUM_CLASSES = 8
    NUM_GRAPHS = 2
    NUM_EDGES = 512

    key = jax.random.PRNGKey(0)
    k_x, k_src, k_dst, k_params = jax.random.split(key, 4)

    x = jax.random.normal(k_x, (NUM_NODES, NUM_FEATURES), jnp.float32)
    src = jax.random.randint(k_src, (NUM_EDGES,), 0, NUM_NODES)
    dst = jax.random.randint(k_dst, (NUM_EDGES,), 0, NUM_NODES)
    edge_index = jnp.stack([src, dst], axis=0)                                  # (2, E)
    batch_index = (jnp.arange(NUM_NODES) >= NUM_NODES // 2).astype(jnp.int32)   # 2 graphs

    params = init_graph_cnn_params(k_params, NUM_FEATURES, HIDDEN, NUM_CLASSES)

    def make_fwd(single_buffer_resident):
        return jax.jit(functools.partial(
            graph_cnn_forward, num_graphs=NUM_GRAPHS,
            single_buffer_resident=single_buffer_resident))

    try:
        out = jax.block_until_ready(make_fwd(True)(params, x, edge_index, batch_index))
    except Exception:
        # Compatibility guard: if this jax build rejects pl.Buffered(1) on resident
        # BlockSpecs, fall back to default double buffering (previously verified path).
        out = jax.block_until_ready(make_fwd(False)(params, x, edge_index, batch_index))

    assert out.shape == (NUM_GRAPHS, NUM_CLASSES)
    # log-softmax rows must exponentiate-sum to 1
    assert bool(jnp.all(jnp.abs(jnp.exp(out).sum(axis=1) - 1.0) < 1e-3))
    # bf16-matmul kernel vs f32 pure-JAX reference (generous tolerance for bf16 drift)
    ref = graph_cnn_reference(params, x, edge_index, batch_index, NUM_GRAPHS)
    err = float(jnp.max(jnp.abs(out - ref)))
    assert err < 0.25, f"max |kernel - reference| too large: {err}"
    print("KERNEL_OK")
</pallas_src>

<mosaic_0001>
module attributes {stable_mosaic.version = 11 : i64} {
  func.func private @main(%arg0: i32) attributes {dimension_semantics = [#tpu.dimension_semantics<core_parallel>], iteration_bounds = array<i64: 2>, tpu.core_type = #tpu.core_type<sc_scalar_subcore>, window_params = []} {
    return
  }
}

module attributes {stable_mosaic.version = 11 : i64} {
  func.func private @main(%arg0: i32) attributes {dimension_semantics = [#tpu.dimension_semantics<core_parallel>], iteration_bounds = array<i64: 2>, tpu.core_type = #tpu.core_type<sc_scalar_subcore>, window_params = []} {
    return
  }
}

module attributes {stable_mosaic.version = 11 : i64} {
  func.func @_graph_cnn_kernel(%arg0: i32, %arg1: memref<128x128xbf16, #tpu.memory_space<vmem>>, %arg2: memref<128x1xf32, #tpu.memory_space<vmem>>, %arg3: memref<128x128xbf16, #tpu.memory_space<vmem>>, %arg4: memref<256x128xbf16, #tpu.memory_space<vmem>>, %arg5: memref<1x256x128xbf16, #tpu.memory_space<vmem>>, %arg6: memref<5x1x128xf32, #tpu.memory_space<vmem>>, %arg7: memref<2x128xbf16, #tpu.memory_space<vmem>>, %arg8: memref<2x1xf32, #tpu.memory_space<vmem>>, %arg9: memref<128x2xf32, #tpu.memory_space<vmem>>, %arg10: memref<256x128xbf16, #tpu.memory_space<vmem>>, %arg11: memref<1x128xf32, #tpu.memory_space<vmem>>, %arg12: memref<128x128xbf16, #tpu.memory_space<vmem>>, %arg13: memref<1x128xf32, #tpu.memory_space<vmem>>, %arg14: memref<128x8xbf16, #tpu.memory_space<vmem>>, %arg15: memref<1x8xf32, #tpu.memory_space<vmem>>, %arg16: memref<2x8xf32, #tpu.memory_space<vmem>>, %arg17: memref<128x128xbf16, #tpu.memory_space<vmem>>) attributes {dimension_semantics = [#tpu.dimension_semantics<arbitrary>], iteration_bounds = array<i64: 5>, scalar_prefetch = 0 : i64, scratch_operands = 1 : i64, tpu.core_type = #tpu.core_type<tc>, window_params = [{pipeline_mode = #tpu.pipeline_mode<synchronous>, transform_indices = @transform_0, window_bounds = array<i64: 128, 128>}, {pipeline_mode = #tpu.pipeline_mode<synchronous>, transform_indices = @transform_1, window_bounds = array<i64: 128, 1>}, {pipeline_mode = #tpu.pipeline_mode<synchronous>, transform_indices = @transform_2, window_bounds = array<i64: 128, 128>}, {pipeline_mode = #tpu.pipeline_mode<synchronous>, transform_indices = @transform_3, window_bounds = array<i64: 256, 128>}, {transform_indices = @transform_4, window_bounds = array<i64: 1, 256, 128>}, {pipeline_mode = #tpu.pipeline_mode<synchronous>, transform_indices = @transform_5, window_bounds = array<i64: 5, 1, 128>}, {pipeline_mode = #tpu.pipeline_mode<synchronous>, transform_indices = @transform_6, window_bounds = array<i64: 2, 128>}, {pipeline_mode = #tpu.pipeline_mode<synchronous>, transform_indices = @transform_7, window_bounds = array<i64: 2, 1>}, {pipeline_mode = #tpu.pipeline_mode<synchronous>, transform_indices = @transform_8, window_bounds = array<i64: 128, 2>}, {pipeline_mode = #tpu.pipeline_mode<synchronous>, transform_indices = @transform_9, window_bounds = array<i64: 256, 128>}, {pipeline_mode = #tpu.pipeline_mode<synchronous>, transform_indices = @transform_10, window_bounds = array<i64: 1, 128>}, {pipeline_mode = #tpu.pipeline_mode<synchronous>, transform_indices = @transform_11, window_bounds = array<i64: 128, 128>}, {pipeline_mode = #tpu.pipeline_mode<synchronous>, transform_indices = @transform_12, window_bounds = array<i64: 1, 128>}, {pipeline_mode = #tpu.pipeline_mode<synchronous>, transform_indices = @transform_13, window_bounds = array<i64: 128, 8>}, {pipeline_mode = #tpu.pipeline_mode<synchronous>, transform_indices = @transform_14, window_bounds = array<i64: 1, 8>}, {pipeline_mode = #tpu.pipeline_mode<synchronous>, transform_indices = @transform_15, window_bounds = array<i64: 2, 8>}]} {
    %c0_i32 = arith.constant 0 : i32
    %0 = arith.cmpi eq, %arg0, %c0_i32 : i32
    %1 = arith.extui %0 : i1 to i32
    %c0_i32_0 = arith.constant 0 : i32
    %2 = arith.cmpi ne, %1, %c0_i32_0 : i32
    scf.if %2 {
      %c0 = arith.constant 0 : index
      %c0_4 = arith.constant 0 : index
      %9 = vector.load %arg3[%c0, %c0_4] : memref<128x128xbf16, #tpu.memory_space<vmem>>, vector<128x128xbf16>
      %c0_5 = arith.constant 0 : index
      %c0_6 = arith.constant 0 : index
      %10 = vector.load %arg4[%c0_5, %c0_6] : memref<256x128xbf16, #tpu.memory_space<vmem>>, vector<128x128xbf16>
      %c128 = arith.constant 128 : index
      %c0_7 = arith.constant 0 : index
      %11 = vector.load %arg4[%c128, %c0_7] : memref<256x128xbf16, #tpu.memory_space<vmem>>, vector<128x128xbf16>
      %c0_8 = arith.constant 0 : index
      %c0_9 = arith.constant 0 : index
      %c0_10 = arith.constant 0 : index
      %12 = vector.load %arg6[%c0_8, %c0_9, %c0_10] : memref<5x1x128xf32, #tpu.memory_space<vmem>>, vector<1x1x128xf32>
      %13 = vector.shape_cast %12 : vector<1x1x128xf32> to vector<1x128xf32>
      %c0_11 = arith.constant 0 : index
      %c0_12 = arith.constant 0 : index
      %14 = vector.load %arg1[%c0_11, %c0_12] : memref<128x128xbf16, #tpu.memory_space<vmem>>, vector<128x128xbf16>
      %cst = arith.constant dense<0.000000e+00> : vector<128x128xf32>
      %15 = tpu.matmul %14, %9, %cst {dimension_numbers = #tpu.dot_dimension_numbers<[1], [0], [0], [1], [0, 0, 1, 1], [], []>} : vector<128x128xbf16>, vector<128x128xbf16>, vector<128x128xf32> -> vector<128x128xf32>
      %c0_13 = arith.constant 0 : index
      %c0_14 = arith.constant 0 : index
      %16 = vector.load %arg2[%c0_13, %c0_14] : memref<128x1xf32, #tpu.memory_space<vmem>>, vector<128x1xf32>
      %17 = vector.broadcast %16 : vector<128x1xf32> to vector<128x128xf32>
      %18 = arith.mulf %15, %17 : vector<128x128xf32>
      %19 = arith.truncf %18 : vector<128x128xf32> to vector<128x128xbf16>
      %cst_15 = arith.constant dense<0.000000e+00> : vector<128x128xf32>
      %20 = tpu.matmul %9, %11, %cst_15 {dimension_numbers = #tpu.dot_dimension_numbers<[1], [0], [0], [1], [0, 0, 1, 1], [], []>} : vector<128x128xbf16>, vector<128x128xbf16>, vector<128x128xf32> -> vector<128x128xf32>
      %cst_16 = arith.constant dense<0.000000e+00> : vector<128x128xf32>
      %21 = tpu.matmul %19, %10, %cst_16 {dimension_numbers = #tpu.dot_dimension_numbers<[1], [0], [0], [1], [0, 0, 1, 1], [], []>} : vector<128x128xbf16>, vector<128x128xbf16>, vector<128x128xf32> -> vector<128x128xf32>
      %22 = arith.addf %20, %21 : vector<128x128xf32>
      %23 = vector.broadcast %13 : vector<1x128xf32> to vector<128x128xf32>
      %24 = arith.addf %22, %23 : vector<128x128xf32>
      %25 = math.tanh %24 : vector<128x128xf32>
      %26 = arith.truncf %25 : vector<128x128xf32> to vector<128x128xbf16>
      %c0_17 = arith.constant 0 : index
      %c0_18 = arith.constant 0 : index
      %27 = vector.load %arg17[%c0_17, %c0_18] : memref<128x128xbf16, #tpu.memory_space<vmem>>, vector<128x128xbf16>
      tpu.vector_store %arg17[%c0_17, %c0_18], %26 {strides = array<i32>} : memref<128x128xbf16, #tpu.memory_space<vmem>>, vector<128x128xbf16>,
    } else {
    }
    %c0_i32_1 = arith.constant 0 : i32
    %3 = arith.cmpi sgt, %arg0, %c0_i32_1 : i32
    %4 = arith.extui %3 : i1 to i32
    %c0_i32_2 = arith.constant 0 : i32
    %5 = arith.cmpi ne, %4, %c0_i32_2 : i32
    scf.if %5 {
      %c0 = arith.constant 0 : index
      %c0_4 = arith.constant 0 : index
      %9 = vector.load %arg17[%c0, %c0_4] : memref<128x128xbf16, #tpu.memory_space<vmem>>, vector<128x128xbf16>
      %c0_5 = arith.constant 0 : index
      %c0_6 = arith.constant 0 : index
      %c0_7 = arith.constant 0 : index
      %10 = vector.load %arg5[%c0_5, %c0_6, %c0_7] : memref<1x256x128xbf16, #tpu.memory_space<vmem>>, vector<1x128x128xbf16>
      %11 = vector.shape_cast %10 : vector<1x128x128xbf16> to vector<128x128xbf16>
      %c0_8 = arith.constant 0 : index
      %c128 = arith.constant 128 : index
      %c0_9 = arith.constant 0 : index
      %12 = vector.load %arg5[%c0_8, %c128, %c0_9] : memref<1x256x128xbf16, #tpu.memory_space<vmem>>, vector<1x128x128xbf16>
      %13 = vector.shape_cast %12 : vector<1x128x128xbf16> to vector<128x128xbf16>
      %14 = arith.index_cast %arg0 : i32 to index
      %c0_10 = arith.constant 0 : index
      %c0_11 = arith.constant 0 : index
      %15 = vector.load %arg6[%14, %c0_10, %c0_11] : memref<5x1x128xf32, #tpu.memory_space<vmem>>, vector<1x1x128xf32>
      %16 = vector.shape_cast %15 : vector<1x1x128xf32> to vector<1x128xf32>
      %c0_12 = arith.constant 0 : index
      %c0_13 = arith.constant 0 : index
      %17 = vector.load %arg1[%c0_12, %c0_13] : memref<128x128xbf16, #tpu.memory_space<vmem>>, vector<128x128xbf16>
      %cst = arith.constant dense<0.000000e+00> : vector<128x128xf32>
      %18 = tpu.matmul %17, %9, %cst {dimension_numbers = #tpu.dot_dimension_numbers<[1], [0], [0], [1], [0, 0, 1, 1], [], []>} : vector<128x128xbf16>, vector<128x128xbf16>, vector<128x128xf32> -> vector<128x128xf32>
      %c0_14 = arith.constant 0 : index
      %c0_15 = arith.constant 0 : index
      %19 = vector.load %arg2[%c0_14, %c0_15] : memref<128x1xf32, #tpu.memory_space<vmem>>, vector<128x1xf32>
      %20 = vector.broadcast %19 : vector<128x1xf32> to vector<128x128xf32>
      %21 = arith.mulf %18, %20 : vector<128x128xf32>
      %22 = arith.truncf %21 : vector<128x128xf32> to vector<128x128xbf16>
      %cst_16 = arith.constant dense<0.000000e+00> : vector<128x128xf32>
      %23 = tpu.matmul %9, %13, %cst_16 {dimension_numbers = #tpu.dot_dimension_numbers<[1], [0], [0], [1], [0, 0, 1, 1], [], []>} : vector<128x128xbf16>, vector<128x128xbf16>, vector<128x128xf32> -> vector<128x128xf32>
      %cst_17 = arith.constant dense<0.000000e+00> : vector<128x128xf32>
      %24 = tpu.matmul %22, %11, %cst_17 {dimension_numbers = #tpu.dot_dimension_numbers<[1], [0], [0], [1], [0, 0, 1, 1], [], []>} : vector<128x128xbf16>, vector<128x128xbf16>, vector<128x128xf32> -> vector<128x128xf32>
      %25 = arith.addf %23, %24 : vector<128x128xf32>
      %26 = vector.broadcast %16 : vector<1x128xf32> to vector<128x128xf32>
      %27 = arith.addf %25, %26 : vector<128x128xf32>
      %28 = math.tanh %27 : vector<128x128xf32>
      %29 = arith.truncf %28 : vector<128x128xf32> to vector<128x128xbf16>
      %c0_18 = arith.constant 0 : index
      %c0_19 = arith.constant 0 : index
      %30 = vector.load %arg17[%c0_18, %c0_19] : memref<128x128xbf16, #tpu.memory_space<vmem>>, vector<128x128xbf16>
      tpu.vector_store %arg17[%c0_18, %c0_19], %29 {strides = array<i32>} : memref<128x128xbf16, #tpu.memory_space<vmem>>, vector<128x128xbf16>,
    } else {
    }
    %c4_i32 = arith.constant 4 : i32
    %6 = arith.cmpi eq, %arg0, %c4_i32 : i32
    %7 = arith.extui %6 : i1 to i32
    %c0_i32_3 = arith.constant 0 : i32
    %8 = arith.cmpi ne, %7, %c0_i32_3 : i32
    scf.if %8 {
      %c0 = arith.constant 0 : index
      %c0_4 = arith.constant 0 : index
      %9 = vector.load %arg17[%c0, %c0_4] : memref<128x128xbf16, #tpu.memory_space<vmem>>, vector<128x128xbf16>
      %10 = arith.extf %9 : vector<128x128xbf16> to vector<128x128xf32>
      %c0_5 = arith.constant 0 : index
      %c0_6 = arith.constant 0 : index
      %11 = vector.load %arg7[%c0_5, %c0_6] : memref<2x128xbf16, #tpu.memory_space<vmem>>, vector<2x128xbf16>
      %cst = arith.constant dense<0.000000e+00> : vector<2x128xf32>
      %12 = tpu.matmul %11, %9, %cst {dimension_numbers = #tpu.dot_dimension_numbers<[1], [0], [0], [1], [0, 0, 1, 1], [], []>} : vector<2x128xbf16>, vector<128x128xbf16>, vector<2x128xf32> -> vector<2x128xf32>
      %c0_7 = arith.constant 0 : index
      %c0_8 = arith.constant 0 : index
      %13 = vector.load %arg8[%c0_7, %c0_8] : memref<2x1xf32, #tpu.memory_space<vmem>>, vector<2x1xf32>
      %14 = vector.broadcast %13 : vector<2x1xf32> to vector<2x128xf32>
      %15 = arith.mulf %12, %14 : vector<2x128xf32>
      %c0_9 = arith.constant 0 : index
      %c0_10 = arith.constant 0 : index
      %16 = vector.load %arg9[%c0_9, %c0_10] : memref<128x2xf32, #tpu.memory_space<vmem>>, vector<128x1xf32>
      %cst_11 = arith.constant 0.000000e+00 : f32
      %17 = vector.broadcast %cst_11 : f32 to vector<128x1xf32>
      %18 = arith.cmpf ogt, %16, %17 : vector<128x1xf32>
      %cst_12 = arith.constant -1.000000e+30 : f32
      %19 = vector.shape_cast %18 : vector<128x1xi1> to vector<128x1xi1>
      %20 = vector.broadcast %19 : vector<128x1xi1> to vector<128x128xi1>
      %21 = vector.broadcast %cst_12 : f32 to vector<128x128xf32>
      %22 = arith.select %20, %10, %21 : vector<128x128xi1>, vector<128x128xf32>
      %cst_13 = arith.constant dense<0xFF800000> : vector<128xf32>
      %23 = vector.multi_reduction <maximumf>, %22, %cst_13 [0] : vector<128x128xf32> to vector<128xf32>
      %24 = vector.shape_cast %23 : vector<128xf32> to vector<1x128xf32>
      %c0_14 = arith.constant 0 : index
      %c1 = arith.constant 1 : index
      %25 = vector.load %arg9[%c0_14, %c1] : memref<128x2xf32, #tpu.memory_space<vmem>>, vector<128x1xf32>
      %cst_15 = arith.constant 0.000000e+00 : f32
      %26 = vector.broadcast %cst_15 : f32 to vector<128x1xf32>
      %27 = arith.cmpf ogt, %25, %26 : vector<128x1xf32>
      %cst_16 = arith.constant -1.000000e+30 : f32
      %28 = vector.shape_cast %27 : vector<128x1xi1> to vector<128x1xi1>
      %29 = vector.broadcast %28 : vector<128x1xi1> to vector<128x128xi1>
      %30 = vector.broadcast %cst_16 : f32 to vector<128x128xf32>
      %31 = arith.select %29, %10, %30 : vector<128x128xi1>, vector<128x128xf32>
      %cst_17 = arith.constant dense<0xFF800000> : vector<128xf32>
      %32 = vector.multi_reduction <maximumf>, %31, %cst_17 [0] : vector<128x128xf32> to vector<128xf32>
      %33 = vector.shape_cast %32 : vector<128xf32> to vector<1x128xf32>
      %34 = tpu.concatenate %24, %33 in 0 : vector<1x128xf32>, vector<1x128xf32> -> vector<2x128xf32>
      %35 = arith.truncf %34 : vector<2x128xf32> to vector<2x128xbf16>
      %c0_18 = arith.constant 0 : index
      %c0_19 = arith.constant 0 : index
      %36 = vector.load %arg10[%c0_18, %c0_19] : memref<256x128xbf16, #tpu.memory_space<vmem>>, vector<128x128xbf16>
      %cst_20 = arith.constant dense<0.000000e+00> : vector<2x128xf32>
      %37 = tpu.matmul %35, %36, %cst_20 {dimension_numbers = #tpu.dot_dimension_numbers<[1], [0], [0], [1], [0, 0, 1, 1], [], []>} : vector<2x128xbf16>, vector<128x128xbf16>, vector<2x128xf32> -> vector<2x128xf32>
      %38 = arith.truncf %15 : vector<2x128xf32> to vector<2x128xbf16>
      %c128 = arith.constant 128 : index
      %c0_21 = arith.constant 0 : index
      %39 = vector.load %arg10[%c128, %c0_21] : memref<256x128xbf16, #tpu.memory_space<vmem>>, vector<128x128xbf16>
      %cst_22 = arith.constant dense<0.000000e+00> : vector<2x128xf32>
      %40 = tpu.matmul %38, %39, %cst_22 {dimension_numbers = #tpu.dot_dimension_numbers<[1], [0], [0], [1], [0, 0, 1, 1], [], []>} : vector<2x128xbf16>, vector<128x128xbf16>, vector<2x128xf32> -> vector<2x128xf32>
      %41 = arith.addf %37, %40 : vector<2x128xf32>
      %c0_23 = arith.constant 0 : index
      %c0_24 = arith.constant 0 : index
      %42 = vector.load %arg11[%c0_23, %c0_24] : memref<1x128xf32, #tpu.memory_space<vmem>>, vector<1x128xf32>
      %43 = vector.broadcast %42 : vector<1x128xf32> to vector<2x128xf32>
      %44 = arith.addf %41, %43 : vector<2x128xf32>
      %45 = math.tanh %44 : vector<2x128xf32>
      %46 = arith.truncf %45 : vector<2x128xf32> to vector<2x128xbf16>
      %c0_25 = arith.constant 0 : index
      %c0_26 = arith.constant 0 : index
      %47 = vector.load %arg12[%c0_25, %c0_26] : memref<128x128xbf16, #tpu.memory_space<vmem>>, vector<128x128xbf16>
      %cst_27 = arith.constant dense<0.000000e+00> : vector<2x128xf32>
      %48 = tpu.matmul %46, %47, %cst_27 {dimension_numbers = #tpu.dot_dimension_numbers<[1], [0], [0], [1], [0, 0, 1, 1], [], []>} : vector<2x128xbf16>, vector<128x128xbf16>, vector<2x128xf32> -> vector<2x128xf32>
      %c0_28 = arith.constant 0 : index
      %c0_29 = arith.constant 0 : index
      %49 = vector.load %arg13[%c0_28, %c0_29] : memref<1x128xf32, #tpu.memory_space<vmem>>, vector<1x128xf32>
      %50 = vector.broadcast %49 : vector<1x128xf32> to vector<2x128xf32>
      %51 = arith.addf %48, %50 : vector<2x128xf32>
      %52 = math.tanh %51 : vector<2x128xf32>
      %53 = arith.truncf %52 : vector<2x128xf32> to vector<2x128xbf16>
      %c0_30 = arith.constant 0 : index
      %c0_31 = arith.constant 0 : index
      %54 = vector.load %arg14[%c0_30, %c0_31] : memref<128x8xbf16, #tpu.memory_space<vmem>>, vector<128x8xbf16>
      %cst_32 = arith.constant dense<0.000000e+00> : vector<2x8xf32>
      %55 = tpu.matmul %53, %54, %cst_32 {dimension_numbers = #tpu.dot_dimension_numbers<[1], [0], [0], [1], [0, 0, 1, 1], [], []>} : vector<2x128xbf16>, vector<128x8xbf16>, vector<2x8xf32> -> vector<2x8xf32>
      %c0_33 = arith.constant 0 : index
      %c0_34 = arith.constant 0 : index
      %56 = vector.load %arg15[%c0_33, %c0_34] : memref<1x8xf32, #tpu.memory_space<vmem>>, vector<1x8xf32>
      %57 = vector.broadcast %56 : vector<1x8xf32> to vector<2x8xf32>
      %58 = arith.addf %55, %57 : vector<2x8xf32>
      %cst_35 = arith.constant dense<0xFF800000> : vector<2xf32>
      %59 = vector.multi_reduction <maximumf>, %58, %cst_35 [1] : vector<2x8xf32> to vector<2xf32>
      %60 = vector.shape_cast %59 : vector<2xf32> to vector<2x1xf32>
      %61 = vector.broadcast %60 : vector<2x1xf32> to vector<2x8xf32>
      %62 = arith.subf %58, %61 : vector<2x8xf32>
      %63 = math.exp %62 : vector<2x8xf32>
      %cst_36 = arith.constant dense<0.000000e+00> : vector<2xf32>
      %64 = vector.multi_reduction <add>, %63, %cst_36 [1] : vector<2x8xf32> to vector<2xf32>
      %65 = vector.shape_cast %64 : vector<2xf32> to vector<2x1xf32>
      %66 = math.log %65 : vector<2x1xf32>
      %67 = vector.broadcast %66 : vector<2x1xf32> to vector<2x8xf32>
      %68 = arith.subf %62, %67 : vector<2x8xf32>
      %c0_37 = arith.constant 0 : index
      %c0_38 = arith.constant 0 : index
      %69 = vector.load %arg16[%c0_37, %c0_38] : memref<2x8xf32, #tpu.memory_space<vmem>>, vector<2x8xf32>
      tpu.vector_store %arg16[%c0_37, %c0_38], %68 {strides = array<i32>} : memref<2x8xf32, #tpu.memory_space<vmem>>, vector<2x8xf32>,
    } else {
    }
    return
  }
  func.func @transform_0(%arg0: i32) -> (i32, i32) {
    %c0_i32 = arith.constant 0 : i32
    %c0_i32_0 = arith.constant 0 : i32
    %c0_i32_1 = arith.constant 0 : i32
    return %c0_i32, %c0_i32_0 : i32, i32
  }
  func.func @transform_1(%arg0: i32) -> (i32, i32) {
    %c0_i32 = arith.constant 0 : i32
    %c0_i32_0 = arith.constant 0 : i32
    %c0_i32_1 = arith.constant 0 : i32
    return %c0_i32, %c0_i32_0 : i32, i32
  }
  func.func @transform_2(%arg0: i32) -> (i32, i32) {
    %c0_i32 = arith.constant 0 : i32
    %c0_i32_0 = arith.constant 0 : i32
    %c0_i32_1 = arith.constant 0 : i32
    return %c0_i32, %c0_i32_0 : i32, i32
  }
  func.func @transform_3(%arg0: i32) -> (i32, i32) {
    %c0_i32 = arith.constant 0 : i32
    %c0_i32_0 = arith.constant 0 : i32
    %c0_i32_1 = arith.constant 0 : i32
    return %c0_i32, %c0_i32_0 : i32, i32
  }
  func.func @transform_4(%arg0: i32) -> (i32, i32, i32) {
    %c1_i32 = arith.constant 1 : i32
    %0 = arith.subi %arg0, %c1_i32 : i32
    %c0_i32 = arith.constant 0 : i32
    %1 = arith.maxsi %0, %c0_i32 : i32
    %c0_i32_0 = arith.constant 0 : i32
    %c0_i32_1 = arith.constant 0 : i32
    %c0_i32_2 = arith.constant 0 : i32
    return %1, %c0_i32_0, %c0_i32_1 : i32, i32, i32
  }
  func.func @transform_5(%arg0: i32) -> (i32, i32, i32) {
    %c0_i32 = arith.constant 0 : i32
    %c0_i32_0 = arith.constant 0 : i32
    %c0_i32_1 = arith.constant 0 : i32
    %c0_i32_2 = arith.constant 0 : i32
    return %c0_i32, %c0_i32_0, %c0_i32_1 : i32, i32, i32
  }
  func.func @transform_6(%arg0: i32) -> (i32, i32) {
    %c0_i32 = arith.constant 0 : i32
    %c0_i32_0 = arith.constant 0 : i32
    %c0_i32_1 = arith.constant 0 : i32
    return %c0_i32, %c0_i32_0 : i32, i32
  }
  func.func @transform_7(%arg0: i32) -> (i32, i32) {
    %c0_i32 = arith.constant 0 : i32
    %c0_i32_0 = arith.constant 0 : i32
    %c0_i32_1 = arith.constant 0 : i32
    return %c0_i32, %c0_i32_0 : i32, i32
  }
  func.func @transform_8(%arg0: i32) -> (i32, i32) {
    %c0_i32 = arith.constant 0 : i32
    %c0_i32_0 = arith.constant 0 : i32
    %c0_i32_1 = arith.constant 0 : i32
    return %c0_i32, %c0_i32_0 : i32, i32
  }
  func.func @transform_9(%arg0: i32) -> (i32, i32) {
    %c0_i32 = arith.constant 0 : i32
    %c0_i32_0 = arith.constant 0 : i32
    %c0_i32_1 = arith.constant 0 : i32
    return %c0_i32, %c0_i32_0 : i32, i32
  }
  func.func @transform_10(%arg0: i32) -> (i32, i32) {
    %c0_i32 = arith.constant 0 : i32
    %c0_i32_0 = arith.constant 0 : i32
    %c0_i32_1 = arith.constant 0 : i32
    return %c0_i32, %c0_i32_0 : i32, i32
  }
  func.func @transform_11(%arg0: i32) -> (i32, i32) {
    %c0_i32 = arith.constant 0 : i32
    %c0_i32_0 = arith.constant 0 : i32
    %c0_i32_1 = arith.constant 0 : i32
    return %c0_i32, %c0_i32_0 : i32, i32
  }
  func.func @transform_12(%arg0: i32) -> (i32, i32) {
    %c0_i32 = arith.constant 0 : i32
    %c0_i32_0 = arith.constant 0 : i32
    %c0_i32_1 = arith.constant 0 : i32
    return %c0_i32, %c0_i32_0 : i32, i32
  }
  func.func @transform_13(%arg0: i32) -> (i32, i32) {
    %c0_i32 = arith.constant 0 : i32
    %c0_i32_0 = arith.constant 0 : i32
    %c0_i32_1 = arith.constant 0 : i32
    return %c0_i32, %c0_i32_0 : i32, i32
  }
  func.func @transform_14(%arg0: i32) -> (i32, i32) {
    %c0_i32 = arith.constant 0 : i32
    %c0_i32_0 = arith.constant 0 : i32
    %c0_i32_1 = arith.constant 0 : i32
    return %c0_i32, %c0_i32_0 : i32, i32
  }
  func.func @transform_15(%arg0: i32) -> (i32, i32) {
    %c0_i32 = arith.constant 0 : i32
    %c0_i32_0 = arith.constant 0 : i32
    %c0_i32_1 = arith.constant 0 : i32
    return %c0_i32, %c0_i32_0 : i32, i32
  }
}

module attributes {stable_mosaic.version = 11 : i64} {
  func.func private @main(%arg0: i32) attributes {dimension_semantics = [#tpu.dimension_semantics<core_parallel>], iteration_bounds = array<i64: 2>, tpu.core_type = #tpu.core_type<sc_scalar_subcore>, window_params = []} {
    return
  }
}

module attributes {stable_mosaic.version = 11 : i64} {
  func.func private @main(%arg0: i32) attributes {dimension_semantics = [#tpu.dimension_semantics<core_parallel>], iteration_bounds = array<i64: 2>, tpu.core_type = #tpu.core_type<sc_scalar_subcore>, window_params = []} {
    return
  }
}

module attributes {stable_mosaic.version = 11 : i64} {
  func.func @_graph_cnn_kernel(%arg0: i32, %arg1: memref<128x128xbf16, #tpu.memory_space<vmem>>, %arg2: memref<128x1xf32, #tpu.memory_space<vmem>>, %arg3: memref<128x128xbf16, #tpu.memory_space<vmem>>, %arg4: memref<256x128xbf16, #tpu.memory_space<vmem>>, %arg5: memref<1x256x128xbf16, #tpu.memory_space<vmem>>, %arg6: memref<5x1x128xf32, #tpu.memory_space<vmem>>, %arg7: memref<2x128xbf16, #tpu.memory_space<vmem>>, %arg8: memref<2x1xf32, #tpu.memory_space<vmem>>, %arg9: memref<128x2xf32, #tpu.memory_space<vmem>>, %arg10: memref<256x128xbf16, #tpu.memory_space<vmem>>, %arg11: memref<1x128xf32, #tpu.memory_space<vmem>>, %arg12: memref<128x128xbf16, #tpu.memory_space<vmem>>, %arg13: memref<1x128xf32, #tpu.memory_space<vmem>>, %arg14: memref<128x8xbf16, #tpu.memory_space<vmem>>, %arg15: memref<1x8xf32, #tpu.memory_space<vmem>>, %arg16: memref<2x8xf32, #tpu.memory_space<vmem>>, %arg17: memref<128x128xbf16, #tpu.memory_space<vmem>>) attributes {dimension_semantics = [#tpu.dimension_semantics<arbitrary>], iteration_bounds = array<i64: 5>, scalar_prefetch = 0 : i64, scratch_operands = 1 : i64, tpu.core_type = #tpu.core_type<tc>, window_params = [{pipeline_mode = #tpu.pipeline_mode<synchronous>, transform_indices = @transform_0, window_bounds = array<i64: 128, 128>}, {pipeline_mode = #tpu.pipeline_mode<synchronous>, transform_indices = @transform_1, window_bounds = array<i64: 128, 1>}, {pipeline_mode = #tpu.pipeline_mode<synchronous>, transform_indices = @transform_2, window_bounds = array<i64: 128, 128>}, {pipeline_mode = #tpu.pipeline_mode<synchronous>, transform_indices = @transform_3, window_bounds = array<i64: 256, 128>}, {transform_indices = @transform_4, window_bounds = array<i64: 1, 256, 128>}, {pipeline_mode = #tpu.pipeline_mode<synchronous>, transform_indices = @transform_5, window_bounds = array<i64: 5, 1, 128>}, {pipeline_mode = #tpu.pipeline_mode<synchronous>, transform_indices = @transform_6, window_bounds = array<i64: 2, 128>}, {pipeline_mode = #tpu.pipeline_mode<synchronous>, transform_indices = @transform_7, window_bounds = array<i64: 2, 1>}, {pipeline_mode = #tpu.pipeline_mode<synchronous>, transform_indices = @transform_8, window_bounds = array<i64: 128, 2>}, {pipeline_mode = #tpu.pipeline_mode<synchronous>, transform_indices = @transform_9, window_bounds = array<i64: 256, 128>}, {pipeline_mode = #tpu.pipeline_mode<synchronous>, transform_indices = @transform_10, window_bounds = array<i64: 1, 128>}, {pipeline_mode = #tpu.pipeline_mode<synchronous>, transform_indices = @transform_11, window_bounds = array<i64: 128, 128>}, {pipeline_mode = #tpu.pipeline_mode<synchronous>, transform_indices = @transform_12, window_bounds = array<i64: 1, 128>}, {pipeline_mode = #tpu.pipeline_mode<synchronous>, transform_indices = @transform_13, window_bounds = array<i64: 128, 8>}, {pipeline_mode = #tpu.pipeline_mode<synchronous>, transform_indices = @transform_14, window_bounds = array<i64: 1, 8>}, {pipeline_mode = #tpu.pipeline_mode<synchronous>, transform_indices = @transform_15, window_bounds = array<i64: 2, 8>}]} {
    %c0_i32 = arith.constant 0 : i32
    %0 = arith.cmpi eq, %arg0, %c0_i32 : i32
    %1 = arith.extui %0 : i1 to i32
    %c0_i32_0 = arith.constant 0 : i32
    %2 = arith.cmpi ne, %1, %c0_i32_0 : i32
    scf.if %2 {
      %c0 = arith.constant 0 : index
      %c0_4 = arith.constant 0 : index
      %9 = vector.load %arg3[%c0, %c0_4] : memref<128x128xbf16, #tpu.memory_space<vmem>>, vector<128x128xbf16>
      %c0_5 = arith.constant 0 : index
      %c0_6 = arith.constant 0 : index
      %10 = vector.load %arg4[%c0_5, %c0_6] : memref<256x128xbf16, #tpu.memory_space<vmem>>, vector<128x128xbf16>
      %c128 = arith.constant 128 : index
      %c0_7 = arith.constant 0 : index
      %11 = vector.load %arg4[%c128, %c0_7] : memref<256x128xbf16, #tpu.memory_space<vmem>>, vector<128x128xbf16>
      %c0_8 = arith.constant 0 : index
      %c0_9 = arith.constant 0 : index
      %c0_10 = arith.constant 0 : index
      %12 = vector.load %arg6[%c0_8, %c0_9, %c0_10] : memref<5x1x128xf32, #tpu.memory_space<vmem>>, vector<1x1x128xf32>
      %13 = vector.shape_cast %12 : vector<1x1x128xf32> to vector<1x128xf32>
      %c0_11 = arith.constant 0 : index
      %c0_12 = arith.constant 0 : index
      %14 = vector.load %arg1[%c0_11, %c0_12] : memref<128x128xbf16, #tpu.memory_space<vmem>>, vector<128x128xbf16>
      %cst = arith.constant dense<0.000000e+00> : vector<128x128xf32>
      %15 = tpu.matmul %14, %9, %cst {dimension_numbers = #tpu.dot_dimension_numbers<[1], [0], [0], [1], [0, 0, 1, 1], [], []>} : vector<128x128xbf16>, vector<128x128xbf16>, vector<128x128xf32> -> vector<128x128xf32>
      %c0_13 = arith.constant 0 : index
      %c0_14 = arith.constant 0 : index
      %16 = vector.load %arg2[%c0_13, %c0_14] : memref<128x1xf32, #tpu.memory_space<vmem>>, vector<128x1xf32>
      %17 = vector.broadcast %16 : vector<128x1xf32> to vector<128x128xf32>
      %18 = arith.mulf %15, %17 : vector<128x128xf32>
      %19 = arith.truncf %18 : vector<128x128xf32> to vector<128x128xbf16>
      %cst_15 = arith.constant dense<0.000000e+00> : vector<128x128xf32>
      %20 = tpu.matmul %9, %11, %cst_15 {dimension_numbers = #tpu.dot_dimension_numbers<[1], [0], [0], [1], [0, 0, 1, 1], [], []>} : vector<128x128xbf16>, vector<128x128xbf16>, vector<128x128xf32> -> vector<128x128xf32>
      %cst_16 = arith.constant dense<0.000000e+00> : vector<128x128xf32>
      %21 = tpu.matmul %19, %10, %cst_16 {dimension_numbers = #tpu.dot_dimension_numbers<[1], [0], [0], [1], [0, 0, 1, 1], [], []>} : vector<128x128xbf16>, vector<128x128xbf16>, vector<128x128xf32> -> vector<128x128xf32>
      %22 = arith.addf %20, %21 : vector<128x128xf32>
      %23 = vector.broadcast %13 : vector<1x128xf32> to vector<128x128xf32>
      %24 = arith.addf %22, %23 : vector<128x128xf32>
      %25 = math.tanh %24 : vector<128x128xf32>
      %26 = arith.truncf %25 : vector<128x128xf32> to vector<128x128xbf16>
      %c0_17 = arith.constant 0 : index
      %c0_18 = arith.constant 0 : index
      %27 = vector.load %arg17[%c0_17, %c0_18] : memref<128x128xbf16, #tpu.memory_space<vmem>>, vector<128x128xbf16>
      tpu.vector_store %arg17[%c0_17, %c0_18], %26 {strides = array<i32>} : memref<128x128xbf16, #tpu.memory_space<vmem>>, vector<128x128xbf16>,
    } else {
    }
    %c0_i32_1 = arith.constant 0 : i32
    %3 = arith.cmpi sgt, %arg0, %c0_i32_1 : i32
    %4 = arith.extui %3 : i1 to i32
    %c0_i32_2 = arith.constant 0 : i32
    %5 = arith.cmpi ne, %4, %c0_i32_2 : i32
    scf.if %5 {
      %c0 = arith.constant 0 : index
      %c0_4 = arith.constant 0 : index
      %9 = vector.load %arg17[%c0, %c0_4] : memref<128x128xbf16, #tpu.memory_space<vmem>>, vector<128x128xbf16>
      %c0_5 = arith.constant 0 : index
      %c0_6 = arith.constant 0 : index
      %c0_7 = arith.constant 0 : index
      %10 = vector.load %arg5[%c0_5, %c0_6, %c0_7] : memref<1x256x128xbf16, #tpu.memory_space<vmem>>, vector<1x128x128xbf16>
      %11 = vector.shape_cast %10 : vector<1x128x128xbf16> to vector<128x128xbf16>
      %c0_8 = arith.constant 0 : index
      %c128 = arith.constant 128 : index
      %c0_9 = arith.constant 0 : index
      %12 = vector.load %arg5[%c0_8, %c128, %c0_9] : memref<1x256x128xbf16, #tpu.memory_space<vmem>>, vector<1x128x128xbf16>
      %13 = vector.shape_cast %12 : vector<1x128x128xbf16> to vector<128x128xbf16>
      %14 = arith.index_cast %arg0 : i32 to index
      %c0_10 = arith.constant 0 : index
      %c0_11 = arith.constant 0 : index
      %15 = vector.load %arg6[%14, %c0_10, %c0_11] : memref<5x1x128xf32, #tpu.memory_space<vmem>>, vector<1x1x128xf32>
      %16 = vector.shape_cast %15 : vector<1x1x128xf32> to vector<1x128xf32>
      %c0_12 = arith.constant 0 : index
      %c0_13 = arith.constant 0 : index
      %17 = vector.load %arg1[%c0_12, %c0_13] : memref<128x128xbf16, #tpu.memory_space<vmem>>, vector<128x128xbf16>
      %cst = arith.constant dense<0.000000e+00> : vector<128x128xf32>
      %18 = tpu.matmul %17, %9, %cst {dimension_numbers = #tpu.dot_dimension_numbers<[1], [0], [0], [1], [0, 0, 1, 1], [], []>} : vector<128x128xbf16>, vector<128x128xbf16>, vector<128x128xf32> -> vector<128x128xf32>
      %c0_14 = arith.constant 0 : index
      %c0_15 = arith.constant 0 : index
      %19 = vector.load %arg2[%c0_14, %c0_15] : memref<128x1xf32, #tpu.memory_space<vmem>>, vector<128x1xf32>
      %20 = vector.broadcast %19 : vector<128x1xf32> to vector<128x128xf32>
      %21 = arith.mulf %18, %20 : vector<128x128xf32>
      %22 = arith.truncf %21 : vector<128x128xf32> to vector<128x128xbf16>
      %cst_16 = arith.constant dense<0.000000e+00> : vector<128x128xf32>
      %23 = tpu.matmul %9, %13, %cst_16 {dimension_numbers = #tpu.dot_dimension_numbers<[1], [0], [0], [1], [0, 0, 1, 1], [], []>} : vector<128x128xbf16>, vector<128x128xbf16>, vector<128x128xf32> -> vector<128x128xf32>
      %cst_17 = arith.constant dense<0.000000e+00> : vector<128x128xf32>
      %24 = tpu.matmul %22, %11, %cst_17 {dimension_numbers = #tpu.dot_dimension_numbers<[1], [0], [0], [1], [0, 0, 1, 1], [], []>} : vector<128x128xbf16>, vector<128x128xbf16>, vector<128x128xf32> -> vector<128x128xf32>
      %25 = arith.addf %23, %24 : vector<128x128xf32>
      %26 = vector.broadcast %16 : vector<1x128xf32> to vector<128x128xf32>
      %27 = arith.addf %25, %26 : vector<128x128xf32>
      %28 = math.tanh %27 : vector<128x128xf32>
      %29 = arith.truncf %28 : vector<128x128xf32> to vector<128x128xbf16>
      %c0_18 = arith.constant 0 : index
      %c0_19 = arith.constant 0 : index
      %30 = vector.load %arg17[%c0_18, %c0_19] : memref<128x128xbf16, #tpu.memory_space<vmem>>, vector<128x128xbf16>
      tpu.vector_store %arg17[%c0_18, %c0_19], %29 {strides = array<i32>} : memref<128x128xbf16, #tpu.memory_space<vmem>>, vector<128x128xbf16>,
    } else {
    }
    %c4_i32 = arith.constant 4 : i32
    %6 = arith.cmpi eq, %arg0, %c4_i32 : i32
    %7 = arith.extui %6 : i1 to i32
    %c0_i32_3 = arith.constant 0 : i32
    %8 = arith.cmpi ne, %7, %c0_i32_3 : i32
    scf.if %8 {
      %c0 = arith.constant 0 : index
      %c0_4 = arith.constant 0 : index
      %9 = vector.load %arg17[%c0, %c0_4] : memref<128x128xbf16, #tpu.memory_space<vmem>>, vector<128x128xbf16>
      %10 = arith.extf %9 : vector<128x128xbf16> to vector<128x128xf32>
      %c0_5 = arith.constant 0 : index
      %c0_6 = arith.constant 0 : index
      %11 = vector.load %arg7[%c0_5, %c0_6] : memref<2x128xbf16, #tpu.memory_space<vmem>>, vector<2x128xbf16>
      %cst = arith.constant dense<0.000000e+00> : vector<2x128xf32>
      %12 = tpu.matmul %11, %9, %cst {dimension_numbers = #tpu.dot_dimension_numbers<[1], [0], [0], [1], [0, 0, 1, 1], [], []>} : vector<2x128xbf16>, vector<128x128xbf16>, vector<2x128xf32> -> vector<2x128xf32>
      %c0_7 = arith.constant 0 : index
      %c0_8 = arith.constant 0 : index
      %13 = vector.load %arg8[%c0_7, %c0_8] : memref<2x1xf32, #tpu.memory_space<vmem>>, vector<2x1xf32>
      %14 = vector.broadcast %13 : vector<2x1xf32> to vector<2x128xf32>
      %15 = arith.mulf %12, %14 : vector<2x128xf32>
      %c0_9 = arith.constant 0 : index
      %c0_10 = arith.constant 0 : index
      %16 = vector.load %arg9[%c0_9, %c0_10] : memref<128x2xf32, #tpu.memory_space<vmem>>, vector<128x1xf32>
      %cst_11 = arith.constant 0.000000e+00 : f32
      %17 = vector.broadcast %cst_11 : f32 to vector<128x1xf32>
      %18 = arith.cmpf ogt, %16, %17 : vector<128x1xf32>
      %cst_12 = arith.constant -1.000000e+30 : f32
      %19 = vector.shape_cast %18 : vector<128x1xi1> to vector<128x1xi1>
      %20 = vector.broadcast %19 : vector<128x1xi1> to vector<128x128xi1>
      %21 = vector.broadcast %cst_12 : f32 to vector<128x128xf32>
      %22 = arith.select %20, %10, %21 : vector<128x128xi1>, vector<128x128xf32>
      %cst_13 = arith.constant dense<0xFF800000> : vector<128xf32>
      %23 = vector.multi_reduction <maximumf>, %22, %cst_13 [0] : vector<128x128xf32> to vector<128xf32>
      %24 = vector.shape_cast %23 : vector<128xf32> to vector<1x128xf32>
      %c0_14 = arith.constant 0 : index
      %c1 = arith.constant 1 : index
      %25 = vector.load %arg9[%c0_14, %c1] : memref<128x2xf32, #tpu.memory_space<vmem>>, vector<128x1xf32>
      %cst_15 = arith.constant 0.000000e+00 : f32
      %26 = vector.broadcast %cst_15 : f32 to vector<128x1xf32>
      %27 = arith.cmpf ogt, %25, %26 : vector<128x1xf32>
      %cst_16 = arith.constant -1.000000e+30 : f32
      %28 = vector.shape_cast %27 : vector<128x1xi1> to vector<128x1xi1>
      %29 = vector.broadcast %28 : vector<128x1xi1> to vector<128x128xi1>
      %30 = vector.broadcast %cst_16 : f32 to vector<128x128xf32>
      %31 = arith.select %29, %10, %30 : vector<128x128xi1>, vector<128x128xf32>
      %cst_17 = arith.constant dense<0xFF800000> : vector<128xf32>
      %32 = vector.multi_reduction <maximumf>, %31, %cst_17 [0] : vector<128x128xf32> to vector<128xf32>
      %33 = vector.shape_cast %32 : vector<128xf32> to vector<1x128xf32>
      %34 = tpu.concatenate %24, %33 in 0 : vector<1x128xf32>, vector<1x128xf32> -> vector<2x128xf32>
      %35 = arith.truncf %34 : vector<2x128xf32> to vector<2x128xbf16>
      %c0_18 = arith.constant 0 : index
      %c0_19 = arith.constant 0 : index
      %36 = vector.load %arg10[%c0_18, %c0_19] : memref<256x128xbf16, #tpu.memory_space<vmem>>, vector<128x128xbf16>
      %cst_20 = arith.constant dense<0.000000e+00> : vector<2x128xf32>
      %37 = tpu.matmul %35, %36, %cst_20 {dimension_numbers = #tpu.dot_dimension_numbers<[1], [0], [0], [1], [0, 0, 1, 1], [], []>} : vector<2x128xbf16>, vector<128x128xbf16>, vector<2x128xf32> -> vector<2x128xf32>
      %38 = arith.truncf %15 : vector<2x128xf32> to vector<2x128xbf16>
      %c128 = arith.constant 128 : index
      %c0_21 = arith.constant 0 : index
      %39 = vector.load %arg10[%c128, %c0_21] : memref<256x128xbf16, #tpu.memory_space<vmem>>, vector<128x128xbf16>
      %cst_22 = arith.constant dense<0.000000e+00> : vector<2x128xf32>
      %40 = tpu.matmul %38, %39, %cst_22 {dimension_numbers = #tpu.dot_dimension_numbers<[1], [0], [0], [1], [0, 0, 1, 1], [], []>} : vector<2x128xbf16>, vector<128x128xbf16>, vector<2x128xf32> -> vector<2x128xf32>
      %41 = arith.addf %37, %40 : vector<2x128xf32>
      %c0_23 = arith.constant 0 : index
      %c0_24 = arith.constant 0 : index
      %42 = vector.load %arg11[%c0_23, %c0_24] : memref<1x128xf32, #tpu.memory_space<vmem>>, vector<1x128xf32>
      %43 = vector.broadcast %42 : vector<1x128xf32> to vector<2x128xf32>
      %44 = arith.addf %41, %43 : vector<2x128xf32>
      %45 = math.tanh %44 : vector<2x128xf32>
      %46 = arith.truncf %45 : vector<2x128xf32> to vector<2x128xbf16>
      %c0_25 = arith.constant 0 : index
      %c0_26 = arith.constant 0 : index
      %47 = vector.load %arg12[%c0_25, %c0_26] : memref<128x128xbf16, #tpu.memory_space<vmem>>, vector<128x128xbf16>
      %cst_27 = arith.constant dense<0.000000e+00> : vector<2x128xf32>
      %48 = tpu.matmul %46, %47, %cst_27 {dimension_numbers = #tpu.dot_dimension_numbers<[1], [0], [0], [1], [0, 0, 1, 1], [], []>} : vector<2x128xbf16>, vector<128x128xbf16>, vector<2x128xf32> -> vector<2x128xf32>
      %c0_28 = arith.constant 0 : index
      %c0_29 = arith.constant 0 : index
      %49 = vector.load %arg13[%c0_28, %c0_29] : memref<1x128xf32, #tpu.memory_space<vmem>>, vector<1x128xf32>
      %50 = vector.broadcast %49 : vector<1x128xf32> to vector<2x128xf32>
      %51 = arith.addf %48, %50 : vector<2x128xf32>
      %52 = math.tanh %51 : vector<2x128xf32>
      %53 = arith.truncf %52 : vector<2x128xf32> to vector<2x128xbf16>
      %c0_30 = arith.constant 0 : index
      %c0_31 = arith.constant 0 : index
      %54 = vector.load %arg14[%c0_30, %c0_31] : memref<128x8xbf16, #tpu.memory_space<vmem>>, vector<128x8xbf16>
      %cst_32 = arith.constant dense<0.000000e+00> : vector<2x8xf32>
      %55 = tpu.matmul %53, %54, %cst_32 {dimension_numbers = #tpu.dot_dimension_numbers<[1], [0], [0], [1], [0, 0, 1, 1], [], []>} : vector<2x128xbf16>, vector<128x8xbf16>, vector<2x8xf32> -> vector<2x8xf32>
      %c0_33 = arith.constant 0 : index
      %c0_34 = arith.constant 0 : index
      %56 = vector.load %arg15[%c0_33, %c0_34] : memref<1x8xf32, #tpu.memory_space<vmem>>, vector<1x8xf32>
      %57 = vector.broadcast %56 : vector<1x8xf32> to vector<2x8xf32>
      %58 = arith.addf %55, %57 : vector<2x8xf32>
      %cst_35 = arith.constant dense<0xFF800000> : vector<2xf32>
      %59 = vector.multi_reduction <maximumf>, %58, %cst_35 [1] : vector<2x8xf32> to vector<2xf32>
      %60 = vector.shape_cast %59 : vector<2xf32> to vector<2x1xf32>
      %61 = vector.broadcast %60 : vector<2x1xf32> to vector<2x8xf32>
      %62 = arith.subf %58, %61 : vector<2x8xf32>
      %63 = math.exp %62 : vector<2x8xf32>
      %cst_36 = arith.constant dense<0.000000e+00> : vector<2xf32>
      %64 = vector.multi_reduction <add>, %63, %cst_36 [1] : vector<2x8xf32> to vector<2xf32>
      %65 = vector.shape_cast %64 : vector<2xf32> to vector<2x1xf32>
      %66 = math.log %65 : vector<2x1xf32>
      %67 = vector.broadcast %66 : vector<2x1xf32> to vector<2x8xf32>
      %68 = arith.subf %62, %67 : vector<2x8xf32>
      %c0_37 = arith.constant 0 : index
      %c0_38 = arith.constant 0 : index
      %69 = vector.load %arg16[%c0_37, %c0_38] : memref<2x8xf32, #tpu.memory_space<vmem>>, vector<2x8xf32>
      tpu.vector_store %arg16[%c0_37, %c0_38], %68 {strides = array<i32>} : memref<2x8xf32, #tpu.memory_space<vmem>>, vector<2x8xf32>,
    } else {
    }
    return
  }
  func.func @transform_0(%arg0: i32) -> (i32, i32) {
    %c0_i32 = arith.constant 0 : i32
    %c0_i32_0 = arith.constant 0 : i32
    %c0_i32_1 = arith.constant 0 : i32
    return %c0_i32, %c0_i32_0 : i32, i32
  }
  func.func @transform_1(%arg0: i32) -> (i32, i32) {
    %c0_i32 = arith.constant 0 : i32
    %c0_i32_0 = arith.constant 0 : i32
    %c0_i32_1 = arith.constant 0 : i32
    return %c0_i32, %c0_i32_0 : i32, i32
  }
  func.func @transform_2(%arg0: i32) -> (i32, i32) {
    %c0_i32 = arith.constant 0 : i32
    %c0_i32_0 = arith.constant 0 : i32
    %c0_i32_1 = arith.constant 0 : i32
    return %c0_i32, %c0_i32_0 : i32, i32
  }
  func.func @transform_3(%arg0: i32) -> (i32, i32) {
    %c0_i32 = arith.constant 0 : i32
    %c0_i32_0 = arith.constant 0 : i32
    %c0_i32_1 = arith.constant 0 : i32
    return %c0_i32, %c0_i32_0 : i32, i32
  }
  func.func @transform_4(%arg0: i32) -> (i32, i32, i32) {
    %c1_i32 = arith.constant 1 : i32
    %0 = arith.subi %arg0, %c1_i32 : i32
    %c0_i32 = arith.constant 0 : i32
    %1 = arith.maxsi %0, %c0_i32 : i32
    %c0_i32_0 = arith.constant 0 : i32
    %c0_i32_1 = arith.constant 0 : i32
    %c0_i32_2 = arith.constant 0 : i32
    return %1, %c0_i32_0, %c0_i32_1 : i32, i32, i32
  }
  func.func @transform_5(%arg0: i32) -> (i32, i32, i32) {
    %c0_i32 = arith.constant 0 : i32
    %c0_i32_0 = arith.constant 0 : i32
    %c0_i32_1 = arith.constant 0 : i32
    %c0_i32_2 = arith.constant 0 : i32
    return %c0_i32, %c0_i32_0, %c0_i32_1 : i32, i32, i32
  }
  func.func @transform_6(%arg0: i32) -> (i32, i32) {
    %c0_i32 = arith.constant 0 : i32
    %c0_i32_0 = arith.constant 0 : i32
    %c0_i32_1 = arith.constant 0 : i32
    return %c0_i32, %c0_i32_0 : i32, i32
  }
  func.func @transform_7(%arg0: i32) -> (i32, i32) {
    %c0_i32 = arith.constant 0 : i32
    %c0_i32_0 = arith.constant 0 : i32
    %c0_i32_1 = arith.constant 0 : i32
    return %c0_i32, %c0_i32_0 : i32, i32
  }
  func.func @transform_8(%arg0: i32) -> (i32, i32) {
    %c0_i32 = arith.constant 0 : i32
    %c0_i32_0 = arith.constant 0 : i32
    %c0_i32_1 = arith.constant 0 : i32
    return %c0_i32, %c0_i32_0 : i32, i32
  }
  func.func @transform_9(%arg0: i32) -> (i32, i32) {
    %c0_i32 = arith.constant 0 : i32
    %c0_i32_0 = arith.constant 0 : i32
    %c0_i32_1 = arith.constant 0 : i32
    return %c0_i32, %c0_i32_0 : i32, i32
  }
  func.func @transform_10(%arg0: i32) -> (i32, i32) {
    %c0_i32 = arith.constant 0 : i32
    %c0_i32_0 = arith.constant 0 : i32
    %c0_i32_1 = arith.constant 0 : i32
    return %c0_i32, %c0_i32_0 : i32, i32
  }
  func.func @transform_11(%arg0: i32) -> (i32, i32) {
    %c0_i32 = arith.constant 0 : i32
    %c0_i32_0 = arith.constant 0 : i32
    %c0_i32_1 = arith.constant 0 : i32
    return %c0_i32, %c0_i32_0 : i32, i32
  }
  func.func @transform_12(%arg0: i32) -> (i32, i32) {
    %c0_i32 = arith.constant 0 : i32
    %c0_i32_0 = arith.constant 0 : i32
    %c0_i32_1 = arith.constant 0 : i32
    return %c0_i32, %c0_i32_0 : i32, i32
  }
  func.func @transform_13(%arg0: i32) -> (i32, i32) {
    %c0_i32 = arith.constant 0 : i32
    %c0_i32_0 = arith.constant 0 : i32
    %c0_i32_1 = arith.constant 0 : i32
    return %c0_i32, %c0_i32_0 : i32, i32
  }
  func.func @transform_14(%arg0: i32) -> (i32, i32) {
    %c0_i32 = arith.constant 0 : i32
    %c0_i32_0 = arith.constant 0 : i32
    %c0_i32_1 = arith.constant 0 : i32
    return %c0_i32, %c0_i32_0 : i32, i32
  }
  func.func @transform_15(%arg0: i32) -> (i32, i32) {
    %c0_i32 = arith.constant 0 : i32
    %c0_i32_0 = arith.constant 0 : i32
    %c0_i32_1 = arith.constant 0 : i32
    return %c0_i32, %c0_i32_0 : i32, i32
  }
}

</mosaic_0001>

<llo_original>
// kernel: graph_cnn_forward.1
$region0: #{graph_cnn_forward.1}
  #allocation0 [shape = 'u32[]', space=smem, size = 0x4, offset = 0x4, fixed_abs, tag = 'smem constant byte address 0x4 - core index']
  #allocation1 [shape = 'u32[144,128]{1,0:T(1,128)}', space=vmem, size = 0x12000, scoped, tag = 'internal scratch']
  #allocation2 [shape = 'bf16[128,128]{1,0:T(16,128)(2,1)}', space=vmem, size = 0x8000, scoped, tag = 'scratch operand']
  %s0 = inlined_call_operand.vmem [shape: bf16[128,128], index: 0, kind: input, shape index: {}]
  %s1 = inlined_call_operand.vmem [shape: f32[128,1], index: 1, kind: input, shape index: {}]
  %s2 = inlined_call_operand.vmem [shape: bf16[128,128], index: 2, kind: input, shape index: {}]
  %s3 = inlined_call_operand.vmem [shape: bf16[256,128], index: 3, kind: input, shape index: {}]
  %s4 = inlined_call_operand.vmem [shape: bf16[4,256,128], index: 4, kind: input, shape index: {}]
  %s5 = inlined_call_operand.vmem [shape: f32[5,1,128], index: 5, kind: input, shape index: {}]
  %s6 = inlined_call_operand.vmem [shape: bf16[2,128], index: 6, kind: input, shape index: {}]
  %s7 = inlined_call_operand.vmem [shape: f32[2,1], index: 7, kind: input, shape index: {}]
  %s8 = inlined_call_operand.vmem [shape: f32[128,2], index: 8, kind: input, shape index: {}]
  %s9 = inlined_call_operand.vmem [shape: bf16[256,128], index: 9, kind: input, shape index: {}]
  %s10 = inlined_call_operand.vmem [shape: f32[1,128], index: 10, kind: input, shape index: {}]
  %s11 = inlined_call_operand.vmem [shape: bf16[128,128], index: 11, kind: input, shape index: {}]
  %s12 = inlined_call_operand.vmem [shape: f32[1,128], index: 12, kind: input, shape index: {}]
  %s13 = inlined_call_operand.vmem [shape: bf16[128,8], index: 13, kind: input, shape index: {}]
  %s14 = inlined_call_operand.vmem [shape: f32[1,8], index: 14, kind: input, shape index: {}]
  %s15 = inlined_call_operand.hbm [shape: f32[2,8], index: 15, kind: output, shape index: {}]
  %s16 = sld [smem:[#allocation0]]
  $region105: #{graph_cnn_forward.1} parent=0
    _
  %s18 = ssub.s32 1, %s16
  %s19 = scalar_select 0, %s18, %s16
  $region1: #{graph_cnn_forward.1} parent=0
    #allocation3 [shape = 'u8[1024]{0}', space=vmem, size = 0x400, scoped, tag = 'output window, operand 0, single buffered']
    #allocation4 [shape = 's32[2]{0}', space=sflag, size = 0x8, scoped, tag = 'scoped memory for graph_cnn_forward.1']
    %20 = vsyncpa [#allocation4], 0
    loop: start=0, step=1, limit=7
    $region2: #{graph_cnn_forward.1} parent=1 // loop_pre_header
      _
    $region3: #{graph_cnn_forward.1} parent=1 // loop_header
      %s22 = sphi 0, %s26
      %p23 = scmp.ge.s32.totalorder %s22, 7
      %s30 = sphi 0, %s30
      %s32 = sphi 0, %s30
      %s33 = sphi 0, %s32
      %s47 = sphi 0, %s33
      %s51 = sphi 0, %s51
      %s53 = sphi 0, %s51
      %s54 = sphi 0, %s53
      %s68 = sphi 0, %s54
      %s72 = sphi 0, %s72
      %s74 = sphi 0, %s72
      %s75 = sphi 0, %s74
      %s89 = sphi 0, %s75
      %s93 = sphi 0, %s93
      %s95 = sphi 0, %s93
      %s96 = sphi 0, %s95
      %s110 = sphi 0, %s96
      %s122 = sphi 0, %s124
      %s125 = sphi 0, %s122
      %s126 = sphi 0, %s125
      %s142 = sphi 0, %s126
      %s146 = sphi 0, %s146
      %s148 = sphi 0, %s146
      %s149 = sphi 0, %s148
      %s163 = sphi 0, %s149
      %s167 = sphi 0, %s167
      %s169 = sphi 0, %s167
      %s170 = sphi 0, %s169
      %s184 = sphi 0, %s170
      %s188 = sphi 0, %s188
      %s190 = sphi 0, %s188
      %s191 = sphi 0, %s190
      %s205 = sphi 0, %s191
      %s209 = sphi 0, %s209
      %s211 = sphi 0, %s209
      %s212 = sphi 0, %s211
      %s226 = sphi 0, %s212
      %s230 = sphi 0, %s230
      %s232 = sphi 0, %s230
      %s233 = sphi 0, %s232
      %s247 = sphi 0, %s233
      %s251 = sphi 0, %s251
      %s253 = sphi 0, %s251
      %s254 = sphi 0, %s253
      %s268 = sphi 0, %s254
      %s272 = sphi 0, %s272
      %s274 = sphi 0, %s272
      %s275 = sphi 0, %s274
      %s289 = sphi 0, %s275
      %s293 = sphi 0, %s293
      %s295 = sphi 0, %s293
      %s296 = sphi 0, %s295
      %s310 = sphi 0, %s296
      %s314 = sphi 0, %s314
      %s316 = sphi 0, %s314
      %s317 = sphi 0, %s316
      %s331 = sphi 0, %s317
      %s335 = sphi 0, %s335
      %s337 = sphi 0, %s335
      %s338 = sphi 0, %s337
      %s352 = sphi 0, %s338
      %s356 = sphi 0, %s356
      %s358 = sphi 0, %s356
      %s359 = sphi 0, %s358
      %s373 = sphi 0, %s359
    $region4: #{graph_cnn_forward.1} parent=1 // loop_header_branch
      %25 = sbr.rel (%p23) target = $region8
    $region5: #{graph_cnn_forward.1} parent=1 // loop_body
      %s27 = ssub.s32 %s22, 1
      %s28 = ssub.s32 %s22, 2
      %s29 = sadd.s32 %s22, 1
      %s31 = sadd.s32 %s30, 1
      %p34 = scmp.eq.s32.totalorder %s22, 4
      %p35 = scmp.ne.s32.totalorder %s30, %s32
      %p36 = scmp.eq.s32.totalorder %s22, 0
      %p37 = por %p35, %p36
      %p38 = scmp.ne.s32.totalorder %s30, %s32
      %p39 = scmp.eq.s32.totalorder %s27, 4
      %p40 = por %p38, %p39
      %p41 = scmp.ne.s32.totalorder %s32, %s33
      %p42 = scmp.eq.s32.totalorder %s27, 0
      %p43 = por %p41, %p42
      %p44 = scmp.ne.s32.totalorder %s32, %s33
      %p45 = scmp.eq.s32.totalorder %s28, 4
      %p46 = por %p44, %p45
      %p48 = scmp.ne.s32.totalorder %s33, %s47
      %p49 = scmp.eq.s32.totalorder %s28, 0
      %p50 = por %p48, %p49
      %s52 = sadd.s32 %s51, 1
      %p55 = scmp.eq.s32.totalorder %s22, 4
      %p56 = scmp.ne.s32.totalorder %s51, %s53
      %p57 = scmp.eq.s32.totalorder %s22, 0
      %p58 = por %p56, %p57
      %p59 = scmp.ne.s32.totalorder %s51, %s53
      %p60 = scmp.eq.s32.totalorder %s27, 4
      %p61 = por %p59, %p60
      %p62 = scmp.ne.s32.totalorder %s53, %s54
      %p63 = scmp.eq.s32.totalorder %s27, 0
      %p64 = por %p62, %p63
      %p65 = scmp.ne.s32.totalorder %s53, %s54
      %p66 = scmp.eq.s32.totalorder %s28, 4
      %p67 = por %p65, %p66
      %p69 = scmp.ne.s32.totalorder %s54, %s68
      %p70 = scmp.eq.s32.totalorder %s28, 0
      %p71 = por %p69, %p70
      %s73 = sadd.s32 %s72, 1
      %p76 = scmp.eq.s32.totalorder %s22, 4
      %p77 = scmp.ne.s32.totalorder %s72, %s74
      %p78 = scmp.eq.s32.totalorder %s22, 0
      %p79 = por %p77, %p78
      %p80 = scmp.ne.s32.totalorder %s72, %s74
      %p81 = scmp.eq.s32.totalorder %s27, 4
      %p82 = por %p80, %p81
      %p83 = scmp.ne.s32.totalorder %s74, %s75
      %p84 = scmp.eq.s32.totalorder %s27, 0
      %p85 = por %p83, %p84
      %p86 = scmp.ne.s32.totalorder %s74, %s75
      %p87 = scmp.eq.s32.totalorder %s28, 4
      %p88 = por %p86, %p87
      %p90 = scmp.ne.s32.totalorder %s75, %s89
      %p91 = scmp.eq.s32.totalorder %s28, 0
      %p92 = por %p90, %p91
      %s94 = sadd.s32 %s93, 1
      %p97 = scmp.eq.s32.totalorder %s22, 4
      %p98 = scmp.ne.s32.totalorder %s93, %s95
      %p99 = scmp.eq.s32.totalorder %s22, 0
      %p100 = por %p98, %p99
      %p101 = scmp.ne.s32.totalorder %s93, %s95
      %p102 = scmp.eq.s32.totalorder %s27, 4
      %p103 = por %p101, %p102
      %p104 = scmp.ne.s32.totalorder %s95, %s96
      %p105 = scmp.eq.s32.totalorder %s27, 0
      %p106 = por %p104, %p105
      %p107 = scmp.ne.s32.totalorder %s95, %s96
      %p108 = scmp.eq.s32.totalorder %s28, 4
      %p109 = por %p107, %p108
      %p111 = scmp.ne.s32.totalorder %s96, %s110
      %p112 = scmp.eq.s32.totalorder %s28, 0
      %p113 = por %p111, %p112
      %s114 = ssub.s32 %s22, 1
      %p115 = scmp.gt.s32.totalorder %s114, 0
      %s116 = scalar_select %p115, %s114, 0
      %s117 = ssub.s32 %s29, 1
      %p118 = scmp.gt.s32.totalorder %s117, 0
      %s119 = scalar_select %p118, %s117, 0
      %s120 = ssub.s32 %s116, %s119
      %p121 = scmp.eq.s32.totalorder %s120, 0
      %s123 = sadd.s32 %s122, 1
      %s124 = scalar_select %p121, %s122, %s123
      %p127 = pneg %p121
      %p128 = scmp.eq.s32.totalorder %s22, 4
      %p129 = por %p127, %p128
      %p130 = scmp.ne.s32.totalorder %s122, %s125
      %p131 = scmp.eq.s32.totalorder %s22, 0
      %p132 = por %p130, %p131
      %p133 = scmp.ne.s32.totalorder %s122, %s125
      %p134 = scmp.eq.s32.totalorder %s27, 4
      %p135 = por %p133, %p134
      %p136 = scmp.ne.s32.totalorder %s125, %s126
      %p137 = scmp.eq.s32.totalorder %s27, 0
      %p138 = por %p136, %p137
      %p139 = scmp.ne.s32.totalorder %s125, %s126
      %p140 = scmp.eq.s32.totalorder %s28, 4
      %p141 = por %p139, %p140
      %p143 = scmp.ne.s32.totalorder %s126, %s142
      %p144 = scmp.eq.s32.totalorder %s28, 0
      %p145 = por %p143, %p144
      %s147 = sadd.s32 %s146, 1
      %p150 = scmp.eq.s32.totalorder %s22, 4
      %p151 = scmp.ne.s32.totalorder %s146, %s148
      %p152 = scmp.eq.s32.totalorder %s22, 0
      %p153 = por %p151, %p152
      %p154 = scmp.ne.s32.totalorder %s146, %s148
      %p155 = scmp.eq.s32.totalorder %s27, 4
      %p156 = por %p154, %p155
      %p157 = scmp.ne.s32.totalorder %s148, %s149
      %p158 = scmp.eq.s32.totalorder %s27, 0
      %p159 = por %p157, %p158
      %p160 = scmp.ne.s32.totalorder %s148, %s149
      %p161 = scmp.eq.s32.totalorder %s28, 4
      %p162 = por %p160, %p161
      %p164 = scmp.ne.s32.totalorder %s149, %s163
      %p165 = scmp.eq.s32.totalorder %s28, 0
      %p166 = por %p164, %p165
      %s168 = sadd.s32 %s167, 1
      %p171 = scmp.eq.s32.totalorder %s22, 4
      %p172 = scmp.ne.s32.totalorder %s167, %s169
      %p173 = scmp.eq.s32.totalorder %s22, 0
      %p174 = por %p172, %p173
      %p175 = scmp.ne.s32.totalorder %s167, %s169
      %p176 = scmp.eq.s32.totalorder %s27, 4
      %p177 = por %p175, %p176
      %p178 = scmp.ne.s32.totalorder %s169, %s170
      %p179 = scmp.eq.s32.totalorder %s27, 0
      %p180 = por %p178, %p179
      %p181 = scmp.ne.s32.totalorder %s169, %s170
      %p182 = scmp.eq.s32.totalorder %s28, 4
      %p183 = por %p181, %p182
      %p185 = scmp.ne.s32.totalorder %s170, %s184
      %p186 = scmp.eq.s32.totalorder %s28, 0
      %p187 = por %p185, %p186
      %s189 = sadd.s32 %s188, 1
      %p192 = scmp.eq.s32.totalorder %s22, 4
      %p193 = scmp.ne.s32.totalorder %s188, %s190
      %p194 = scmp.eq.s32.totalorder %s22, 0
      %p195 = por %p193, %p194
      %p196 = scmp.ne.s32.totalorder %s188, %s190
      %p197 = scmp.eq.s32.totalorder %s27, 4
      %p198 = por %p196, %p197
      %p199 = scmp.ne.s32.totalorder %s190, %s191
      %p200 = scmp.eq.s32.totalorder %s27, 0
      %p201 = por %p199, %p200
      %p202 = scmp.ne.s32.totalorder %s190, %s191
      %p203 = scmp.eq.s32.totalorder %s28, 4
      %p204 = por %p202, %p203
      %p206 = scmp.ne.s32.totalorder %s191, %s205
      %p207 = scmp.eq.s32.totalorder %s28, 0
      %p208 = por %p206, %p207
      %s210 = sadd.s32 %s209, 1
      %p213 = scmp.eq.s32.totalorder %s22, 4
      %p214 = scmp.ne.s32.totalorder %s209, %s211
      %p215 = scmp.eq.s32.totalorder %s22, 0
      %p216 = por %p214, %p215
      %p217 = scmp.ne.s32.totalorder %s209, %s211
      %p218 = scmp.eq.s32.totalorder %s27, 4
      %p219 = por %p217, %p218
      %p220 = scmp.ne.s32.totalorder %s211, %s212
      %p221 = scmp.eq.s32.totalorder %s27, 0
      %p222 = por %p220, %p221
      %p223 = scmp.ne.s32.totalorder %s211, %s212
      %p224 = scmp.eq.s32.totalorder %s28, 4
      %p225 = por %p223, %p224
      %p227 = scmp.ne.s32.totalorder %s212, %s226
      %p228 = scmp.eq.s32.totalorder %s28, 0
      %p229 = por %p227, %p228
      %s231 = sadd.s32 %s230, 1
      %p234 = scmp.eq.s32.totalorder %s22, 4
      %p235 = scmp.ne.s32.totalorder %s230, %s232
      %p236 = scmp.eq.s32.totalorder %s22, 0
      %p237 = por %p235, %p236
      %p238 = scmp.ne.s32.totalorder %s230, %s232
      %p239 = scmp.eq.s32.totalorder %s27, 4
      %p240 = por %p238, %p239
      %p241 = scmp.ne.s32.totalorder %s232, %s233
      %p242 = scmp.eq.s32.totalorder %s27, 0
      %p243 = por %p241, %p242
      %p244 = scmp.ne.s32.totalorder %s232, %s233
      %p245 = scmp.eq.s32.totalorder %s28, 4
      %p246 = por %p244, %p245
      %p248 = scmp.ne.s32.totalorder %s233, %s247
      %p249 = scmp.eq.s32.totalorder %s28, 0
      %p250 = por %p248, %p249
      %s252 = sadd.s32 %s251, 1
      %p255 = scmp.eq.s32.totalorder %s22, 4
      %p256 = scmp.ne.s32.totalorder %s251, %s253
      %p257 = scmp.eq.s32.totalorder %s22, 0
      %p258 = por %p256, %p257
      %p259 = scmp.ne.s32.totalorder %s251, %s253
      %p260 = scmp.eq.s32.totalorder %s27, 4
      %p261 = por %p259, %p260
      %p262 = scmp.ne.s32.totalorder %s253, %s254
      %p263 = scmp.eq.s32.totalorder %s27, 0
      %p264 = por %p262, %p263
      %p265 = scmp.ne.s32.totalorder %s253, %s254
      %p266 = scmp.eq.s32.totalorder %s28, 4
      %p267 = por %p265, %p266
      %p269 = scmp.ne.s32.totalorder %s254, %s268
      %p270 = scmp.eq.s32.totalorder %s28, 0
      %p271 = por %p269, %p270
      %s273 = sadd.s32 %s272, 1
      %p276 = scmp.eq.s32.totalorder %s22, 4
      %p277 = scmp.ne.s32.totalorder %s272, %s274
      %p278 = scmp.eq.s32.totalorder %s22, 0
      %p279 = por %p277, %p278
      %p280 = scmp.ne.s32.totalorder %s272, %s274
      %p281 = scmp.eq.s32.totalorder %s27, 4
      %p282 = por %p280, %p281
      %p283 = scmp.ne.s32.totalorder %s274, %s275
      %p284 = scmp.eq.s32.totalorder %s27, 0
      %p285 = por %p283, %p284
      %p286 = scmp.ne.s32.totalorder %s274, %s275
      %p287 = scmp.eq.s32.totalorder %s28, 4
      %p288 = por %p286, %p287
      %p290 = scmp.ne.s32.totalorder %s275, %s289
      %p291 = scmp.eq.s32.totalorder %s28, 0
      %p292 = por %p290, %p291
      %s294 = sadd.s32 %s293, 1
      %p297 = scmp.eq.s32.totalorder %s22, 4
      %p298 = scmp.ne.s32.totalorder %s293, %s295
      %p299 = scmp.eq.s32.totalorder %s22, 0
      %p300 = por %p298, %p299
      %p301 = scmp.ne.s32.totalorder %s293, %s295
      %p302 = scmp.eq.s32.totalorder %s27, 4
      %p303 = por %p301, %p302
      %p304 = scmp.ne.s32.totalorder %s295, %s296
      %p305 = scmp.eq.s32.totalorder %s27, 0
      %p306 = por %p304, %p305
      %p307 = scmp.ne.s32.totalorder %s295, %s296
      %p308 = scmp.eq.s32.totalorder %s28, 4
      %p309 = por %p307, %p308
      %p311 = scmp.ne.s32.totalorder %s296, %s310
      %p312 = scmp.eq.s32.totalorder %s28, 0
      %p313 = por %p311, %p312
      %s315 = sadd.s32 %s314, 1
      %p318 = scmp.eq.s32.totalorder %s22, 4
      %p319 = scmp.ne.s32.totalorder %s314, %s316
      %p320 = scmp.eq.s32.totalorder %s22, 0
      %p321 = por %p319, %p320
      %p322 = scmp.ne.s32.totalorder %s314, %s316
      %p323 = scmp.eq.s32.totalorder %s27, 4
      %p324 = por %p322, %p323
      %p325 = scmp.ne.s32.totalorder %s316, %s317
      %p326 = scmp.eq.s32.totalorder %s27, 0
      %p327 = por %p325, %p326
      %p328 = scmp.ne.s32.totalorder %s316, %s317
      %p329 = scmp.eq.s32.totalorder %s28, 4
      %p330 = por %p328, %p329
      %p332 = scmp.ne.s32.totalorder %s317, %s331
      %p333 = scmp.eq.s32.totalorder %s28, 0
      %p334 = por %p332, %p333
      %s336 = sadd.s32 %s335, 1
      %p339 = scmp.eq.s32.totalorder %s22, 4
      %p340 = scmp.ne.s32.totalorder %s335, %s337
      %p341 = scmp.eq.s32.totalorder %s22, 0
      %p342 = por %p340, %p341
      %p343 = scmp.ne.s32.totalorder %s335, %s337
      %p344 = scmp.eq.s32.totalorder %s27, 4
      %p345 = por %p343, %p344
      %p346 = scmp.ne.s32.totalorder %s337, %s338
      %p347 = scmp.eq.s32.totalorder %s27, 0
      %p348 = por %p346, %p347
      %p349 = scmp.ne.s32.totalorder %s337, %s338
      %p350 = scmp.eq.s32.totalorder %s28, 4
      %p351 = por %p349, %p350
      %p353 = scmp.ne.s32.totalorder %s338, %s352
      %p354 = scmp.eq.s32.totalorder %s28, 0
      %p355 = por %p353, %p354
      %s357 = sadd.s32 %s356, 1
      %p360 = scmp.eq.s32.totalorder %s22, 4
      %p361 = scmp.ne.s32.totalorder %s356, %s358
      %p362 = scmp.eq.s32.totalorder %s22, 0
      %p363 = por %p361, %p362
      %p364 = scmp.ne.s32.totalorder %s356, %s358
      %p365 = scmp.eq.s32.totalorder %s27, 4
      %p366 = por %p364, %p365
      %p367 = scmp.ne.s32.totalorder %s358, %s359
      %p368 = scmp.eq.s32.totalorder %s27, 0
      %p369 = por %p367, %p368
      %p370 = scmp.ne.s32.totalorder %s358, %s359
      %p371 = scmp.eq.s32.totalorder %s28, 4
      %p372 = por %p370, %p371
      %p374 = scmp.ne.s32.totalorder %s359, %s373
      %p375 = scmp.eq.s32.totalorder %s28, 0
      %p376 = por %p374, %p375
      %p377 = scmp.le.s32.totalorder 1, %s22
      %p378 = scmp.lt.s32.totalorder %s22, 6
      %p379 = pnand %p377, %p378
      %p380 = pneg %p379
      // Predicated region
      $region9: #{graph_cnn_forward.1} parent=5 // pred_check
        _
      $region10: #{graph_cnn_forward.1} parent=5 // pred_check_branch
        %382 = sbr.rel (%p379) target = $region12
      $region11: #{graph_cnn_forward.1} parent=5 // pred_region
        %s383 = ssub.s32 %s22, 1
        // Predicated region
        $region13: #{graph_cnn_forward.1} parent=11 // pred_check
          %p384 = pneg %p43
        $region14: #{graph_cnn_forward.1} parent=11 // pred_check_branch
          %386 = sbr.rel (%p384) target = $region16
        $region15: #{graph_cnn_forward.1} parent=11 // pred_region
          _
        $region16: #{graph_cnn_forward.1} parent=11 // pred_fallthru
          _
        // Predicated region
        $region17: #{graph_cnn_forward.1} parent=11 // pred_check
          %p387 = pneg %p64
        $region18: #{graph_cnn_forward.1} parent=11 // pred_check_branch
          %389 = sbr.rel (%p387) target = $region20
        $region19: #{graph_cnn_forward.1} parent=11 // pred_region
          _
        $region20: #{graph_cnn_forward.1} parent=11 // pred_fallthru
          _
        // Predicated region
        $region21: #{graph_cnn_forward.1} parent=11 // pred_check
          %p390 = pneg %p85
        $region22: #{graph_cnn_forward.1} parent=11 // pred_check_branch
          %392 = sbr.rel (%p390) target = $region24
        $region23: #{graph_cnn_forward.1} parent=11 // pred_region
          _
        $region24: #{graph_cnn_forward.1} parent=11 // pred_fallthru
          _
        // Predicated region
        $region25: #{graph_cnn_forward.1} parent=11 // pred_check
          %p393 = pneg %p106
        $region26: #{graph_cnn_forward.1} parent=11 // pred_check_branch
          %395 = sbr.rel (%p393) target = $region28
        $region27: #{graph_cnn_forward.1} parent=11 // pred_region
          _
        $region28: #{graph_cnn_forward.1} parent=11 // pred_fallthru
          _
        // Predicated region
        $region29: #{graph_cnn_forward.1} parent=11 // pred_check
          %p396 = pneg %p159
        $region30: #{graph_cnn_forward.1} parent=11 // pred_check_branch
          %398 = sbr.rel (%p396) target = $region32
        $region31: #{graph_cnn_forward.1} parent=11 // pred_region
          _
        $region32: #{graph_cnn_forward.1} parent=11 // pred_fallthru
          _
        // Predicated region
        $region33: #{graph_cnn_forward.1} parent=11 // pred_check
          %p399 = pneg %p180
        $region34: #{graph_cnn_forward.1} parent=11 // pred_check_branch
          %401 = sbr.rel (%p399) target = $region36
        $region35: #{graph_cnn_forward.1} parent=11 // pred_region
          _
        $region36: #{graph_cnn_forward.1} parent=11 // pred_fallthru
          _
        // Predicated region
        $region37: #{graph_cnn_forward.1} parent=11 // pred_check
          %p402 = pneg %p201
        $region38: #{graph_cnn_forward.1} parent=11 // pred_check_branch
          %404 = sbr.rel (%p402) target = $region40
        $region39: #{graph_cnn_forward.1} parent=11 // pred_region
          _
        $region40: #{graph_cnn_forward.1} parent=11 // pred_fallthru
          _
        // Predicated region
        $region41: #{graph_cnn_forward.1} parent=11 // pred_check
          %p405 = pneg %p222
        $region42: #{graph_cnn_forward.1} parent=11 // pred_check_branch
          %407 = sbr.rel (%p405) target = $region44
        $region43: #{graph_cnn_forward.1} parent=11 // pred_region
          _
        $region44: #{graph_cnn_forward.1} parent=11 // pred_fallthru
          _
        // Predicated region
        $region45: #{graph_cnn_forward.1} parent=11 // pred_check
          %p408 = pneg %p243
        $region46: #{graph_cnn_forward.1} parent=11 // pred_check_branch
          %410 = sbr.rel (%p408) target = $region48
        $region47: #{graph_cnn_forward.1} parent=11 // pred_region
          _
        $region48: #{graph_cnn_forward.1} parent=11 // pred_fallthru
          _
        // Predicated region
        $region49: #{graph_cnn_forward.1} parent=11 // pred_check
          %p411 = pneg %p264
        $region50: #{graph_cnn_forward.1} parent=11 // pred_check_branch
          %413 = sbr.rel (%p411) target = $region52
        $region51: #{graph_cnn_forward.1} parent=11 // pred_region
          _
        $region52: #{graph_cnn_forward.1} parent=11 // pred_fallthru
          _
        // Predicated region
        $region53: #{graph_cnn_forward.1} parent=11 // pred_check
          %p414 = pneg %p285
        $region54: #{graph_cnn_forward.1} parent=11 // pred_check_branch
          %416 = sbr.rel (%p414) target = $region56
        $region55: #{graph_cnn_forward.1} parent=11 // pred_region
          _
        $region56: #{graph_cnn_forward.1} parent=11 // pred_fallthru
          _
        // Predicated region
        $region57: #{graph_cnn_forward.1} parent=11 // pred_check
          %p417 = pneg %p306
        $region58: #{graph_cnn_forward.1} parent=11 // pred_check_branch
          %419 = sbr.rel (%p417) target = $region60
        $region59: #{graph_cnn_forward.1} parent=11 // pred_region
          _
        $region60: #{graph_cnn_forward.1} parent=11 // pred_fallthru
          _
        // Predicated region
        $region61: #{graph_cnn_forward.1} parent=11 // pred_check
          %p420 = pneg %p327
        $region62: #{graph_cnn_forward.1} parent=11 // pred_check_branch
          %422 = sbr.rel (%p420) target = $region64
        $region63: #{graph_cnn_forward.1} parent=11 // pred_region
          _
        $region64: #{graph_cnn_forward.1} parent=11 // pred_fallthru
          _
        // Predicated region
        $region65: #{graph_cnn_forward.1} parent=11 // pred_check
          %p423 = pneg %p348
        $region66: #{graph_cnn_forward.1} parent=11 // pred_check_branch
          %425 = sbr.rel (%p423) target = $region68
        $region67: #{graph_cnn_forward.1} parent=11 // pred_region
          _
        $region68: #{graph_cnn_forward.1} parent=11 // pred_fallthru
          _
      $region12: #{graph_cnn_forward.1} parent=5 // pred_fallthru
        _
      %p426 = scmp.lt.s32.totalorder %s22, 5
      // Predicated region
      $region69: #{graph_cnn_forward.1} parent=5 // pred_check
        %p427 = pneg %p426
      $region70: #{graph_cnn_forward.1} parent=5 // pred_check_branch
        %429 = sbr.rel (%p427) target = $region72
      $region71: #{graph_cnn_forward.1} parent=5 // pred_region
        // Predicated region
        $region73: #{graph_cnn_forward.1} parent=71 // pred_check
          %p430 = pneg %p132
        $region74: #{graph_cnn_forward.1} parent=71 // pred_check_branch
          %432 = sbr.rel (%p430) target = $region76
        $region75: #{graph_cnn_forward.1} parent=71 // pred_region
          %s433 = ssub.s32 %s22, 1
          %p434 = scmp.gt.s32.totalorder %s433, 0
          %s435 = scalar_select %p434, %s433, 0
          %p436 = scmp.lt.s32.totalorder %s435, 3
          %s437 = scalar_select %p436, %s435, 3
          %s438 = smul.addr %s437, 32
          %s439 = smul.addr %s438, 4
          %s440 = scalar_lea.vmem %s4, %s439
          %s441 = ssub.s32 %s22, 1
          %p442 = scmp.gt.s32.totalorder %s441, 0
          %s443 = scalar_select %p442, %s441, 0
        $region76: #{graph_cnn_forward.1} parent=71 // pred_fallthru
          _
      $region72: #{graph_cnn_forward.1} parent=5 // pred_fallthru
        _
      %p444 = scmp.le.s32.totalorder 1, %s22
      %p445 = scmp.lt.s32.totalorder %s22, 6
      %p446 = pnand %p444, %p445
      %p447 = pneg %p446
      // Predicated region
      $region77: #{graph_cnn_forward.1} parent=5 // pred_check
        _
      $region78: #{graph_cnn_forward.1} parent=5 // pred_check_branch
        %449 = sbr.rel (%p446) target = $region80
      $region79: #{graph_cnn_forward.1} parent=5 // pred_region
        %s450 = ssub.s32 %s22, 1
        %p451 = pneg %p43
        %p452 = pneg %p40
        %p453 = pneg %p64
        %p454 = pneg %p61
        %p455 = pneg %p85
        %p456 = pneg %p82
        %p457 = pneg %p106
        %p458 = pneg %p103
        %s459 = ssub.s32 %s27, 1
        %p460 = scmp.gt.s32.totalorder %s459, 0
        %s461 = scalar_select %p460, %s459, 0
        %p462 = scmp.lt.s32.totalorder %s461, 3
        %s463 = scalar_select %p462, %s461, 3
        %s464 = smul.addr %s463, 32
        %s465 = smul.addr %s464, 4
        %s466 = scalar_lea.vmem %s4, %s465
        %p467 = pneg %p138
        %p468 = pneg %p135
        %p469 = pneg %p159
        %p470 = pneg %p156
        %p471 = pneg %p180
        %p472 = pneg %p177
        %p473 = pneg %p201
        %p474 = pneg %p198
        %p475 = pneg %p222
        %p476 = pneg %p219
        %p477 = pneg %p243
        %p478 = pneg %p240
        %p479 = pneg %p264
        %p480 = pneg %p261
        %p481 = pneg %p285
        %p482 = pneg %p282
        %p483 = pneg %p306
        %p484 = pneg %p303
        %p485 = pneg %p327
        %p486 = pneg %p324
        %p487 = pneg %p348
        %p488 = pneg %p345
        %p489 = pneg %p369
        %p490 = pneg %p366
        %s491 = ssub.s32 %s27, 1
        %p492 = scmp.gt.s32.totalorder %s491, 0
        %s493 = scalar_select %p492, %s491, 0
        %p494 = scmp.lt.s32.totalorder %s493, 3
        %s495 = scalar_select %p494, %s493, 3
        %s496 = smul.addr %s495, 32
        %s497 = smul.addr %s496, 4
        %s498 = scalar_lea.vmem %s4, %s497
        %s499 = ssub.s32 %s27, 1
        %p500 = scmp.gt.s32.totalorder %s499, 0
        %s501 = scalar_select %p500, %s499, 0
        %p503 = scmp.eq.s32.totalorder %s27, 0
        // Predicated region
        $region81: #{graph_cnn_forward.1} parent=79 // pred_check
          %p504 = pneg %p503
        $region82: #{graph_cnn_forward.1} parent=79 // pred_check_branch
          %506 = sbr.rel (%p504) target = $region84
        $region83: #{graph_cnn_forward.1} parent=79 // pred_region
          %v507 = vld [vmem:[%s2] sm:$0xf]
          %v508 = vld [vmem:[%s2 + $0x4] sm:$0xf]
          %v509 = vld [vmem:[%s2 + $0x8] sm:$0xf]
          %v510 = vld [vmem:[%s2 + $0xc] sm:$0xf]
          %v511 = vld [vmem:[%s2 + $0x10] sm:$0xf]
          %v512 = vld [vmem:[%s2 + $0x14] sm:$0xf]
          %v513 = vld [vmem:[%s2 + $0x18] sm:$0xf]
          %v514 = vld [vmem:[%s2 + $0x1c] sm:$0xf]
          %v515 = vld [vmem:[%s2 + $0x20] sm:$0xf]
          %v516 = vld [vmem:[%s2 + $0x24] sm:$0xf]
          %v517 = vld [vmem:[%s2 + $0x28] sm:$0xf]
          %v518 = vld [vmem:[%s2 + $0x2c] sm:$0xf]
          %v519 = vld [vmem:[%s2 + $0x30] sm:$0xf]
          %v520 = vld [vmem:[%s2 + $0x34] sm:$0xf]
          %v521 = vld [vmem:[%s2 + $0x38] sm:$0xf]
          %v522 = vld [vmem:[%s2 + $0x3c] sm:$0xf]
          %v523 = vld [vmem:[%s3] sm:$0xf]
          %v524 = vld [vmem:[%s3 + $0x4] sm:$0xf]
          %v525 = vld [vmem:[%s3 + $0x8] sm:$0xf]
          %v526 = vld [vmem:[%s3 + $0xc] sm:$0xf]
          %v527 = vld [vmem:[%s3 + $0x10] sm:$0xf]
          %v528 = vld [vmem:[%s3 + $0x14] sm:$0xf]
          %v529 = vld [vmem:[%s3 + $0x18] sm:$0xf]
          %v530 = vld [vmem:[%s3 + $0x1c] sm:$0xf]
          %v531 = vld [vmem:[%s3 + $0x20] sm:$0xf]
          %v532 = vld [vmem:[%s3 + $0x24] sm:$0xf]
          %v533 = vld [vmem:[%s3 + $0x28] sm:$0xf]
          %v534 = vld [vmem:[%s3 + $0x2c] sm:$0xf]
          %v535 = vld [vmem:[%s3 + $0x30] sm:$0xf]
          %v536 = vld [vmem:[%s3 + $0x34] sm:$0xf]
          %v537 = vld [vmem:[%s3 + $0x38] sm:$0xf]
          %v538 = vld [vmem:[%s3 + $0x3c] sm:$0xf]
          %v539 = vld [vmem:[%s3 + $0x40] sm:$0xf]
          %v540 = vld [vmem:[%s3 + $0x44] sm:$0xf]
          %v541 = vld [vmem:[%s3 + $0x48] sm:$0xf]
          %v542 = vld [vmem:[%s3 + $0x4c] sm:$0xf]
          %v543 = vld [vmem:[%s3 + $0x50] sm:$0xf]
          %v544 = vld [vmem:[%s3 + $0x54] sm:$0xf]
          %v545 = vld [vmem:[%s3 + $0x58] sm:$0xf]
          %v546 = vld [vmem:[%s3 + $0x5c] sm:$0xf]
          %v547 = vld [vmem:[%s3 + $0x60] sm:$0xf]
          %v548 = vld [vmem:[%s3 + $0x64] sm:$0xf]
          %v549 = vld [vmem:[%s3 + $0x68] sm:$0xf]
          %v550 = vld [vmem:[%s3 + $0x6c] sm:$0xf]
          %v551 = vld [vmem:[%s3 + $0x70] sm:$0xf]
          %v552 = vld [vmem:[%s3 + $0x74] sm:$0xf]
          %v553 = vld [vmem:[%s3 + $0x78] sm:$0xf]
          %v554 = vld [vmem:[%s3 + $0x7c] sm:$0xf]
          %v555 = vld [vmem:[%s5] sm:$0x1]
          %v556 = vld [vmem:[%s0] sm:$0xf]
          %v557 = vld [vmem:[%s0 + $0x4] sm:$0xf]
          %v558 = vld [vmem:[%s0 + $0x8] sm:$0xf]
          %v559 = vld [vmem:[%s0 + $0xc] sm:$0xf]
          %v560 = vld [vmem:[%s0 + $0x10] sm:$0xf]
          %v561 = vld [vmem:[%s0 + $0x14] sm:$0xf]
          %v562 = vld [vmem:[%s0 + $0x18] sm:$0xf]
          %v563 = vld [vmem:[%s0 + $0x1c] sm:$0xf]
          %v564 = vld [vmem:[%s0 + $0x20] sm:$0xf]
          %v565 = vld [vmem:[%s0 + $0x24] sm:$0xf]
          %v566 = vld [vmem:[%s0 + $0x28] sm:$0xf]
          %v567 = vld [vmem:[%s0 + $0x2c] sm:$0xf]
          %v568 = vld [vmem:[%s0 + $0x30] sm:$0xf]
          %v569 = vld [vmem:[%s0 + $0x34] sm:$0xf]
          %v570 = vld [vmem:[%s0 + $0x38] sm:$0xf]
          %v571 = vld [vmem:[%s0 + $0x3c] sm:$0xf]
          %v588 = vunpack.c.l.b16 %v556
          %v589 = vunpack.c.l.b16 %v557
          %v590 = vunpack.c.l.b16 %v558
          %v591 = vunpack.c.l.b16 %v559
          %v592 = vunpack.c.l.b16 %v560
          %v593 = vunpack.c.l.b16 %v561
          %v594 = vunpack.c.l.b16 %v562
          %v595 = vunpack.c.l.b16 %v563
          %v596 = vunpack.c.l.b16 %v564
          %v597 = vunpack.c.l.b16 %v565
          %v598 = vunpack.c.l.b16 %v566
          %v599 = vunpack.c.l.b16 %v567
          %v600 = vunpack.c.l.b16 %v568
          %v601 = vunpack.c.l.b16 %v569
          %v602 = vunpack.c.l.b16 %v570
          %v603 = vunpack.c.l.b16 %v571
          %v604 = vpack.c.b16 %v589, %v588
          %v605 = vpack.c.b16 %v591, %v590
          %v606 = vpack.c.b16 %v593, %v592
          %v607 = vpack.c.b16 %v595, %v594
          %v608 = vpack.c.b16 %v597, %v596
          %v609 = vpack.c.b16 %v599, %v598
          %v610 = vpack.c.b16 %v601, %v600
          %v611 = vpack.c.b16 %v603, %v602
          %v636 = vunpack.c.l.b16 %v507
          %v637 = vunpack.c.l.b16 %v508
          %v638 = vunpack.c.l.b16 %v509
          %v639 = vunpack.c.l.b16 %v510
          %v640 = vunpack.c.l.b16 %v511
          %v641 = vunpack.c.l.b16 %v512
          %v642 = vunpack.c.l.b16 %v513
          %v643 = vunpack.c.l.b16 %v514
          %v644 = vunpack.c.l.b16 %v515
          %v645 = vunpack.c.l.b16 %v516
          %v646 = vunpack.c.l.b16 %v517
          %v647 = vunpack.c.l.b16 %v518
          %v648 = vunpack.c.l.b16 %v519
          %v649 = vunpack.c.l.b16 %v520
          %v650 = vunpack.c.l.b16 %v521
          %v651 = vunpack.c.l.b16 %v522
          %v652 = vpack.c.b16 %v637, %v636
          %v653 = vpack.c.b16 %v639, %v638
          %v654 = vpack.c.b16 %v641, %v640
          %v655 = vpack.c.b16 %v643, %v642
          %v656 = vpack.c.b16 %v645, %v644
          %v657 = vpack.c.b16 %v647, %v646
          %v658 = vpack.c.b16 %v649, %v648
          %v659 = vpack.c.b16 %v651, %v650
          %668 = vmatprep.subr.bf16.mxu0 0
          %669 = vmatpush1.bf16.msra.mxu0 %v652
          %670 = vmatprep.subr.bf16.mxu0 0
          %671 = vmatpush1.bf16.msra.mxu0 %v653
          %672 = vmatprep.subr.bf16.mxu0 0
          %673 = vmatpush1.bf16.msra.mxu0 %v654
          %674 = vmatprep.subr.bf16.mxu0 0
          %675 = vmatpush1.bf16.msra.mxu0 %v655
          %676 = vmatprep.subr.bf16.mxu0 0
          %677 = vmatpush1.bf16.msra.mxu0 %v656
          %678 = vmatprep.subr.bf16.mxu0 0
          %679 = vmatpush1.bf16.msra.mxu0 %v657
          %680 = vmatprep.subr.bf16.mxu0 0
          %681 = vmatpush1.bf16.msra.mxu0 %v658
          %682 = vmatprep.subr.bf16.mxu0 0
          %683 = vmatpush1.bf16.msra.mxu0 %v659
          %684 = vmatprep.subr.bf16.mxu0 0
          %685 = vmatpush1.bf16.msra.mxu0 0
          %686 = vmatprep.subr.bf16.mxu0 0
          %687 = vmatpush1.bf16.msra.mxu0 0
          %688 = vmatprep.subr.bf16.mxu0 0
          %689 = vmatpush1.bf16.msra.mxu0 0
          %690 = vmatprep.subr.bf16.mxu0 0
          %691 = vmatpush1.bf16.msra.mxu0 0
          %692 = vmatprep.subr.bf16.mxu0 0
          %693 = vmatpush1.bf16.msra.mxu0 0
          %694 = vmatprep.subr.bf16.mxu0 0
          %695 = vmatpush1.bf16.msra.mxu0 0
          %696 = vmatprep.subr.bf16.mxu0 0
          %697 = vmatpush1.bf16.msra.mxu0 0
          %698 = vmatprep.subr.bf16.mxu0 0
          %699 = vmatpush1.bf16.msra.mxu0 0
          %700 = vmatprep.mubr.bf16.mxu0 0
          %701 = vmatmul.mubr.bf16.gmra.mrb[0].mxu0 %v604
          %v702 = vpop.f32.mrb[0].mxu0
          %v703 = vadd.f32 0.0, %v702
          %v704 = vpop.f32.mrb[0].mxu0
          %v705 = vpop.f32.mrb[0].mxu0
          %v706 = vadd.f32 0.0, %v705
          %v707 = vpop.f32.mrb[0].mxu0
          %708 = vmatprep.mubr.bf16.mxu0 0
          %709 = vmatmul.mubr.bf16.gmra.mrb[0].mxu0 %v605
          %v710 = vpop.f32.mrb[0].mxu0
          %v711 = vadd.f32 0.0, %v710
          %v712 = vpop.f32.mrb[0].mxu0
          %v713 = vpop.f32.mrb[0].mxu0
          %v714 = vadd.f32 0.0, %v713
          %v715 = vpop.f32.mrb[0].mxu0
          %716 = vmatprep.mubr.bf16.mxu0 0
          %717 = vmatmul.mubr.bf16.gmra.mrb[0].mxu0 %v606
          %v718 = vpop.f32.mrb[0].mxu0
          %v719 = vadd.f32 0.0, %v718
          %v720 = vpop.f32.mrb[0].mxu0
          %v721 = vpop.f32.mrb[0].mxu0
          %v722 = vadd.f32 0.0, %v721
          %v723 = vpop.f32.mrb[0].mxu0
          %724 = vmatprep.mubr.bf16.mxu0 0
          %725 = vmatmul.mubr.bf16.gmra.mrb[0].mxu0 %v607
          %v726 = vpop.f32.mrb[0].mxu0
          %v727 = vadd.f32 0.0, %v726
          %v728 = vpop.f32.mrb[0].mxu0
          %v729 = vpop.f32.mrb[0].mxu0
          %v730 = vadd.f32 0.0, %v729
          %v731 = vpop.f32.mrb[0].mxu0
          %732 = vmatprep.mubr.bf16.mxu0 0
          %733 = vmatmul.mubr.bf16.gmra.mrb[0].mxu0 %v608
          %v734 = vpop.f32.mrb[0].mxu0
          %v735 = vadd.f32 0.0, %v734
          %v736 = vpop.f32.mrb[0].mxu0
          %v737 = vpop.f32.mrb[0].mxu0
          %v738 = vadd.f32 0.0, %v737
          %v739 = vpop.f32.mrb[0].mxu0
          %740 = vmatprep.mubr.bf16.mxu0 0
          %741 = vmatmul.mubr.bf16.gmra.mrb[0].mxu0 %v609
          %v742 = vpop.f32.mrb[0].mxu0
          %v743 = vadd.f32 0.0, %v742
          %v744 = vpop.f32.mrb[0].mxu0
          %v745 = vpop.f32.mrb[0].mxu0
          %v746 = vadd.f32 0.0, %v745
          %v747 = vpop.f32.mrb[0].mxu0
          %748 = vmatprep.mubr.bf16.mxu0 0
          %749 = vmatmul.mubr.bf16.gmra.mrb[0].mxu0 %v610
          %v750 = vpop.f32.mrb[0].mxu0
          %v751 = vadd.f32 0.0, %v750
          %v752 = vpop.f32.mrb[0].mxu0
          %v753 = vpop.f32.mrb[0].mxu0
          %v754 = vadd.f32 0.0, %v753
          %v755 = vpop.f32.mrb[0].mxu0
          %756 = vmatprep.mubr.bf16.mxu0 0
          %757 = vmatmul.mubr.bf16.gmra.mrb[0].mxu0 %v611
          %v758 = vpop.f32.mrb[0].mxu0
          %v759 = vadd.f32 0.0, %v758
          %v760 = vpop.f32.mrb[0].mxu0
          %v761 = vpop.f32.mrb[0].mxu0
          %v762 = vadd.f32 0.0, %v761
          %v763 = vpop.f32.mrb[0].mxu0
          %764 = vdwg.mxu0
          %v765 = vld [vmem:[%s1] sm:$0xff]
          %v766 = vld [vmem:[%s1 + $0x8] sm:$0xff]
          %v767 = vld [vmem:[%s1 + $0x10] sm:$0xff]
          %v768 = vld [vmem:[%s1 + $0x18] sm:$0xff]
          %v769 = vld [vmem:[%s1 + $0x20] sm:$0xff]
          %v770 = vld [vmem:[%s1 + $0x28] sm:$0xff]
          %v771 = vld [vmem:[%s1 + $0x30] sm:$0xff]
          %v772 = vld [vmem:[%s1 + $0x38] sm:$0xff]
          %v773 = vld [vmem:[%s1 + $0x40] sm:$0xff]
          %v774 = vld [vmem:[%s1 + $0x48] sm:$0xff]
          %v775 = vld [vmem:[%s1 + $0x50] sm:$0xff]
          %v776 = vld [vmem:[%s1 + $0x58] sm:$0xff]
          %v777 = vld [vmem:[%s1 + $0x60] sm:$0xff]
          %v778 = vld [vmem:[%s1 + $0x68] sm:$0xff]
          %v779 = vld [vmem:[%s1 + $0x70] sm:$0xff]
          %v780 = vld [vmem:[%s1 + $0x78] sm:$0xff]
          %782 = vset.pattern.permute.xlu0 0
          %783 = vperm.xlu0 %782, %v765
          %v784 = vpop.permute.xlu0 %783
          %787 = vset.pattern.permute.xlu0 0
          %788 = vperm.xlu0 %787, %v766
          %v789 = vpop.permute.xlu0 %788
          %792 = vset.pattern.permute.xlu0 0
          %793 = vperm.xlu0 %792, %v767
          %v794 = vpop.permute.xlu0 %793
          %797 = vset.pattern.permute.xlu0 0
          %798 = vperm.xlu0 %797, %v768
          %v799 = vpop.permute.xlu0 %798
          %802 = vset.pattern.permute.xlu0 0
          %803 = vperm.xlu0 %802, %v769
          %v804 = vpop.permute.xlu0 %803
          %807 = vset.pattern.permute.xlu0 0
          %808 = vperm.xlu0 %807, %v770
          %v809 = vpop.permute.xlu0 %808
          %812 = vset.pattern.permute.xlu0 0
          %813 = vperm.xlu0 %812, %v771
          %v814 = vpop.permute.xlu0 %813
          %817 = vset.pattern.permute.xlu0 0
          %818 = vperm.xlu0 %817, %v772
          %v819 = vpop.permute.xlu0 %818
          %822 = vset.pattern.permute.xlu0 0
          %823 = vperm.xlu0 %822, %v773
          %v824 = vpop.permute.xlu0 %823
          %827 = vset.pattern.permute.xlu0 0
          %828 = vperm.xlu0 %827, %v774
          %v829 = vpop.permute.xlu0 %828
          %832 = vset.pattern.permute.xlu0 0
          %833 = vperm.xlu0 %832, %v775
          %v834 = vpop.permute.xlu0 %833
          %837 = vset.pattern.permute.xlu0 0
          %838 = vperm.xlu0 %837, %v776
          %v839 = vpop.permute.xlu0 %838
          %842 = vset.pattern.permute.xlu0 0
          %843 = vperm.xlu0 %842, %v777
          %v844 = vpop.permute.xlu0 %843
          %847 = vset.pattern.permute.xlu0 0
          %848 = vperm.xlu0 %847, %v778
          %v849 = vpop.permute.xlu0 %848
          %852 = vset.pattern.permute.xlu0 0
          %853 = vperm.xlu0 %852, %v779
          %v854 = vpop.permute.xlu0 %853
          %857 = vset.pattern.permute.xlu0 0
          %858 = vperm.xlu0 %857, %v780
          %v859 = vpop.permute.xlu0 %858
          %v861 = vmul.f32 %v703, %v784
          %v862 = vmul.f32 %v706, %v789
          %v863 = vmul.f32 %v711, %v794
          %v864 = vmul.f32 %v714, %v799
          %v865 = vmul.f32 %v719, %v804
          %v866 = vmul.f32 %v722, %v809
          %v867 = vmul.f32 %v727, %v814
          %v868 = vmul.f32 %v730, %v819
          %v869 = vmul.f32 %v735, %v824
          %v870 = vmul.f32 %v738, %v829
          %v871 = vmul.f32 %v743, %v834
          %v872 = vmul.f32 %v746, %v839
          %v873 = vmul.f32 %v751, %v844
          %v874 = vmul.f32 %v754, %v849
          %v875 = vmul.f32 %v759, %v854
          %v876 = vmul.f32 %v762, %v859
          %v877 = vpack.c.bf16 %v862, %v861
          %v878 = vpack.c.bf16 %v864, %v863
          %v879 = vpack.c.bf16 %v866, %v865
          %v880 = vpack.c.bf16 %v868, %v867
          %v881 = vpack.c.bf16 %v870, %v869
          %v882 = vpack.c.bf16 %v872, %v871
          %v883 = vpack.c.bf16 %v874, %v873
          %v884 = vpack.c.bf16 %v876, %v875
          %v901 = vunpack.c.l.b16 %v523
          %v902 = vunpack.c.l.b16 %v524
          %v903 = vunpack.c.l.b16 %v525
          %v904 = vunpack.c.l.b16 %v526
          %v905 = vunpack.c.l.b16 %v527
          %v906 = vunpack.c.l.b16 %v528
          %v907 = vunpack.c.l.b16 %v529
          %v908 = vunpack.c.l.b16 %v530
          %v909 = vunpack.c.l.b16 %v531
          %v910 = vunpack.c.l.b16 %v532
          %v911 = vunpack.c.l.b16 %v533
          %v912 = vunpack.c.l.b16 %v534
          %v913 = vunpack.c.l.b16 %v535
          %v914 = vunpack.c.l.b16 %v536
          %v915 = vunpack.c.l.b16 %v537
          %v916 = vunpack.c.l.b16 %v538
          %v917 = vpack.c.b16 %v902, %v901
          %v918 = vpack.c.b16 %v904, %v903
          %v919 = vpack.c.b16 %v906, %v905
          %v920 = vpack.c.b16 %v908, %v907
          %v921 = vpack.c.b16 %v910, %v909
          %v922 = vpack.c.b16 %v912, %v911
          %v923 = vpack.c.b16 %v914, %v913
          %v924 = vpack.c.b16 %v916, %v915
          %933 = vmatprep.subr.bf16.mxu0 0
          %934 = vmatpush1.bf16.msra.mxu0 %v917
          %935 = vmatprep.subr.bf16.mxu0 0
          %936 = vmatpush1.bf16.msra.mxu0 %v918
          %937 = vmatprep.subr.bf16.mxu0 0
          %938 = vmatpush1.bf16.msra.mxu0 %v919
          %939 = vmatprep.subr.bf16.mxu0 0
          %940 = vmatpush1.bf16.msra.mxu0 %v920
          %941 = vmatprep.subr.bf16.mxu0 0
          %942 = vmatpush1.bf16.msra.mxu0 %v921
          %943 = vmatprep.subr.bf16.mxu0 0
          %944 = vmatpush1.bf16.msra.mxu0 %v922
          %945 = vmatprep.subr.bf16.mxu0 0
          %946 = vmatpush1.bf16.msra.mxu0 %v923
          %947 = vmatprep.subr.bf16.mxu0 0
          %948 = vmatpush1.bf16.msra.mxu0 %v924
          %949 = vmatprep.subr.bf16.mxu0 0
          %950 = vmatpush1.bf16.msra.mxu0 0
          %951 = vmatprep.subr.bf16.mxu0 0
          %952 = vmatpush1.bf16.msra.mxu0 0
          %953 = vmatprep.subr.bf16.mxu0 0
          %954 = vmatpush1.bf16.msra.mxu0 0
          %955 = vmatprep.subr.bf16.mxu0 0
          %956 = vmatpush1.bf16.msra.mxu0 0
          %957 = vmatprep.subr.bf16.mxu0 0
          %958 = vmatpush1.bf16.msra.mxu0 0
          %959 = vmatprep.subr.bf16.mxu0 0
          %960 = vmatpush1.bf16.msra.mxu0 0
          %961 = vmatprep.subr.bf16.mxu0 0
          %962 = vmatpush1.bf16.msra.mxu0 0
          %963 = vmatprep.subr.bf16.mxu0 0
          %964 = vmatpush1.bf16.msra.mxu0 0
          %965 = vmatprep.mubr.bf16.mxu0 0
          %966 = vmatmul.mubr.bf16.gmra.mrb[0].mxu0 %v877
          %v967 = vpop.f32.mrb[0].mxu0
          %v968 = vadd.f32 0.0, %v967
          %v969 = vpop.f32.mrb[0].mxu0
          %v970 = vpop.f32.mrb[0].mxu0
          %v971 = vadd.f32 0.0, %v970
          %v972 = vpop.f32.mrb[0].mxu0
          %973 = vmatprep.mubr.bf16.mxu0 0
          %974 = vmatmul.mubr.bf16.gmra.mrb[0].mxu0 %v878
          %v975 = vpop.f32.mrb[0].mxu0
          %v976 = vadd.f32 0.0, %v975
          %v977 = vpop.f32.mrb[0].mxu0
          %v978 = vpop.f32.mrb[0].mxu0
          %v979 = vadd.f32 0.0, %v978
          %v980 = vpop.f32.mrb[0].mxu0
          %981 = vmatprep.mubr.bf16.mxu0 0
          %982 = vmatmul.mubr.bf16.gmra.mrb[0].mxu0 %v879
          %v983 = vpop.f32.mrb[0].mxu0
          %v984 = vadd.f32 0.0, %v983
          %v985 = vpop.f32.mrb[0].mxu0
          %v986 = vpop.f32.mrb[0].mxu0
          %v987 = vadd.f32 0.0, %v986
          %v988 = vpop.f32.mrb[0].mxu0
          %989 = vmatprep.mubr.bf16.mxu0 0
          %990 = vmatmul.mubr.bf16.gmra.mrb[0].mxu0 %v880
          %v991 = vpop.f32.mrb[0].mxu0
          %v992 = vadd.f32 0.0, %v991
          %v993 = vpop.f32.mrb[0].mxu0
          %v994 = vpop.f32.mrb[0].mxu0
          %v995 = vadd.f32 0.0, %v994
          %v996 = vpop.f32.mrb[0].mxu0
          %997 = vmatprep.mubr.bf16.mxu0 0
          %998 = vmatmul.mubr.bf16.gmra.mrb[0].mxu0 %v881
          %v999 = vpop.f32.mrb[0].mxu0
          %v1000 = vadd.f32 0.0, %v999
          %v1001 = vpop.f32.mrb[0].mxu0
          %v1002 = vpop.f32.mrb[0].mxu0
          %v1003 = vadd.f32 0.0, %v1002
          %v1004 = vpop.f32.mrb[0].mxu0
          %1005 = vmatprep.mubr.bf16.mxu0 0
          %1006 = vmatmul.mubr.bf16.gmra.mrb[0].mxu0 %v882
          %v1007 = vpop.f32.mrb[0].mxu0
          %v1008 = vadd.f32 0.0, %v1007
          %v1009 = vpop.f32.mrb[0].mxu0
          %v1010 = vpop.f32.mrb[0].mxu0
          %v1011 = vadd.f32 0.0, %v1010
          %v1012 = vpop.f32.mrb[0].mxu0
          %1013 = vmatprep.mubr.bf16.mxu0 0
          %1014 = vmatmul.mubr.bf16.gmra.mrb[0].mxu0 %v883
          %v1015 = vpop.f32.mrb[0].mxu0
          %v1016 = vadd.f32 0.0, %v1015
          %v1017 = vpop.f32.mrb[0].mxu0
          %v1018 = vpop.f32.mrb[0].mxu0
          %v1019 = vadd.f32 0.0, %v1018
          %v1020 = vpop.f32.mrb[0].mxu0
          %1021 = vmatprep.mubr.bf16.mxu0 0
          %1022 = vmatmul.mubr.bf16.gmra.mrb[0].mxu0 %v884
          %v1023 = vpop.f32.mrb[0].mxu0
          %v1024 = vadd.f32 0.0, %v1023
          %v1025 = vpop.f32.mrb[0].mxu0
          %v1026 = vpop.f32.mrb[0].mxu0
          %v1027 = vadd.f32 0.0, %v1026
          %v1028 = vpop.f32.mrb[0].mxu0
          %1029 = vdwg.mxu0
          %v1046 = vunpack.c.l.b16 %v539
          %v1047 = vunpack.c.l.b16 %v540
          %v1048 = vunpack.c.l.b16 %v541
          %v1049 = vunpack.c.l.b16 %v542
          %v1050 = vunpack.c.l.b16 %v543
          %v1051 = vunpack.c.l.b16 %v544
          %v1052 = vunpack.c.l.b16 %v545
          %v1053 = vunpack.c.l.b16 %v546
          %v1054 = vunpack.c.l.b16 %v547
          %v1055 = vunpack.c.l.b16 %v548
          %v1056 = vunpack.c.l.b16 %v549
          %v1057 = vunpack.c.l.b16 %v550
          %v1058 = vunpack.c.l.b16 %v551
          %v1059 = vunpack.c.l.b16 %v552
          %v1060 = vunpack.c.l.b16 %v553
          %v1061 = vunpack.c.l.b16 %v554
          %v1062 = vpack.c.b16 %v1047, %v1046
          %v1063 = vpack.c.b16 %v1049, %v1048
          %v1064 = vpack.c.b16 %v1051, %v1050
          %v1065 = vpack.c.b16 %v1053, %v1052
          %v1066 = vpack.c.b16 %v1055, %v1054
          %v1067 = vpack.c.b16 %v1057, %v1056
          %v1068 = vpack.c.b16 %v1059, %v1058
          %v1069 = vpack.c.b16 %v1061, %v1060
          %1078 = vmatprep.subr.bf16.mxu0 0
          %1079 = vmatpush1.bf16.msra.mxu0 %v1062
          %1080 = vmatprep.subr.bf16.mxu0 0
          %1081 = vmatpush1.bf16.msra.mxu0 %v1063
          %1082 = vmatprep.subr.bf16.mxu0 0
          %1083 = vmatpush1.bf16.msra.mxu0 %v1064
          %1084 = vmatprep.subr.bf16.mxu0 0
          %1085 = vmatpush1.bf16.msra.mxu0 %v1065
          %1086 = vmatprep.subr.bf16.mxu0 0
          %1087 = vmatpush1.bf16.msra.mxu0 %v1066
          %1088 = vmatprep.subr.bf16.mxu0 0
          %1089 = vmatpush1.bf16.msra.mxu0 %v1067
          %1090 = vmatprep.subr.bf16.mxu0 0
          %1091 = vmatpush1.bf16.msra.mxu0 %v1068
          %1092 = vmatprep.subr.bf16.mxu0 0
          %1093 = vmatpush1.bf16.msra.mxu0 %v1069
          %1094 = vmatprep.subr.bf16.mxu0 0
          %1095 = vmatpush1.bf16.msra.mxu0 0
          %1096 = vmatprep.subr.bf16.mxu0 0
          %1097 = vmatpush1.bf16.msra.mxu0 0
          %1098 = vmatprep.subr.bf16.mxu0 0
          %1099 = vmatpush1.bf16.msra.mxu0 0
          %1100 = vmatprep.subr.bf16.mxu0 0
          %1101 = vmatpush1.bf16.msra.mxu0 0
          %1102 = vmatprep.subr.bf16.mxu0 0
          %1103 = vmatpush1.bf16.msra.mxu0 0
          %1104 = vmatprep.subr.bf16.mxu0 0
          %1105 = vmatpush1.bf16.msra.mxu0 0
          %1106 = vmatprep.subr.bf16.mxu0 0
          %1107 = vmatpush1.bf16.msra.mxu0 0
          %1108 = vmatprep.subr.bf16.mxu0 0
          %1109 = vmatpush1.bf16.msra.mxu0 0
          %1110 = vmatprep.mubr.bf16.mxu0 0
          %1111 = vmatmul.mubr.bf16.gmra.mrb[0].mxu0 %v652
          %v1112 = vpop.f32.mrb[0].mxu0
          %v1113 = vadd.f32 %v968, %v1112
          %v1114 = vpop.f32.mrb[0].mxu0
          %v1115 = vpop.f32.mrb[0].mxu0
          %v1116 = vadd.f32 %v971, %v1115
          %v1117 = vpop.f32.mrb[0].mxu0
          %1118 = vmatprep.mubr.bf16.mxu0 0
          %1119 = vmatmul.mubr.bf16.gmra.mrb[0].mxu0 %v653
          %v1120 = vpop.f32.mrb[0].mxu0
          %v1121 = vadd.f32 %v976, %v1120
          %v1122 = vpop.f32.mrb[0].mxu0
          %v1123 = vpop.f32.mrb[0].mxu0
          %v1124 = vadd.f32 %v979, %v1123
          %v1125 = vpop.f32.mrb[0].mxu0
          %1126 = vmatprep.mubr.bf16.mxu0 0
          %1127 = vmatmul.mubr.bf16.gmra.mrb[0].mxu0 %v654
          %v1128 = vpop.f32.mrb[0].mxu0
          %v1129 = vadd.f32 %v984, %v1128
          %v1130 = vpop.f32.mrb[0].mxu0
          %v1131 = vpop.f32.mrb[0].mxu0
          %v1132 = vadd.f32 %v987, %v1131
          %v1133 = vpop.f32.mrb[0].mxu0
          %1134 = vmatprep.mubr.bf16.mxu0 0
          %1135 = vmatmul.mubr.bf16.gmra.mrb[0].mxu0 %v655
          %v1136 = vpop.f32.mrb[0].mxu0
          %v1137 = vadd.f32 %v992, %v1136
          %v1138 = vpop.f32.mrb[0].mxu0
          %v1139 = vpop.f32.mrb[0].mxu0
          %v1140 = vadd.f32 %v995, %v1139
          %v1141 = vpop.f32.mrb[0].mxu0
          %1142 = vmatprep.mubr.bf16.mxu0 0
          %1143 = vmatmul.mubr.bf16.gmra.mrb[0].mxu0 %v656
          %v1144 = vpop.f32.mrb[0].mxu0
          %v1145 = vadd.f32 %v1000, %v1144
          %v1146 = vpop.f32.mrb[0].mxu0
          %v1147 = vpop.f32.mrb[0].mxu0
          %v1148 = vadd.f32 %v1003, %v1147
          %v1149 = vpop.f32.mrb[0].mxu0
          %1150 = vmatprep.mubr.bf16.mxu0 0
          %1151 = vmatmul.mubr.bf16.gmra.mrb[0].mxu0 %v657
          %v1152 = vpop.f32.mrb[0].mxu0
          %v1153 = vadd.f32 %v1008, %v1152
          %v1154 = vpop.f32.mrb[0].mxu0
          %v1155 = vpop.f32.mrb[0].mxu0
          %v1156 = vadd.f32 %v1011, %v1155
          %v1157 = vpop.f32.mrb[0].mxu0
          %1158 = vmatprep.mubr.bf16.mxu0 0
          %1159 = vmatmul.mubr.bf16.gmra.mrb[0].mxu0 %v658
          %v1160 = vpop.f32.mrb[0].mxu0
          %v1161 = vadd.f32 %v1016, %v1160
          %v1162 = vpop.f32.mrb[0].mxu0
          %v1163 = vpop.f32.mrb[0].mxu0
          %v1164 = vadd.f32 %v1019, %v1163
          %v1165 = vpop.f32.mrb[0].mxu0
          %1166 = vmatprep.mubr.bf16.mxu0 0
          %1167 = vmatmul.mubr.bf16.gmra.mrb[0].mxu0 %v659
          %v1168 = vpop.f32.mrb[0].mxu0
          %v1169 = vadd.f32 %v1024, %v1168
          %v1170 = vpop.f32.mrb[0].mxu0
          %v1171 = vpop.f32.mrb[0].mxu0
          %v1172 = vadd.f32 %v1027, %v1171
          %v1173 = vpop.f32.mrb[0].mxu0
          %1174 = vdwg.mxu0
          %v1176 = vlaneseq
          %v1177 = vshrl.u32 %v1176, 7
          %v1178 = vsub.s32 0, %v1177
          %v1179 = vrot.slane %v555, %v1178
          %v1181 = vadd.f32 %v1113, %v1179
          %v1182 = vadd.f32 %v1116, %v1179
          %v1183 = vadd.f32 %v1121, %v1179
          %v1184 = vadd.f32 %v1124, %v1179
          %v1185 = vadd.f32 %v1129, %v1179
          %v1186 = vadd.f32 %v1132, %v1179
          %v1187 = vadd.f32 %v1137, %v1179
          %v1188 = vadd.f32 %v1140, %v1179
          %v1189 = vadd.f32 %v1145, %v1179
          %v1190 = vadd.f32 %v1148, %v1179
          %v1191 = vadd.f32 %v1153, %v1179
          %v1192 = vadd.f32 %v1156, %v1179
          %v1193 = vadd.f32 %v1161, %v1179
          %v1194 = vadd.f32 %v1164, %v1179
          %v1195 = vadd.f32 %v1169, %v1179
          %v1196 = vadd.f32 %v1172, %v1179
          %v1197 = vtanh.pop %v1181
          %v1198 = vtanh.pop %v1182
          %v1199 = vtanh.pop %v1183
          %v1200 = vtanh.pop %v1184
          %v1201 = vtanh.pop %v1185
          %v1202 = vtanh.pop %v1186
          %v1203 = vtanh.pop %v1187
          %v1204 = vtanh.pop %v1188
          %v1205 = vtanh.pop %v1189
          %v1206 = vtanh.pop %v1190
          %v1207 = vtanh.pop %v1191
          %v1208 = vtanh.pop %v1192
          %v1209 = vtanh.pop %v1193
          %v1210 = vtanh.pop %v1194
          %v1211 = vtanh.pop %v1195
          %v1212 = vtanh.pop %v1196
          %v1213 = vpack.c.bf16 %v1198, %v1197
          %v1214 = vpack.c.bf16 %v1200, %v1199
          %v1215 = vpack.c.bf16 %v1202, %v1201
          %v1216 = vpack.c.bf16 %v1204, %v1203
          %v1217 = vpack.c.bf16 %v1206, %v1205
          %v1218 = vpack.c.bf16 %v1208, %v1207
          %v1219 = vpack.c.bf16 %v1210, %v1209
          %v1220 = vpack.c.bf16 %v1212, %v1211
          %1221 = vst [vmem:[#allocation2] sm:$0xff] %v1213
          %1222 = vst [vmem:[#allocation2 + $0x8] sm:$0xff] %v1214
          %1223 = vst [vmem:[#allocation2 + $0x10] sm:$0xff] %v1215
          %1224 = vst [vmem:[#allocation2 + $0x18] sm:$0xff] %v1216
          %1225 = vst [vmem:[#allocation2 + $0x20] sm:$0xff] %v1217
          %1226 = vst [vmem:[#allocation2 + $0x28] sm:$0xff] %v1218
          %1227 = vst [vmem:[#allocation2 + $0x30] sm:$0xff] %v1219
          %1228 = vst [vmem:[#allocation2 + $0x38] sm:$0xff] %v1220
        $region84: #{graph_cnn_forward.1} parent=79 // pred_fallthru
          _
        %p1229 = scmp.gt.s32.totalorder %s27, 0
        // Predicated region
        $region85: #{graph_cnn_forward.1} parent=79 // pred_check
          %p1230 = pneg %p1229
        $region86: #{graph_cnn_forward.1} parent=79 // pred_check_branch
          %1232 = sbr.rel (%p1230) target = $region88
        $region87: #{graph_cnn_forward.1} parent=79 // pred_region
          %v1233 = vld [vmem:[#allocation2] sm:$0xff]
          %v1234 = vld [vmem:[#allocation2 + $0x8] sm:$0xff]
          %v1235 = vld [vmem:[#allocation2 + $0x10] sm:$0xff]
          %v1236 = vld [vmem:[#allocation2 + $0x18] sm:$0xff]
          %v1237 = vld [vmem:[#allocation2 + $0x20] sm:$0xff]
          %v1238 = vld [vmem:[#allocation2 + $0x28] sm:$0xff]
          %v1239 = vld [vmem:[#allocation2 + $0x30] sm:$0xff]
          %v1240 = vld [vmem:[#allocation2 + $0x38] sm:$0xff]
          %v1241 = vld [vmem:[%s498] sm:$0xf]
          %v1242 = vld [vmem:[%s498 + $0x4] sm:$0xf]
          %v1243 = vld [vmem:[%s498 + $0x8] sm:$0xf]
          %v1244 = vld [vmem:[%s498 + $0xc] sm:$0xf]
          %v1245 = vld [vmem:[%s498 + $0x10] sm:$0xf]
          %v1246 = vld [vmem:[%s498 + $0x14] sm:$0xf]
          %v1247 = vld [vmem:[%s498 + $0x18] sm:$0xf]
          %v1248 = vld [vmem:[%s498 + $0x1c] sm:$0xf]
          %v1249 = vld [vmem:[%s498 + $0x20] sm:$0xf]
          %v1250 = vld [vmem:[%s498 + $0x24] sm:$0xf]
          %v1251 = vld [vmem:[%s498 + $0x28] sm:$0xf]
          %v1252 = vld [vmem:[%s498 + $0x2c] sm:$0xf]
          %v1253 = vld [vmem:[%s498 + $0x30] sm:$0xf]
          %v1254 = vld [vmem:[%s498 + $0x34] sm:$0xf]
          %v1255 = vld [vmem:[%s498 + $0x38] sm:$0xf]
          %v1256 = vld [vmem:[%s498 + $0x3c] sm:$0xf]
          %v1257 = vld [vmem:[%s498 + $0x40] sm:$0xf]
          %v1258 = vld [vmem:[%s498 + $0x44] sm:$0xf]
          %v1259 = vld [vmem:[%s498 + $0x48] sm:$0xf]
          %v1260 = vld [vmem:[%s498 + $0x4c] sm:$0xf]
          %v1261 = vld [vmem:[%s498 + $0x50] sm:$0xf]
          %v1262 = vld [vmem:[%s498 + $0x54] sm:$0xf]
          %v1263 = vld [vmem:[%s498 + $0x58] sm:$0xf]
          %v1264 = vld [vmem:[%s498 + $0x5c] sm:$0xf]
          %v1265 = vld [vmem:[%s498 + $0x60] sm:$0xf]
          %v1266 = vld [vmem:[%s498 + $0x64] sm:$0xf]
          %v1267 = vld [vmem:[%s498 + $0x68] sm:$0xf]
          %v1268 = vld [vmem:[%s498 + $0x6c] sm:$0xf]
          %v1269 = vld [vmem:[%s498 + $0x70] sm:$0xf]
          %v1270 = vld [vmem:[%s498 + $0x74] sm:$0xf]
          %v1271 = vld [vmem:[%s498 + $0x78] sm:$0xf]
          %v1272 = vld [vmem:[%s498 + $0x7c] sm:$0xf]
          %s1273 = scalar_lea.vmem %s5, %s27
          %v1274 = vld [vmem:[%s1273] sm:$0x1]
          %v1275 = vld [vmem:[%s0] sm:$0xf]
          %v1276 = vld [vmem:[%s0 + $0x4] sm:$0xf]
          %v1277 = vld [vmem:[%s0 + $0x8] sm:$0xf]
          %v1278 = vld [vmem:[%s0 + $0xc] sm:$0xf]
          %v1279 = vld [vmem:[%s0 + $0x10] sm:$0xf]
          %v1280 = vld [vmem:[%s0 + $0x14] sm:$0xf]
          %v1281 = vld [vmem:[%s0 + $0x18] sm:$0xf]
          %v1282 = vld [vmem:[%s0 + $0x1c] sm:$0xf]
          %v1283 = vld [vmem:[%s0 + $0x20] sm:$0xf]
          %v1284 = vld [vmem:[%s0 + $0x24] sm:$0xf]
          %v1285 = vld [vmem:[%s0 + $0x28] sm:$0xf]
          %v1286 = vld [vmem:[%s0 + $0x2c] sm:$0xf]
          %v1287 = vld [vmem:[%s0 + $0x30] sm:$0xf]
          %v1288 = vld [vmem:[%s0 + $0x34] sm:$0xf]
          %v1289 = vld [vmem:[%s0 + $0x38] sm:$0xf]
          %v1290 = vld [vmem:[%s0 + $0x3c] sm:$0xf]
          %v1307 = vunpack.c.l.b16 %v1275
          %v1308 = vunpack.c.l.b16 %v1276
          %v1309 = vunpack.c.l.b16 %v1277
          %v1310 = vunpack.c.l.b16 %v1278
          %v1311 = vunpack.c.l.b16 %v1279
          %v1312 = vunpack.c.l.b16 %v1280
          %v1313 = vunpack.c.l.b16 %v1281
          %v1314 = vunpack.c.l.b16 %v1282
          %v1315 = vunpack.c.l.b16 %v1283
          %v1316 = vunpack.c.l.b16 %v1284
          %v1317 = vunpack.c.l.b16 %v1285
          %v1318 = vunpack.c.l.b16 %v1286
          %v1319 = vunpack.c.l.b16 %v1287
          %v1320 = vunpack.c.l.b16 %v1288
          %v1321 = vunpack.c.l.b16 %v1289
          %v1322 = vunpack.c.l.b16 %v1290
          %v1323 = vpack.c.b16 %v1308, %v1307
          %v1324 = vpack.c.b16 %v1310, %v1309
          %v1325 = vpack.c.b16 %v1312, %v1311
          %v1326 = vpack.c.b16 %v1314, %v1313
          %v1327 = vpack.c.b16 %v1316, %v1315
          %v1328 = vpack.c.b16 %v1318, %v1317
          %v1329 = vpack.c.b16 %v1320, %v1319
          %v1330 = vpack.c.b16 %v1322, %v1321
          %1339 = vmatprep.subr.bf16.mxu0 0
          %1340 = vmatpush1.bf16.msra.mxu0 %v1233
          %1341 = vmatprep.subr.bf16.mxu0 0
          %1342 = vmatpush1.bf16.msra.mxu0 %v1234
          %1343 = vmatprep.subr.bf16.mxu0 0
          %1344 = vmatpush1.bf16.msra.mxu0 %v1235
          %1345 = vmatprep.subr.bf16.mxu0 0
          %1346 = vmatpush1.bf16.msra.mxu0 %v1236
          %1347 = vmatprep.subr.bf16.mxu0 0
          %1348 = vmatpush1.bf16.msra.mxu0 %v1237
          %1349 = vmatprep.subr.bf16.mxu0 0
          %1350 = vmatpush1.bf16.msra.mxu0 %v1238
          %1351 = vmatprep.subr.bf16.mxu0 0
          %1352 = vmatpush1.bf16.msra.mxu0 %v1239
          %1353 = vmatprep.subr.bf16.mxu0 0
          %1354 = vmatpush1.bf16.msra.mxu0 %v1240
          %1355 = vmatprep.subr.bf16.mxu0 0
          %1356 = vmatpush1.bf16.msra.mxu0 0
          %1357 = vmatprep.subr.bf16.mxu0 0
          %1358 = vmatpush1.bf16.msra.mxu0 0
          %1359 = vmatprep.subr.bf16.mxu0 0
          %1360 = vmatpush1.bf16.msra.mxu0 0
          %1361 = vmatprep.subr.bf16.mxu0 0
          %1362 = vmatpush1.bf16.msra.mxu0 0
          %1363 = vmatprep.subr.bf16.mxu0 0
          %1364 = vmatpush1.bf16.msra.mxu0 0
          %1365 = vmatprep.subr.bf16.mxu0 0
          %1366 = vmatpush1.bf16.msra.mxu0 0
          %1367 = vmatprep.subr.bf16.mxu0 0
          %1368 = vmatpush1.bf16.msra.mxu0 0
          %1369 = vmatprep.subr.bf16.mxu0 0
          %1370 = vmatpush1.bf16.msra.mxu0 0
          %1371 = vmatprep.mubr.bf16.mxu0 0
          %1372 = vmatmul.mubr.bf16.gmra.mrb[0].mxu0 %v1323
          %v1373 = vpop.f32.mrb[0].mxu0
          %v1374 = vadd.f32 0.0, %v1373
          %v1375 = vpop.f32.mrb[0].mxu0
          %v1376 = vpop.f32.mrb[0].mxu0
          %v1377 = vadd.f32 0.0, %v1376
          %v1378 = vpop.f32.mrb[0].mxu0
          %1379 = vmatprep.mubr.bf16.mxu0 0
          %1380 = vmatmul.mubr.bf16.gmra.mrb[0].mxu0 %v1324
          %v1381 = vpop.f32.mrb[0].mxu0
          %v1382 = vadd.f32 0.0, %v1381
          %v1383 = vpop.f32.mrb[0].mxu0
          %v1384 = vpop.f32.mrb[0].mxu0
          %v1385 = vadd.f32 0.0, %v1384
          %v1386 = vpop.f32.mrb[0].mxu0
          %1387 = vmatprep.mubr.bf16.mxu0 0
          %1388 = vmatmul.mubr.bf16.gmra.mrb[0].mxu0 %v1325
          %v1389 = vpop.f32.mrb[0].mxu0
          %v1390 = vadd.f32 0.0, %v1389
          %v1391 = vpop.f32.mrb[0].mxu0
          %v1392 = vpop.f32.mrb[0].mxu0
          %v1393 = vadd.f32 0.0, %v1392
          %v1394 = vpop.f32.mrb[0].mxu0
          %1395 = vmatprep.mubr.bf16.mxu0 0
          %1396 = vmatmul.mubr.bf16.gmra.mrb[0].mxu0 %v1326
          %v1397 = vpop.f32.mrb[0].mxu0
          %v1398 = vadd.f32 0.0, %v1397
          %v1399 = vpop.f32.mrb[0].mxu0
          %v1400 = vpop.f32.mrb[0].mxu0
          %v1401 = vadd.f32 0.0, %v1400
          %v1402 = vpop.f32.mrb[0].mxu0
          %1403 = vmatprep.mubr.bf16.mxu0 0
          %1404 = vmatmul.mubr.bf16.gmra.mrb[0].mxu0 %v1327
          %v1405 = vpop.f32.mrb[0].mxu0
          %v1406 = vadd.f32 0.0, %v1405
          %v1407 = vpop.f32.mrb[0].mxu0
          %v1408 = vpop.f32.mrb[0].mxu0
          %v1409 = vadd.f32 0.0, %v1408
          %v1410 = vpop.f32.mrb[0].mxu0
          %1411 = vmatprep.mubr.bf16.mxu0 0
          %1412 = vmatmul.mubr.bf16.gmra.mrb[0].mxu0 %v1328
          %v1413 = vpop.f32.mrb[0].mxu0
          %v1414 = vadd.f32 0.0, %v1413
          %v1415 = vpop.f32.mrb[0].mxu0
          %v1416 = vpop.f32.mrb[0].mxu0
          %v1417 = vadd.f32 0.0, %v1416
          %v1418 = vpop.f32.mrb[0].mxu0
          %1419 = vmatprep.mubr.bf16.mxu0 0
          %1420 = vmatmul.mubr.bf16.gmra.mrb[0].mxu0 %v1329
          %v1421 = vpop.f32.mrb[0].mxu0
          %v1422 = vadd.f32 0.0, %v1421
          %v1423 = vpop.f32.mrb[0].mxu0
          %v1424 = vpop.f32.mrb[0].mxu0
          %v1425 = vadd.f32 0.0, %v1424
          %v1426 = vpop.f32.mrb[0].mxu0
          %1427 = vmatprep.mubr.bf16.mxu0 0
          %1428 = vmatmul.mubr.bf16.gmra.mrb[0].mxu0 %v1330
          %v1429 = vpop.f32.mrb[0].mxu0
          %v1430 = vadd.f32 0.0, %v1429
          %v1431 = vpop.f32.mrb[0].mxu0
          %v1432 = vpop.f32.mrb[0].mxu0
          %v1433 = vadd.f32 0.0, %v1432
          %v1434 = vpop.f32.mrb[0].mxu0
          %1435 = vdwg.mxu0
          %v1436 = vld [vmem:[%s1] sm:$0xff]
          %v1437 = vld [vmem:[%s1 + $0x8] sm:$0xff]
          %v1438 = vld [vmem:[%s1 + $0x10] sm:$0xff]
          %v1439 = vld [vmem:[%s1 + $0x18] sm:$0xff]
          %v1440 = vld [vmem:[%s1 + $0x20] sm:$0xff]
          %v1441 = vld [vmem:[%s1 + $0x28] sm:$0xff]
          %v1442 = vld [vmem:[%s1 + $0x30] sm:$0xff]
          %v1443 = vld [vmem:[%s1 + $0x38] sm:$0xff]
          %v1444 = vld [vmem:[%s1 + $0x40] sm:$0xff]
          %v1445 = vld [vmem:[%s1 + $0x48] sm:$0xff]
          %v1446 = vld [vmem:[%s1 + $0x50] sm:$0xff]
          %v1447 = vld [vmem:[%s1 + $0x58] sm:$0xff]
          %v1448 = vld [vmem:[%s1 + $0x60] sm:$0xff]
          %v1449 = vld [vmem:[%s1 + $0x68] sm:$0xff]
          %v1450 = vld [vmem:[%s1 + $0x70] sm:$0xff]
          %v1451 = vld [vmem:[%s1 + $0x78] sm:$0xff]
          %1453 = vset.pattern.permute.xlu0 0
          %1454 = vperm.xlu0 %1453, %v1436
          %v1455 = vpop.permute.xlu0 %1454
          %1458 = vset.pattern.permute.xlu0 0
          %1459 = vperm.xlu0 %1458, %v1437
          %v1460 = vpop.permute.xlu0 %1459
          %1463 = vset.pattern.permute.xlu0 0
          %1464 = vperm.xlu0 %1463, %v1438
          %v1465 = vpop.permute.xlu0 %1464
          %1468 = vset.pattern.permute.xlu0 0
          %1469 = vperm.xlu0 %1468, %v1439
          %v1470 = vpop.permute.xlu0 %1469
          %1473 = vset.pattern.permute.xlu0 0
          %1474 = vperm.xlu0 %1473, %v1440
          %v1475 = vpop.permute.xlu0 %1474
          %1478 = vset.pattern.permute.xlu0 0
          %1479 = vperm.xlu0 %1478, %v1441
          %v1480 = vpop.permute.xlu0 %1479
          %1483 = vset.pattern.permute.xlu0 0
          %1484 = vperm.xlu0 %1483, %v1442
          %v1485 = vpop.permute.xlu0 %1484
          %1488 = vset.pattern.permute.xlu0 0
          %1489 = vperm.xlu0 %1488, %v1443
          %v1490 = vpop.permute.xlu0 %1489
          %1493 = vset.pattern.permute.xlu0 0
          %1494 = vperm.xlu0 %1493, %v1444
          %v1495 = vpop.permute.xlu0 %1494
          %1498 = vset.pattern.permute.xlu0 0
          %1499 = vperm.xlu0 %1498, %v1445
          %v1500 = vpop.permute.xlu0 %1499
          %1503 = vset.pattern.permute.xlu0 0
          %1504 = vperm.xlu0 %1503, %v1446
          %v1505 = vpop.permute.xlu0 %1504
          %1508 = vset.pattern.permute.xlu0 0
          %1509 = vperm.xlu0 %1508, %v1447
          %v1510 = vpop.permute.xlu0 %1509
          %1513 = vset.pattern.permute.xlu0 0
          %1514 = vperm.xlu0 %1513, %v1448
          %v1515 = vpop.permute.xlu0 %1514
          %1518 = vset.pattern.permute.xlu0 0
          %1519 = vperm.xlu0 %1518, %v1449
          %v1520 = vpop.permute.xlu0 %1519
          %1523 = vset.pattern.permute.xlu0 0
          %1524 = vperm.xlu0 %1523, %v1450
          %v1525 = vpop.permute.xlu0 %1524
          %1528 = vset.pattern.permute.xlu0 0
          %1529 = vperm.xlu0 %1528, %v1451
          %v1530 = vpop.permute.xlu0 %1529
          %v1532 = vmul.f32 %v1374, %v1455
          %v1533 = vmul.f32 %v1377, %v1460
          %v1534 = vmul.f32 %v1382, %v1465
          %v1535 = vmul.f32 %v1385, %v1470
          %v1536 = vmul.f32 %v1390, %v1475
          %v1537 = vmul.f32 %v1393, %v1480
          %v1538 = vmul.f32 %v1398, %v1485
          %v1539 = vmul.f32 %v1401, %v1490
          %v1540 = vmul.f32 %v1406, %v1495
          %v1541 = vmul.f32 %v1409, %v1500
          %v1542 = vmul.f32 %v1414, %v1505
          %v1543 = vmul.f32 %v1417, %v1510
          %v1544 = vmul.f32 %v1422, %v1515
          %v1545 = vmul.f32 %v1425, %v1520
          %v1546 = vmul.f32 %v1430, %v1525
          %v1547 = vmul.f32 %v1433, %v1530
          %v1548 = vpack.c.bf16 %v1533, %v1532
          %v1549 = vpack.c.bf16 %v1535, %v1534
          %v1550 = vpack.c.bf16 %v1537, %v1536
          %v1551 = vpack.c.bf16 %v1539, %v1538
          %v1552 = vpack.c.bf16 %v1541, %v1540
          %v1553 = vpack.c.bf16 %v1543, %v1542
          %v1554 = vpack.c.bf16 %v1545, %v1544
          %v1555 = vpack.c.bf16 %v1547, %v1546
          %v1572 = vunpack.c.l.b16 %v1241
          %v1573 = vunpack.c.l.b16 %v1242
          %v1574 = vunpack.c.l.b16 %v1243
          %v1575 = vunpack.c.l.b16 %v1244
          %v1576 = vunpack.c.l.b16 %v1245
          %v1577 = vunpack.c.l.b16 %v1246
          %v1578 = vunpack.c.l.b16 %v1247
          %v1579 = vunpack.c.l.b16 %v1248
          %v1580 = vunpack.c.l.b16 %v1249
          %v1581 = vunpack.c.l.b16 %v1250
          %v1582 = vunpack.c.l.b16 %v1251
          %v1583 = vunpack.c.l.b16 %v1252
          %v1584 = vunpack.c.l.b16 %v1253
          %v1585 = vunpack.c.l.b16 %v1254
          %v1586 = vunpack.c.l.b16 %v1255
          %v1587 = vunpack.c.l.b16 %v1256
          %v1588 = vpack.c.b16 %v1573, %v1572
          %v1589 = vpack.c.b16 %v1575, %v1574
          %v1590 = vpack.c.b16 %v1577, %v1576
          %v1591 = vpack.c.b16 %v1579, %v1578
          %v1592 = vpack.c.b16 %v1581, %v1580
          %v1593 = vpack.c.b16 %v1583, %v1582
          %v1594 = vpack.c.b16 %v1585, %v1584
          %v1595 = vpack.c.b16 %v1587, %v1586
          %1604 = vmatprep.subr.bf16.mxu0 0
          %1605 = vmatpush1.bf16.msra.mxu0 %v1588
          %1606 = vmatprep.subr.bf16.mxu0 0
          %1607 = vmatpush1.bf16.msra.mxu0 %v1589
          %1608 = vmatprep.subr.bf16.mxu0 0
          %1609 = vmatpush1.bf16.msra.mxu0 %v1590
          %1610 = vmatprep.subr.bf16.mxu0 0
          %1611 = vmatpush1.bf16.msra.mxu0 %v1591
          %1612 = vmatprep.subr.bf16.mxu0 0
          %1613 = vmatpush1.bf16.msra.mxu0 %v1592
          %1614 = vmatprep.subr.bf16.mxu0 0
          %1615 = vmatpush1.bf16.msra.mxu0 %v1593
          %1616 = vmatprep.subr.bf16.mxu0 0
          %1617 = vmatpush1.bf16.msra.mxu0 %v1594
          %1618 = vmatprep.subr.bf16.mxu0 0
          %1619 = vmatpush1.bf16.msra.mxu0 %v1595
          %1620 = vmatprep.subr.bf16.mxu0 0
          %1621 = vmatpush1.bf16.msra.mxu0 0
          %1622 = vmatprep.subr.bf16.mxu0 0
          %1623 = vmatpush1.bf16.msra.mxu0 0
          %1624 = vmatprep.subr.bf16.mxu0 0
          %1625 = vmatpush1.bf16.msra.mxu0 0
          %1626 = vmatprep.subr.bf16.mxu0 0
          %1627 = vmatpush1.bf16.msra.mxu0 0
          %1628 = vmatprep.subr.bf16.mxu0 0
          %1629 = vmatpush1.bf16.msra.mxu0 0
          %1630 = vmatprep.subr.bf16.mxu0 0
          %1631 = vmatpush1.bf16.msra.mxu0 0
          %1632 = vmatprep.subr.bf16.mxu0 0
          %1633 = vmatpush1.bf16.msra.mxu0 0
          %1634 = vmatprep.subr.bf16.mxu0 0
          %1635 = vmatpush1.bf16.msra.mxu0 0
          %1636 = vmatprep.mubr.bf16.mxu0 0
          %1637 = vmatmul.mubr.bf16.gmra.mrb[0].mxu0 %v1548
          %v1638 = vpop.f32.mrb[0].mxu0
          %v1639 = vadd.f32 0.0, %v1638
          %v1640 = vpop.f32.mrb[0].mxu0
          %v1641 = vpop.f32.mrb[0].mxu0
          %v1642 = vadd.f32 0.0, %v1641
          %v1643 = vpop.f32.mrb[0].mxu0
          %1644 = vmatprep.mubr.bf16.mxu0 0
          %1645 = vmatmul.mubr.bf16.gmra.mrb[0].mxu0 %v1549
          %v1646 = vpop.f32.mrb[0].mxu0
          %v1647 = vadd.f32 0.0, %v1646
          %v1648 = vpop.f32.mrb[0].mxu0
          %v1649 = vpop.f32.mrb[0].mxu0
          %v1650 = vadd.f32 0.0, %v1649
          %v1651 = vpop.f32.mrb[0].mxu0
          %1652 = vmatprep.mubr.bf16.mxu0 0
          %1653 = vmatmul.mubr.bf16.gmra.mrb[0].mxu0 %v1550
          %v1654 = vpop.f32.mrb[0].mxu0
          %v1655 = vadd.f32 0.0, %v1654
          %v1656 = vpop.f32.mrb[0].mxu0
          %v1657 = vpop.f32.mrb[0].mxu0
          %v1658 = vadd.f32 0.0, %v1657
          %v1659 = vpop.f32.mrb[0].mxu0
          %1660 = vmatprep.mubr.bf16.mxu0 0
          %1661 = vmatmul.mubr.bf16.gmra.mrb[0].mxu0 %v1551
          %v1662 = vpop.f32.mrb[0].mxu0
          %v1663 = vadd.f32 0.0, %v1662
          %v1664 = vpop.f32.mrb[0].mxu0
          %v1665 = vpop.f32.mrb[0].mxu0
          %v1666 = vadd.f32 0.0, %v1665
          %v1667 = vpop.f32.mrb[0].mxu0
          %1668 = vmatprep.mubr.bf16.mxu0 0
          %1669 = vmatmul.mubr.bf16.gmra.mrb[0].mxu0 %v1552
          %v1670 = vpop.f32.mrb[0].mxu0
          %v1671 = vadd.f32 0.0, %v1670
          %v1672 = vpop.f32.mrb[0].mxu0
          %v1673 = vpop.f32.mrb[0].mxu0
          %v1674 = vadd.f32 0.0, %v1673
          %v1675 = vpop.f32.mrb[0].mxu0
          %1676 = vmatprep.mubr.bf16.mxu0 0
          %1677 = vmatmul.mubr.bf16.gmra.mrb[0].mxu0 %v1553
          %v1678 = vpop.f32.mrb[0].mxu0
          %v1679 = vadd.f32 0.0, %v1678
          %v1680 = vpop.f32.mrb[0].mxu0
          %v1681 = vpop.f32.mrb[0].mxu0
          %v1682 = vadd.f32 0.0, %v1681
          %v1683 = vpop.f32.mrb[0].mxu0
          %1684 = vmatprep.mubr.bf16.mxu0 0
          %1685 = vmatmul.mubr.bf16.gmra.mrb[0].mxu0 %v1554
          %v1686 = vpop.f32.mrb[0].mxu0
          %v1687 = vadd.f32 0.0, %v1686
          %v1688 = vpop.f32.mrb[0].mxu0
          %v1689 = vpop.f32.mrb[0].mxu0
          %v1690 = vadd.f32 0.0, %v1689
          %v1691 = vpop.f32.mrb[0].mxu0
          %1692 = vmatprep.mubr.bf16.mxu0 0
          %1693 = vmatmul.mubr.bf16.gmra.mrb[0].mxu0 %v1555
          %v1694 = vpop.f32.mrb[0].mxu0
          %v1695 = vadd.f32 0.0, %v1694
          %v1696 = vpop.f32.mrb[0].mxu0
          %v1697 = vpop.f32.mrb[0].mxu0
          %v1698 = vadd.f32 0.0, %v1697
          %v1699 = vpop.f32.mrb[0].mxu0
          %1700 = vdwg.mxu0
          %v1717 = vunpack.c.l.b16 %v1257
          %v1718 = vunpack.c.l.b16 %v1258
          %v1719 = vunpack.c.l.b16 %v1259
          %v1720 = vunpack.c.l.b16 %v1260
          %v1721 = vunpack.c.l.b16 %v1261
          %v1722 = vunpack.c.l.b16 %v1262
          %v1723 = vunpack.c.l.b16 %v1263
          %v1724 = vunpack.c.l.b16 %v1264
          %v1725 = vunpack.c.l.b16 %v1265
          %v1726 = vunpack.c.l.b16 %v1266
          %v1727 = vunpack.c.l.b16 %v1267
          %v1728 = vunpack.c.l.b16 %v1268
          %v1729 = vunpack.c.l.b16 %v1269
          %v1730 = vunpack.c.l.b16 %v1270
          %v1731 = vunpack.c.l.b16 %v1271
          %v1732 = vunpack.c.l.b16 %v1272
          %v1733 = vpack.c.b16 %v1718, %v1717
          %v1734 = vpack.c.b16 %v1720, %v1719
          %v1735 = vpack.c.b16 %v1722, %v1721
          %v1736 = vpack.c.b16 %v1724, %v1723
          %v1737 = vpack.c.b16 %v1726, %v1725
          %v1738 = vpack.c.b16 %v1728, %v1727
          %v1739 = vpack.c.b16 %v1730, %v1729
          %v1740 = vpack.c.b16 %v1732, %v1731
          %1749 = vmatprep.subr.bf16.mxu0 0
          %1750 = vmatpush1.bf16.msra.mxu0 %v1733
          %1751 = vmatprep.subr.bf16.mxu0 0
          %1752 = vmatpush1.bf16.msra.mxu0 %v1734
          %1753 = vmatprep.subr.bf16.mxu0 0
          %1754 = vmatpush1.bf16.msra.mxu0 %v1735
          %1755 = vmatprep.subr.bf16.mxu0 0
          %1756 = vmatpush1.bf16.msra.mxu0 %v1736
          %1757 = vmatprep.subr.bf16.mxu0 0
          %1758 = vmatpush1.bf16.msra.mxu0 %v1737
          %1759 = vmatprep.subr.bf16.mxu0 0
          %1760 = vmatpush1.bf16.msra.mxu0 %v1738
          %1761 = vmatprep.subr.bf16.mxu0 0
          %1762 = vmatpush1.bf16.msra.mxu0 %v1739
          %1763 = vmatprep.subr.bf16.mxu0 0
          %1764 = vmatpush1.bf16.msra.mxu0 %v1740
          %1765 = vmatprep.subr.bf16.mxu0 0
          %1766 = vmatpush1.bf16.msra.mxu0 0
          %1767 = vmatprep.subr.bf16.mxu0 0
          %1768 = vmatpush1.bf16.msra.mxu0 0
          %1769 = vmatprep.subr.bf16.mxu0 0
          %1770 = vmatpush1.bf16.msra.mxu0 0
          %1771 = vmatprep.subr.bf16.mxu0 0
          %1772 = vmatpush1.bf16.msra.mxu0 0
          %1773 = vmatprep.subr.bf16.mxu0 0
          %1774 = vmatpush1.bf16.msra.mxu0 0
          %1775 = vmatprep.subr.bf16.mxu0 0
          %1776 = vmatpush1.bf16.msra.mxu0 0
          %1777 = vmatprep.subr.bf16.mxu0 0
          %1778 = vmatpush1.bf16.msra.mxu0 0
          %1779 = vmatprep.subr.bf16.mxu0 0
          %1780 = vmatpush1.bf16.msra.mxu0 0
          %1781 = vmatprep.mubr.bf16.mxu0 0
          %1782 = vmatmul.mubr.bf16.gmra.mrb[0].mxu0 %v1233
          %v1783 = vpop.f32.mrb[0].mxu0
          %v1784 = vadd.f32 %v1639, %v1783
          %v1785 = vpop.f32.mrb[0].mxu0
          %v1786 = vpop.f32.mrb[0].mxu0
          %v1787 = vadd.f32 %v1642, %v1786
          %v1788 = vpop.f32.mrb[0].mxu0
          %1789 = vmatprep.mubr.bf16.mxu0 0
          %1790 = vmatmul.mubr.bf16.gmra.mrb[0].mxu0 %v1234
          %v1791 = vpop.f32.mrb[0].mxu0
          %v1792 = vadd.f32 %v1647, %v1791
          %v1793 = vpop.f32.mrb[0].mxu0
          %v1794 = vpop.f32.mrb[0].mxu0
          %v1795 = vadd.f32 %v1650, %v1794
          %v1796 = vpop.f32.mrb[0].mxu0
          %1797 = vmatprep.mubr.bf16.mxu0 0
          %1798 = vmatmul.mubr.bf16.gmra.mrb[0].mxu0 %v1235
          %v1799 = vpop.f32.mrb[0].mxu0
          %v1800 = vadd.f32 %v1655, %v1799
          %v1801 = vpop.f32.mrb[0].mxu0
          %v1802 = vpop.f32.mrb[0].mxu0
          %v1803 = vadd.f32 %v1658, %v1802
          %v1804 = vpop.f32.mrb[0].mxu0
          %1805 = vmatprep.mubr.bf16.mxu0 0
          %1806 = vmatmul.mubr.bf16.gmra.mrb[0].mxu0 %v1236
          %v1807 = vpop.f32.mrb[0].mxu0
          %v1808 = vadd.f32 %v1663, %v1807
          %v1809 = vpop.f32.mrb[0].mxu0
          %v1810 = vpop.f32.mrb[0].mxu0
          %v1811 = vadd.f32 %v1666, %v1810
          %v1812 = vpop.f32.mrb[0].mxu0
          %1813 = vmatprep.mubr.bf16.mxu0 0
          %1814 = vmatmul.mubr.bf16.gmra.mrb[0].mxu0 %v1237
          %v1815 = vpop.f32.mrb[0].mxu0
          %v1816 = vadd.f32 %v1671, %v1815
          %v1817 = vpop.f32.mrb[0].mxu0
          %v1818 = vpop.f32.mrb[0].mxu0
          %v1819 = vadd.f32 %v1674, %v1818
          %v1820 = vpop.f32.mrb[0].mxu0
          %1821 = vmatprep.mubr.bf16.mxu0 0
          %1822 = vmatmul.mubr.bf16.gmra.mrb[0].mxu0 %v1238
          %v1823 = vpop.f32.mrb[0].mxu0
          %v1824 = vadd.f32 %v1679, %v1823
          %v1825 = vpop.f32.mrb[0].mxu0
          %v1826 = vpop.f32.mrb[0].mxu0
          %v1827 = vadd.f32 %v1682, %v1826
          %v1828 = vpop.f32.mrb[0].mxu0
          %1829 = vmatprep.mubr.bf16.mxu0 0
          %1830 = vmatmul.mubr.bf16.gmra.mrb[0].mxu0 %v1239
          %v1831 = vpop.f32.mrb[0].mxu0
          %v1832 = vadd.f32 %v1687, %v1831
          %v1833 = vpop.f32.mrb[0].mxu0
          %v1834 = vpop.f32.mrb[0].mxu0
          %v1835 = vadd.f32 %v1690, %v1834
          %v1836 = vpop.f32.mrb[0].mxu0
          %1837 = vmatprep.mubr.bf16.mxu0 0
          %1838 = vmatmul.mubr.bf16.gmra.mrb[0].mxu0 %v1240
          %v1839 = vpop.f32.mrb[0].mxu0
          %v1840 = vadd.f32 %v1695, %v1839
          %v1841 = vpop.f32.mrb[0].mxu0
          %v1842 = vpop.f32.mrb[0].mxu0
          %v1843 = vadd.f32 %v1698, %v1842
          %v1844 = vpop.f32.mrb[0].mxu0
          %1845 = vdwg.mxu0
          %v1847 = vlaneseq
          %v1848 = vshrl.u32 %v1847, 7
          %v1849 = vsub.s32 0, %v1848
          %v1850 = vrot.slane %v1274, %v1849
          %v1852 = vadd.f32 %v1784, %v1850
          %v1853 = vadd.f32 %v1787, %v1850
          %v1854 = vadd.f32 %v1792, %v1850
          %v1855 = vadd.f32 %v1795, %v1850
          %v1856 = vadd.f32 %v1800, %v1850
          %v1857 = vadd.f32 %v1803, %v1850
          %v1858 = vadd.f32 %v1808, %v1850
          %v1859 = vadd.f32 %v1811, %v1850
          %v1860 = vadd.f32 %v1816, %v1850
          %v1861 = vadd.f32 %v1819, %v1850
          %v1862 = vadd.f32 %v1824, %v1850
          %v1863 = vadd.f32 %v1827, %v1850
          %v1864 = vadd.f32 %v1832, %v1850
          %v1865 = vadd.f32 %v1835, %v1850
          %v1866 = vadd.f32 %v1840, %v1850
          %v1867 = vadd.f32 %v1843, %v1850
          %v1868 = vtanh.pop %v1852
          %v1869 = vtanh.pop %v1853
          %v1870 = vtanh.pop %v1854
          %v1871 = vtanh.pop %v1855
          %v1872 = vtanh.pop %v1856
          %v1873 = vtanh.pop %v1857
          %v1874 = vtanh.pop %v1858
          %v1875 = vtanh.pop %v1859
          %v1876 = vtanh.pop %v1860
          %v1877 = vtanh.pop %v1861
          %v1878 = vtanh.pop %v1862
          %v1879 = vtanh.pop %v1863
          %v1880 = vtanh.pop %v1864
          %v1881 = vtanh.pop %v1865
          %v1882 = vtanh.pop %v1866
          %v1883 = vtanh.pop %v1867
          %v1884 = vpack.c.bf16 %v1869, %v1868
          %v1885 = vpack.c.bf16 %v1871, %v1870
          %v1886 = vpack.c.bf16 %v1873, %v1872
          %v1887 = vpack.c.bf16 %v1875, %v1874
          %v1888 = vpack.c.bf16 %v1877, %v1876
          %v1889 = vpack.c.bf16 %v1879, %v1878
          %v1890 = vpack.c.bf16 %v1881, %v1880
          %v1891 = vpack.c.bf16 %v1883, %v1882
          %1892 = vst [vmem:[#allocation2] sm:$0xff] %v1884
          %1893 = vst [vmem:[#allocation2 + $0x8] sm:$0xff] %v1885
          %1894 = vst [vmem:[#allocation2 + $0x10] sm:$0xff] %v1886
          %1895 = vst [vmem:[#allocation2 + $0x18] sm:$0xff] %v1887
          %1896 = vst [vmem:[#allocation2 + $0x20] sm:$0xff] %v1888
          %1897 = vst [vmem:[#allocation2 + $0x28] sm:$0xff] %v1889
          %1898 = vst [vmem:[#allocation2 + $0x30] sm:$0xff] %v1890
          %1899 = vst [vmem:[#allocation2 + $0x38] sm:$0xff] %v1891
        $region88: #{graph_cnn_forward.1} parent=79 // pred_fallthru
          _
        %p1900 = scmp.eq.s32.totalorder %s27, 4
        // Predicated region
        $region89: #{graph_cnn_forward.1} parent=79 // pred_check
          %p1901 = pneg %p1900
        $region90: #{graph_cnn_forward.1} parent=79 // pred_check_branch
          %1903 = sbr.rel (%p1901) target = $region92
        $region91: #{graph_cnn_forward.1} parent=79 // pred_region
          %v1904 = vld [vmem:[#allocation2] sm:$0xff]
          %v1905 = vld [vmem:[#allocation2 + $0x8] sm:$0xff]
          %v1906 = vld [vmem:[#allocation2 + $0x10] sm:$0xff]
          %v1907 = vld [vmem:[#allocation2 + $0x18] sm:$0xff]
          %v1908 = vld [vmem:[#allocation2 + $0x20] sm:$0xff]
          %v1909 = vld [vmem:[#allocation2 + $0x28] sm:$0xff]
          %v1910 = vld [vmem:[#allocation2 + $0x30] sm:$0xff]
          %v1911 = vld [vmem:[#allocation2 + $0x38] sm:$0xff]
          %v1912 = vunpack.c.l.bf16 %v1904
          %v1913 = vunpack.c.h.bf16 %v1904
          %v1914 = vunpack.c.l.bf16 %v1905
          %v1915 = vunpack.c.h.bf16 %v1905
          %v1916 = vunpack.c.l.bf16 %v1906
          %v1917 = vunpack.c.h.bf16 %v1906
          %v1918 = vunpack.c.l.bf16 %v1907
          %v1919 = vunpack.c.h.bf16 %v1907
          %v1920 = vunpack.c.l.bf16 %v1908
          %v1921 = vunpack.c.h.bf16 %v1908
          %v1922 = vunpack.c.l.bf16 %v1909
          %v1923 = vunpack.c.h.bf16 %v1909
          %v1924 = vunpack.c.l.bf16 %v1910
          %v1925 = vunpack.c.h.bf16 %v1910
          %v1926 = vunpack.c.l.bf16 %v1911
          %v1927 = vunpack.c.h.bf16 %v1911
          %v1928 = vld [vmem:[%s6] sm:$0x1]
          %1929 = vmatprep.subr.bf16.mxu0 0
          %1930 = vmatpush1.bf16.msra.mxu0 %v1904
          %1931 = vmatprep.subr.bf16.mxu0 0
          %1932 = vmatpush1.bf16.msra.mxu0 %v1905
          %1933 = vmatprep.subr.bf16.mxu0 0
          %1934 = vmatpush1.bf16.msra.mxu0 %v1906
          %1935 = vmatprep.subr.bf16.mxu0 0
          %1936 = vmatpush1.bf16.msra.mxu0 %v1907
          %1937 = vmatprep.subr.bf16.mxu0 0
          %1938 = vmatpush1.bf16.msra.mxu0 %v1908
          %1939 = vmatprep.subr.bf16.mxu0 0
          %1940 = vmatpush1.bf16.msra.mxu0 %v1909
          %1941 = vmatprep.subr.bf16.mxu0 0
          %1942 = vmatpush1.bf16.msra.mxu0 %v1910
          %1943 = vmatprep.subr.bf16.mxu0 0
          %1944 = vmatpush1.bf16.msra.mxu0 %v1911
          %1945 = vmatprep.subr.bf16.mxu0 0
          %1946 = vmatpush1.bf16.msra.mxu0 0
          %1947 = vmatprep.subr.bf16.mxu0 0
          %1948 = vmatpush1.bf16.msra.mxu0 0
          %1949 = vmatprep.subr.bf16.mxu0 0
          %1950 = vmatpush1.bf16.msra.mxu0 0
          %1951 = vmatprep.subr.bf16.mxu0 0
          %1952 = vmatpush1.bf16.msra.mxu0 0
          %1953 = vmatprep.subr.bf16.mxu0 0
          %1954 = vmatpush1.bf16.msra.mxu0 0
          %1955 = vmatprep.subr.bf16.mxu0 0
          %1956 = vmatpush1.bf16.msra.mxu0 0
          %1957 = vmatprep.subr.bf16.mxu0 0
          %1958 = vmatpush1.bf16.msra.mxu0 0
          %1959 = vmatprep.subr.bf16.mxu0 0
          %1960 = vmatpush1.bf16.msra.mxu0 0
          %1961 = vmatprep.mubr.bf16.mxu0 0
          %1962 = vmatmul.mubr.bf16.gmra.mrb[0].mxu0 %v1928
          %v1963 = vpop.f32.mrb[0].mxu0
          %v1964 = vadd.f32 0.0, %v1963
          %v1965 = vpop.f32.mrb[0].mxu0
          %v1966 = vpop.f32.mrb[0].mxu0
          %v1967 = vpop.f32.mrb[0].mxu0
          %1968 = vdwg.mxu0
          %v1969 = vld [vmem:[%s7] sm:$0x3]
          %1971 = vset.pattern.permute.xlu0 0
          %1972 = vperm.xlu0 %1971, %v1969
          %v1973 = vpop.permute.xlu0 %1972
          %v1975 = vmul.f32 %v1964, %v1973
          %v1976 = vld [vmem:[%s8] sm:$0xff]
          %v1977 = vld [vmem:[%s8 + $0x8] sm:$0xff]
          %v1978 = vld [vmem:[%s8 + $0x10] sm:$0xff]
          %v1979 = vld [vmem:[%s8 + $0x18] sm:$0xff]
          %v1980 = vld [vmem:[%s8 + $0x20] sm:$0xff]
          %v1981 = vld [vmem:[%s8 + $0x28] sm:$0xff]
          %v1982 = vld [vmem:[%s8 + $0x30] sm:$0xff]
          %v1983 = vld [vmem:[%s8 + $0x38] sm:$0xff]
          %v1984 = vld [vmem:[%s8 + $0x40] sm:$0xff]
          %v1985 = vld [vmem:[%s8 + $0x48] sm:$0xff]
          %v1986 = vld [vmem:[%s8 + $0x50] sm:$0xff]
          %v1987 = vld [vmem:[%s8 + $0x58] sm:$0xff]
          %v1988 = vld [vmem:[%s8 + $0x60] sm:$0xff]
          %v1989 = vld [vmem:[%s8 + $0x68] sm:$0xff]
          %v1990 = vld [vmem:[%s8 + $0x70] sm:$0xff]
          %v1991 = vld [vmem:[%s8 + $0x78] sm:$0xff]
          %vm1992 = vcmp.gt.f32.partialorder %v1976, 0.0
          %vm1993 = vcmp.gt.f32.partialorder %v1977, 0.0
          %vm1994 = vcmp.gt.f32.partialorder %v1978, 0.0
          %vm1995 = vcmp.gt.f32.partialorder %v1979, 0.0
          %vm1996 = vcmp.gt.f32.partialorder %v1980, 0.0
          %vm1997 = vcmp.gt.f32.partialorder %v1981, 0.0
          %vm1998 = vcmp.gt.f32.partialorder %v1982, 0.0
          %vm1999 = vcmp.gt.f32.partialorder %v1983, 0.0
          %vm2000 = vcmp.gt.f32.partialorder %v1984, 0.0
          %vm2001 = vcmp.gt.f32.partialorder %v1985, 0.0
          %vm2002 = vcmp.gt.f32.partialorder %v1986, 0.0
          %vm2003 = vcmp.gt.f32.partialorder %v1987, 0.0
          %vm2004 = vcmp.gt.f32.partialorder %v1988, 0.0
          %vm2005 = vcmp.gt.f32.partialorder %v1989, 0.0
          %vm2006 = vcmp.gt.f32.partialorder %v1990, 0.0
          %vm2007 = vcmp.gt.f32.partialorder %v1991, 0.0
          %v2008 = vsel %vm1992, 1, 0
          %v2009 = vsel %vm1993, 1, 0
          %v2010 = vsel %vm1994, 1, 0
          %v2011 = vsel %vm1995, 1, 0
          %v2012 = vsel %vm1996, 1, 0
          %v2013 = vsel %vm1997, 1, 0
          %v2014 = vsel %vm1998, 1, 0
          %v2015 = vsel %vm1999, 1, 0
          %v2016 = vsel %vm2000, 1, 0
          %v2017 = vsel %vm2001, 1, 0
          %v2018 = vsel %vm2002, 1, 0
          %v2019 = vsel %vm2003, 1, 0
          %v2020 = vsel %vm2004, 1, 0
          %v2021 = vsel %vm2005, 1, 0
          %v2022 = vsel %vm2006, 1, 0
          %v2023 = vsel %vm2007, 1, 0
          %2024 = vset.pattern.permute.xlu0 0
          %2025 = vperm.xlu0 %2024, %v2008
          %v2026 = vpop.permute.xlu0 %2025
          %2027 = vset.pattern.permute.xlu0 0
          %2028 = vperm.xlu0 %2027, %v2009
          %v2029 = vpop.permute.xlu0 %2028
          %2030 = vset.pattern.permute.xlu0 0
          %2031 = vperm.xlu0 %2030, %v2010
          %v2032 = vpop.permute.xlu0 %2031
          %2033 = vset.pattern.permute.xlu0 0
          %2034 = vperm.xlu0 %2033, %v2011
          %v2035 = vpop.permute.xlu0 %2034
          %2036 = vset.pattern.permute.xlu0 0
          %2037 = vperm.xlu0 %2036, %v2012
          %v2038 = vpop.permute.xlu0 %2037
          %2039 = vset.pattern.permute.xlu0 0
          %2040 = vperm.xlu0 %2039, %v2013
          %v2041 = vpop.permute.xlu0 %2040
          %2042 = vset.pattern.permute.xlu0 0
          %2043 = vperm.xlu0 %2042, %v2014
          %v2044 = vpop.permute.xlu0 %2043
          %2045 = vset.pattern.permute.xlu0 0
          %2046 = vperm.xlu0 %2045, %v2015
          %v2047 = vpop.permute.xlu0 %2046
          %2048 = vset.pattern.permute.xlu0 0
          %2049 = vperm.xlu0 %2048, %v2016
          %v2050 = vpop.permute.xlu0 %2049
          %2051 = vset.pattern.permute.xlu0 0
          %2052 = vperm.xlu0 %2051, %v2017
          %v2053 = vpop.permute.xlu0 %2052
          %2054 = vset.pattern.permute.xlu0 0
          %2055 = vperm.xlu0 %2054, %v2018
          %v2056 = vpop.permute.xlu0 %2055
          %2057 = vset.pattern.permute.xlu0 0
          %2058 = vperm.xlu0 %2057, %v2019
          %v2059 = vpop.permute.xlu0 %2058
          %2060 = vset.pattern.permute.xlu0 0
          %2061 = vperm.xlu0 %2060, %v2020
          %v2062 = vpop.permute.xlu0 %2061
          %2063 = vset.pattern.permute.xlu0 0
          %2064 = vperm.xlu0 %2063, %v2021
          %v2065 = vpop.permute.xlu0 %2064
          %2066 = vset.pattern.permute.xlu0 0
          %2067 = vperm.xlu0 %2066, %v2022
          %v2068 = vpop.permute.xlu0 %2067
          %2069 = vset.pattern.permute.xlu0 0
          %2070 = vperm.xlu0 %2069, %v2023
          %v2071 = vpop.permute.xlu0 %2070
          %vm2072 = vcmp.eq.s32.totalorder %v2026, 1
          %vm2073 = vcmp.eq.s32.totalorder %v2029, 1
          %vm2074 = vcmp.eq.s32.totalorder %v2032, 1
          %vm2075 = vcmp.eq.s32.totalorder %v2035, 1
          %vm2076 = vcmp.eq.s32.totalorder %v2038, 1
          %vm2077 = vcmp.eq.s32.totalorder %v2041, 1
          %vm2078 = vcmp.eq.s32.totalorder %v2044, 1
          %vm2079 = vcmp.eq.s32.totalorder %v2047, 1
          %vm2080 = vcmp.eq.s32.totalorder %v2050, 1
          %vm2081 = vcmp.eq.s32.totalorder %v2053, 1
          %vm2082 = vcmp.eq.s32.totalorder %v2056, 1
          %vm2083 = vcmp.eq.s32.totalorder %v2059, 1
          %vm2084 = vcmp.eq.s32.totalorder %v2062, 1
          %vm2085 = vcmp.eq.s32.totalorder %v2065, 1
          %vm2086 = vcmp.eq.s32.totalorder %v2068, 1
          %vm2087 = vcmp.eq.s32.totalorder %v2071, 1
          %v2088 = vsel %vm2072, %v1912, -1e+30
          %v2089 = vsel %vm2073, %v1913, -1e+30
          %v2090 = vsel %vm2074, %v1914, -1e+30
          %v2091 = vsel %vm2075, %v1915, -1e+30
          %v2092 = vsel %vm2076, %v1916, -1e+30
          %v2093 = vsel %vm2077, %v1917, -1e+30
          %v2094 = vsel %vm2078, %v1918, -1e+30
          %v2095 = vsel %vm2079, %v1919, -1e+30
          %v2096 = vsel %vm2080, %v1920, -1e+30
          %v2097 = vsel %vm2081, %v1921, -1e+30
          %v2098 = vsel %vm2082, %v1922, -1e+30
          %v2099 = vsel %vm2083, %v1923, -1e+30
          %v2100 = vsel %vm2084, %v1924, -1e+30
          %v2101 = vsel %vm2085, %v1925, -1e+30
          %v2102 = vsel %vm2086, %v1926, -1e+30
          %v2103 = vsel %vm2087, %v1927, -1e+30
          %v2104 = vmax.f32 %v2088, %v2092
          %v2105 = vmax.f32 %v2089, %v2093
          %v2106 = vmax.f32 %v2090, %v2094
          %v2107 = vmax.f32 %v2091, %v2095
          %v2108 = vmax.f32 %v2104, %v2096
          %v2109 = vmax.f32 %v2105, %v2097
          %v2110 = vmax.f32 %v2106, %v2098
          %v2111 = vmax.f32 %v2107, %v2099
          %v2112 = vmax.f32 %v2108, %v2100
          %v2113 = vmax.f32 %v2109, %v2101
          %v2114 = vmax.f32 %v2110, %v2102
          %v2115 = vmax.f32 %v2111, %v2103
          %v2116 = vmax.f32 %v2112, %v2113
          %v2117 = vmax.f32 %v2114, %v2115
          %v2118 = vmax.f32 %v2116, %v2117
          %v2119 = vrot.slane %v2118, 4
          %v2120 = vmax.f32 %v2118, %v2119
          %v2121 = vrot.slane %v2120, 2
          %v2122 = vmax.f32 %v2120, %v2121
          %v2123 = vrot.slane %v2122, 1
          %v2124 = vmax.f32 %v2122, %v2123
          %2125 = vset.pattern.permute.xlu0 1
          %2126 = vperm.xlu0 %2125, %v2008
          %v2127 = vpop.permute.xlu0 %2126
          %2128 = vset.pattern.permute.xlu0 1
          %2129 = vperm.xlu0 %2128, %v2009
          %v2130 = vpop.permute.xlu0 %2129
          %2131 = vset.pattern.permute.xlu0 1
          %2132 = vperm.xlu0 %2131, %v2010
          %v2133 = vpop.permute.xlu0 %2132
          %2134 = vset.pattern.permute.xlu0 1
          %2135 = vperm.xlu0 %2134, %v2011
          %v2136 = vpop.permute.xlu0 %2135
          %2137 = vset.pattern.permute.xlu0 1
          %2138 = vperm.xlu0 %2137, %v2012
          %v2139 = vpop.permute.xlu0 %2138
          %2140 = vset.pattern.permute.xlu0 1
          %2141 = vperm.xlu0 %2140, %v2013
          %v2142 = vpop.permute.xlu0 %2141
          %2143 = vset.pattern.permute.xlu0 1
          %2144 = vperm.xlu0 %2143, %v2014
          %v2145 = vpop.permute.xlu0 %2144
          %2146 = vset.pattern.permute.xlu0 1
          %2147 = vperm.xlu0 %2146, %v2015
          %v2148 = vpop.permute.xlu0 %2147
          %2149 = vset.pattern.permute.xlu0 1
          %2150 = vperm.xlu0 %2149, %v2016
          %v2151 = vpop.permute.xlu0 %2150
          %2152 = vset.pattern.permute.xlu0 1
          %2153 = vperm.xlu0 %2152, %v2017
          %v2154 = vpop.permute.xlu0 %2153
          %2155 = vset.pattern.permute.xlu0 1
          %2156 = vperm.xlu0 %2155, %v2018
          %v2157 = vpop.permute.xlu0 %2156
          %2158 = vset.pattern.permute.xlu0 1
          %2159 = vperm.xlu0 %2158, %v2019
          %v2160 = vpop.permute.xlu0 %2159
          %2161 = vset.pattern.permute.xlu0 1
          %2162 = vperm.xlu0 %2161, %v2020
          %v2163 = vpop.permute.xlu0 %2162
          %2164 = vset.pattern.permute.xlu0 1
          %2165 = vperm.xlu0 %2164, %v2021
          %v2166 = vpop.permute.xlu0 %2165
          %2167 = vset.pattern.permute.xlu0 1
          %2168 = vperm.xlu0 %2167, %v2022
          %v2169 = vpop.permute.xlu0 %2168
          %2170 = vset.pattern.permute.xlu0 1
          %2171 = vperm.xlu0 %2170, %v2023
          %v2172 = vpop.permute.xlu0 %2171
          %vm2173 = vcmp.eq.s32.totalorder %v2127, 1
          %vm2174 = vcmp.eq.s32.totalorder %v2130, 1
          %vm2175 = vcmp.eq.s32.totalorder %v2133, 1
          %vm2176 = vcmp.eq.s32.totalorder %v2136, 1
          %vm2177 = vcmp.eq.s32.totalorder %v2139, 1
          %vm2178 = vcmp.eq.s32.totalorder %v2142, 1
          %vm2179 = vcmp.eq.s32.totalorder %v2145, 1
          %vm2180 = vcmp.eq.s32.totalorder %v2148, 1
          %vm2181 = vcmp.eq.s32.totalorder %v2151, 1
          %vm2182 = vcmp.eq.s32.totalorder %v2154, 1
          %vm2183 = vcmp.eq.s32.totalorder %v2157, 1
          %vm2184 = vcmp.eq.s32.totalorder %v2160, 1
          %vm2185 = vcmp.eq.s32.totalorder %v2163, 1
          %vm2186 = vcmp.eq.s32.totalorder %v2166, 1
          %vm2187 = vcmp.eq.s32.totalorder %v2169, 1
          %vm2188 = vcmp.eq.s32.totalorder %v2172, 1
          %v2189 = vsel %vm2173, %v1912, -1e+30
          %v2190 = vsel %vm2174, %v1913, -1e+30
          %v2191 = vsel %vm2175, %v1914, -1e+30
          %v2192 = vsel %vm2176, %v1915, -1e+30
          %v2193 = vsel %vm2177, %v1916, -1e+30
          %v2194 = vsel %vm2178, %v1917, -1e+30
          %v2195 = vsel %vm2179, %v1918, -1e+30
          %v2196 = vsel %vm2180, %v1919, -1e+30
          %v2197 = vsel %vm2181, %v1920, -1e+30
          %v2198 = vsel %vm2182, %v1921, -1e+30
          %v2199 = vsel %vm2183, %v1922, -1e+30
          %v2200 = vsel %vm2184, %v1923, -1e+30
          %v2201 = vsel %vm2185, %v1924, -1e+30
          %v2202 = vsel %vm2186, %v1925, -1e+30
          %v2203 = vsel %vm2187, %v1926, -1e+30
          %v2204 = vsel %vm2188, %v1927, -1e+30
          %v2205 = vmax.f32 %v2189, %v2193
          %v2206 = vmax.f32 %v2190, %v2194
          %v2207 = vmax.f32 %v2191, %v2195
          %v2208 = vmax.f32 %v2192, %v2196
          %v2209 = vmax.f32 %v2205, %v2197
          %v2210 = vmax.f32 %v2206, %v2198
          %v2211 = vmax.f32 %v2207, %v2199
          %v2212 = vmax.f32 %v2208, %v2200
          %v2213 = vmax.f32 %v2209, %v2201
          %v2214 = vmax.f32 %v2210, %v2202
          %v2215 = vmax.f32 %v2211, %v2203
          %v2216 = vmax.f32 %v2212, %v2204
          %v2217 = vmax.f32 %v2213, %v2214
          %v2218 = vmax.f32 %v2215, %v2216
          %v2219 = vmax.f32 %v2217, %v2218
          %v2220 = vrot.slane %v2219, 4
          %v2221 = vmax.f32 %v2219, %v2220
          %v2222 = vrot.slane %v2221, 2
          %v2223 = vmax.f32 %v2221, %v2222
          %v2224 = vrot.slane %v2223, 1
          %v2225 = vmax.f32 %v2223, %v2224
          %vm2226 = vcmask 1040384
          %v2227 = vsel %vm2226, %v2124, %v2225
          %v2228 = vpack.c.bf16 %v2227, %v2227
          %v2229 = vld [vmem:[%s9] sm:$0xf]
          %v2230 = vld [vmem:[%s9 + $0x4] sm:$0xf]
          %v2231 = vld [vmem:[%s9 + $0x8] sm:$0xf]
          %v2232 = vld [vmem:[%s9 + $0xc] sm:$0xf]
          %v2233 = vld [vmem:[%s9 + $0x10] sm:$0xf]
          %v2234 = vld [vmem:[%s9 + $0x14] sm:$0xf]
          %v2235 = vld [vmem:[%s9 + $0x18] sm:$0xf]
          %v2236 = vld [vmem:[%s9 + $0x1c] sm:$0xf]
          %v2237 = vld [vmem:[%s9 + $0x20] sm:$0xf]
          %v2238 = vld [vmem:[%s9 + $0x24] sm:$0xf]
          %v2239 = vld [vmem:[%s9 + $0x28] sm:$0xf]
          %v2240 = vld [vmem:[%s9 + $0x2c] sm:$0xf]
          %v2241 = vld [vmem:[%s9 + $0x30] sm:$0xf]
          %v2242 = vld [vmem:[%s9 + $0x34] sm:$0xf]
          %v2243 = vld [vmem:[%s9 + $0x38] sm:$0xf]
          %v2244 = vld [vmem:[%s9 + $0x3c] sm:$0xf]
          %v2245 = vpack.c.bf16 %v1975, %v1975
          %v2246 = vld [vmem:[%s9 + $0x40] sm:$0xf]
          %v2247 = vld [vmem:[%s9 + $0x44] sm:$0xf]
          %v2248 = vld [vmem:[%s9 + $0x48] sm:$0xf]
          %v2249 = vld [vmem:[%s9 + $0x4c] sm:$0xf]
          %v2250 = vld [vmem:[%s9 + $0x50] sm:$0xf]
          %v2251 = vld [vmem:[%s9 + $0x54] sm:$0xf]
          %v2252 = vld [vmem:[%s9 + $0x58] sm:$0xf]
          %v2253 = vld [vmem:[%s9 + $0x5c] sm:$0xf]
          %v2254 = vld [vmem:[%s9 + $0x60] sm:$0xf]
          %v2255 = vld [vmem:[%s9 + $0x64] sm:$0xf]
          %v2256 = vld [vmem:[%s9 + $0x68] sm:$0xf]
          %v2257 = vld [vmem:[%s9 + $0x6c] sm:$0xf]
          %v2258 = vld [vmem:[%s9 + $0x70] sm:$0xf]
          %v2259 = vld [vmem:[%s9 + $0x74] sm:$0xf]
          %v2260 = vld [vmem:[%s9 + $0x78] sm:$0xf]
          %v2261 = vld [vmem:[%s9 + $0x7c] sm:$0xf]
          %v2278 = vunpack.c.l.b16 %v2246
          %v2279 = vunpack.c.l.b16 %v2247
          %v2280 = vunpack.c.l.b16 %v2248
          %v2281 = vunpack.c.l.b16 %v2249
          %v2282 = vunpack.c.l.b16 %v2250
          %v2283 = vunpack.c.l.b16 %v2251
          %v2284 = vunpack.c.l.b16 %v2252
          %v2285 = vunpack.c.l.b16 %v2253
          %v2286 = vunpack.c.l.b16 %v2254
          %v2287 = vunpack.c.l.b16 %v2255
          %v2288 = vunpack.c.l.b16 %v2256
          %v2289 = vunpack.c.l.b16 %v2257
          %v2290 = vunpack.c.l.b16 %v2258
          %v2291 = vunpack.c.l.b16 %v2259
          %v2292 = vunpack.c.l.b16 %v2260
          %v2293 = vunpack.c.l.b16 %v2261
          %v2294 = vpack.c.b16 %v2279, %v2278
          %v2295 = vpack.c.b16 %v2281, %v2280
          %v2296 = vpack.c.b16 %v2283, %v2282
          %v2297 = vpack.c.b16 %v2285, %v2284
          %v2298 = vpack.c.b16 %v2287, %v2286
          %v2299 = vpack.c.b16 %v2289, %v2288
          %v2300 = vpack.c.b16 %v2291, %v2290
          %v2301 = vpack.c.b16 %v2293, %v2292
          %2310 = vmatprep.subr.bf16.mxu0 0
          %2311 = vmatpush1.bf16.msra.mxu0 %v2294
          %2312 = vmatprep.subr.bf16.mxu0 0
          %2313 = vmatpush1.bf16.msra.mxu0 %v2295
          %2314 = vmatprep.subr.bf16.mxu0 0
          %2315 = vmatpush1.bf16.msra.mxu0 %v2296
          %2316 = vmatprep.subr.bf16.mxu0 0
          %2317 = vmatpush1.bf16.msra.mxu0 %v2297
          %2318 = vmatprep.subr.bf16.mxu0 0
          %2319 = vmatpush1.bf16.msra.mxu0 %v2298
          %2320 = vmatprep.subr.bf16.mxu0 0
          %2321 = vmatpush1.bf16.msra.mxu0 %v2299
          %2322 = vmatprep.subr.bf16.mxu0 0
          %2323 = vmatpush1.bf16.msra.mxu0 %v2300
          %2324 = vmatprep.subr.bf16.mxu0 0
          %2325 = vmatpush1.bf16.msra.mxu0 %v2301
          %2326 = vmatprep.subr.bf16.mxu0 0
          %2327 = vmatpush1.bf16.msra.mxu0 0
          %2328 = vmatprep.subr.bf16.mxu0 0
          %2329 = vmatpush1.bf16.msra.mxu0 0
          %2330 = vmatprep.subr.bf16.mxu0 0
          %2331 = vmatpush1.bf16.msra.mxu0 0
          %2332 = vmatprep.subr.bf16.mxu0 0
          %2333 = vmatpush1.bf16.msra.mxu0 0
          %2334 = vmatprep.subr.bf16.mxu0 0
          %2335 = vmatpush1.bf16.msra.mxu0 0
          %2336 = vmatprep.subr.bf16.mxu0 0
          %2337 = vmatpush1.bf16.msra.mxu0 0
          %2338 = vmatprep.subr.bf16.mxu0 0
          %2339 = vmatpush1.bf16.msra.mxu0 0
          %2340 = vmatprep.subr.bf16.mxu0 0
          %2341 = vmatpush1.bf16.msra.mxu0 0
          %2342 = vmatprep.mubr.bf16.mxu0 0
          %2343 = vmatmul.mubr.bf16.gmra.mrb[0].mxu0 %v2245
          %v2344 = vpop.f32.mrb[0].mxu0
          %v2345 = vadd.f32 0.0, %v2344
          %v2346 = vpop.f32.mrb[0].mxu0
          %v2347 = vpop.f32.mrb[0].mxu0
          %v2348 = vpop.f32.mrb[0].mxu0
          %2349 = vdwg.mxu0
          %v2366 = vunpack.c.l.b16 %v2229
          %v2367 = vunpack.c.l.b16 %v2230
          %v2368 = vunpack.c.l.b16 %v2231
          %v2369 = vunpack.c.l.b16 %v2232
          %v2370 = vunpack.c.l.b16 %v2233
          %v2371 = vunpack.c.l.b16 %v2234
          %v2372 = vunpack.c.l.b16 %v2235
          %v2373 = vunpack.c.l.b16 %v2236
          %v2374 = vunpack.c.l.b16 %v2237
          %v2375 = vunpack.c.l.b16 %v2238
          %v2376 = vunpack.c.l.b16 %v2239
          %v2377 = vunpack.c.l.b16 %v2240
          %v2378 = vunpack.c.l.b16 %v2241
          %v2379 = vunpack.c.l.b16 %v2242
          %v2380 = vunpack.c.l.b16 %v2243
          %v2381 = vunpack.c.l.b16 %v2244
          %v2382 = vpack.c.b16 %v2367, %v2366
          %v2383 = vpack.c.b16 %v2369, %v2368
          %v2384 = vpack.c.b16 %v2371, %v2370
          %v2385 = vpack.c.b16 %v2373, %v2372
          %v2386 = vpack.c.b16 %v2375, %v2374
          %v2387 = vpack.c.b16 %v2377, %v2376
          %v2388 = vpack.c.b16 %v2379, %v2378
          %v2389 = vpack.c.b16 %v2381, %v2380
          %2398 = vmatprep.subr.bf16.mxu0 0
          %2399 = vmatpush1.bf16.msra.mxu0 %v2382
          %2400 = vmatprep.subr.bf16.mxu0 0
          %2401 = vmatpush1.bf16.msra.mxu0 %v2383
          %2402 = vmatprep.subr.bf16.mxu0 0
          %2403 = vmatpush1.bf16.msra.mxu0 %v2384
          %2404 = vmatprep.subr.bf16.mxu0 0
          %2405 = vmatpush1.bf16.msra.mxu0 %v2385
          %2406 = vmatprep.subr.bf16.mxu0 0
          %2407 = vmatpush1.bf16.msra.mxu0 %v2386
          %2408 = vmatprep.subr.bf16.mxu0 0
          %2409 = vmatpush1.bf16.msra.mxu0 %v2387
          %2410 = vmatprep.subr.bf16.mxu0 0
          %2411 = vmatpush1.bf16.msra.mxu0 %v2388
          %2412 = vmatprep.subr.bf16.mxu0 0
          %2413 = vmatpush1.bf16.msra.mxu0 %v2389
          %2414 = vmatprep.subr.bf16.mxu0 0
          %2415 = vmatpush1.bf16.msra.mxu0 0
          %2416 = vmatprep.subr.bf16.mxu0 0
          %2417 = vmatpush1.bf16.msra.mxu0 0
          %2418 = vmatprep.subr.bf16.mxu0 0
          %2419 = vmatpush1.bf16.msra.mxu0 0
          %2420 = vmatprep.subr.bf16.mxu0 0
          %2421 = vmatpush1.bf16.msra.mxu0 0
          %2422 = vmatprep.subr.bf16.mxu0 0
          %2423 = vmatpush1.bf16.msra.mxu0 0
          %2424 = vmatprep.subr.bf16.mxu0 0
          %2425 = vmatpush1.bf16.msra.mxu0 0
          %2426 = vmatprep.subr.bf16.mxu0 0
          %2427 = vmatpush1.bf16.msra.mxu0 0
          %2428 = vmatprep.subr.bf16.mxu0 0
          %2429 = vmatpush1.bf16.msra.mxu0 0
          %2430 = vmatprep.mubr.bf16.mxu0 0
          %2431 = vmatmul.mubr.bf16.gmra.mrb[0].mxu0 %v2228
          %v2432 = vpop.f32.mrb[0].mxu0
          %v2433 = vadd.f32 %v2345, %v2432
          %v2434 = vpop.f32.mrb[0].mxu0
          %v2435 = vpop.f32.mrb[0].mxu0
          %v2436 = vpop.f32.mrb[0].mxu0
          %2437 = vdwg.mxu0
          %v2438 = vld [vmem:[%s10] sm:$0x1]
          %v2440 = vlaneseq
          %v2441 = vshrl.u32 %v2440, 7
          %v2442 = vsub.s32 0, %v2441
          %v2443 = vrot.slane %v2438, %v2442
          %v2445 = vadd.f32 %v2433, %v2443
          %v2446 = vtanh.pop %v2445
          %v2447 = vpack.c.bf16 %v2446, %v2446
          %v2448 = vld [vmem:[%s11] sm:$0xf]
          %v2449 = vld [vmem:[%s11 + $0x4] sm:$0xf]
          %v2450 = vld [vmem:[%s11 + $0x8] sm:$0xf]
          %v2451 = vld [vmem:[%s11 + $0xc] sm:$0xf]
          %v2452 = vld [vmem:[%s11 + $0x10] sm:$0xf]
          %v2453 = vld [vmem:[%s11 + $0x14] sm:$0xf]
          %v2454 = vld [vmem:[%s11 + $0x18] sm:$0xf]
          %v2455 = vld [vmem:[%s11 + $0x1c] sm:$0xf]
          %v2456 = vld [vmem:[%s11 + $0x20] sm:$0xf]
          %v2457 = vld [vmem:[%s11 + $0x24] sm:$0xf]
          %v2458 = vld [vmem:[%s11 + $0x28] sm:$0xf]
          %v2459 = vld [vmem:[%s11 + $0x2c] sm:$0xf]
          %v2460 = vld [vmem:[%s11 + $0x30] sm:$0xf]
          %v2461 = vld [vmem:[%s11 + $0x34] sm:$0xf]
          %v2462 = vld [vmem:[%s11 + $0x38] sm:$0xf]
          %v2463 = vld [vmem:[%s11 + $0x3c] sm:$0xf]
          %v2464 = vld [vmem:[%s12] sm:$0x1]
          %v2466 = vlaneseq
          %v2467 = vshrl.u32 %v2466, 7
          %v2468 = vsub.s32 0, %v2467
          %v2469 = vrot.slane %v2464, %v2468
          %v2487 = vunpack.c.l.b16 %v2448
          %v2488 = vunpack.c.l.b16 %v2449
          %v2489 = vunpack.c.l.b16 %v2450
          %v2490 = vunpack.c.l.b16 %v2451
          %v2491 = vunpack.c.l.b16 %v2452
          %v2492 = vunpack.c.l.b16 %v2453
          %v2493 = vunpack.c.l.b16 %v2454
          %v2494 = vunpack.c.l.b16 %v2455
          %v2495 = vunpack.c.l.b16 %v2456
          %v2496 = vunpack.c.l.b16 %v2457
          %v2497 = vunpack.c.l.b16 %v2458
          %v2498 = vunpack.c.l.b16 %v2459
          %v2499 = vunpack.c.l.b16 %v2460
          %v2500 = vunpack.c.l.b16 %v2461
          %v2501 = vunpack.c.l.b16 %v2462
          %v2502 = vunpack.c.l.b16 %v2463
          %v2503 = vpack.c.b16 %v2488, %v2487
          %v2504 = vpack.c.b16 %v2490, %v2489
          %v2505 = vpack.c.b16 %v2492, %v2491
          %v2506 = vpack.c.b16 %v2494, %v2493
          %v2507 = vpack.c.b16 %v2496, %v2495
          %v2508 = vpack.c.b16 %v2498, %v2497
          %v2509 = vpack.c.b16 %v2500, %v2499
          %v2510 = vpack.c.b16 %v2502, %v2501
          %2519 = vmatprep.subr.bf16.mxu0 0
          %2520 = vmatpush1.bf16.msra.mxu0 %v2503
          %2521 = vmatprep.subr.bf16.mxu0 0
          %2522 = vmatpush1.bf16.msra.mxu0 %v2504
          %2523 = vmatprep.subr.bf16.mxu0 0
          %2524 = vmatpush1.bf16.msra.mxu0 %v2505
          %2525 = vmatprep.subr.bf16.mxu0 0
          %2526 = vmatpush1.bf16.msra.mxu0 %v2506
          %2527 = vmatprep.subr.bf16.mxu0 0
          %2528 = vmatpush1.bf16.msra.mxu0 %v2507
          %2529 = vmatprep.subr.bf16.mxu0 0
          %2530 = vmatpush1.bf16.msra.mxu0 %v2508
          %2531 = vmatprep.subr.bf16.mxu0 0
          %2532 = vmatpush1.bf16.msra.mxu0 %v2509
          %2533 = vmatprep.subr.bf16.mxu0 0
          %2534 = vmatpush1.bf16.msra.mxu0 %v2510
          %2535 = vmatprep.subr.bf16.mxu0 0
          %2536 = vmatpush1.bf16.msra.mxu0 0
          %2537 = vmatprep.subr.bf16.mxu0 0
          %2538 = vmatpush1.bf16.msra.mxu0 0
          %2539 = vmatprep.subr.bf16.mxu0 0
          %2540 = vmatpush1.bf16.msra.mxu0 0
          %2541 = vmatprep.subr.bf16.mxu0 0
          %2542 = vmatpush1.bf16.msra.mxu0 0
          %2543 = vmatprep.subr.bf16.mxu0 0
          %2544 = vmatpush1.bf16.msra.mxu0 0
          %2545 = vmatprep.subr.bf16.mxu0 0
          %2546 = vmatpush1.bf16.msra.mxu0 0
          %2547 = vmatprep.subr.bf16.mxu0 0
          %2548 = vmatpush1.bf16.msra.mxu0 0
          %2549 = vmatprep.subr.bf16.mxu0 0
          %2550 = vmatpush1.bf16.msra.mxu0 0
          %2551 = vmatprep.mubr.bf16.mxu0 0
          %2552 = vmatmul.mubr.bf16.gmra.mrb[0].mxu0 %v2447
          %v2553 = vpop.f32.mrb[0].mxu0
          %v2554 = vadd.f32 %v2469, %v2553
          %v2555 = vpop.f32.mrb[0].mxu0
          %v2556 = vpop.f32.mrb[0].mxu0
          %v2557 = vpop.f32.mrb[0].mxu0
          %2558 = vdwg.mxu0
          %v2559 = vtanh.pop %v2554
          %v2560 = vpack.c.bf16 %v2559, %v2559
          %v2561 = vld [vmem:[%s13] sm:$0xf]
          %v2562 = vld [vmem:[%s13 + $0x4] sm:$0xf]
          %v2563 = vld [vmem:[%s13 + $0x8] sm:$0xf]
          %v2564 = vld [vmem:[%s13 + $0xc] sm:$0xf]
          %v2565 = vld [vmem:[%s13 + $0x10] sm:$0xf]
          %v2566 = vld [vmem:[%s13 + $0x14] sm:$0xf]
          %v2567 = vld [vmem:[%s13 + $0x18] sm:$0xf]
          %v2568 = vld [vmem:[%s13 + $0x1c] sm:$0xf]
          %v2569 = vld [vmem:[%s13 + $0x20] sm:$0xf]
          %v2570 = vld [vmem:[%s13 + $0x24] sm:$0xf]
          %v2571 = vld [vmem:[%s13 + $0x28] sm:$0xf]
          %v2572 = vld [vmem:[%s13 + $0x2c] sm:$0xf]
          %v2573 = vld [vmem:[%s13 + $0x30] sm:$0xf]
          %v2574 = vld [vmem:[%s13 + $0x34] sm:$0xf]
          %v2575 = vld [vmem:[%s13 + $0x38] sm:$0xf]
          %v2576 = vld [vmem:[%s13 + $0x3c] sm:$0xf]
          %v2577 = vld [vmem:[%s14] sm:$0x1]
          %v2579 = vlaneseq
          %v2580 = vshrl.u32 %v2579, 7
          %v2581 = vsub.s32 0, %v2580
          %v2582 = vrot.slane %v2577, %v2581
          %v2600 = vunpack.c.l.b16 %v2561
          %v2601 = vunpack.c.l.b16 %v2562
          %v2602 = vunpack.c.l.b16 %v2563
          %v2603 = vunpack.c.l.b16 %v2564
          %v2604 = vunpack.c.l.b16 %v2565
          %v2605 = vunpack.c.l.b16 %v2566
          %v2606 = vunpack.c.l.b16 %v2567
          %v2607 = vunpack.c.l.b16 %v2568
          %v2608 = vunpack.c.l.b16 %v2569
          %v2609 = vunpack.c.l.b16 %v2570
          %v2610 = vunpack.c.l.b16 %v2571
          %v2611 = vunpack.c.l.b16 %v2572
          %v2612 = vunpack.c.l.b16 %v2573
          %v2613 = vunpack.c.l.b16 %v2574
          %v2614 = vunpack.c.l.b16 %v2575
          %v2615 = vunpack.c.l.b16 %v2576
          %v2616 = vpack.c.b16 %v2601, %v2600
          %v2617 = vpack.c.b16 %v2603, %v2602
          %v2618 = vpack.c.b16 %v2605, %v2604
          %v2619 = vpack.c.b16 %v2607, %v2606
          %v2620 = vpack.c.b16 %v2609, %v2608
          %v2621 = vpack.c.b16 %v2611, %v2610
          %v2622 = vpack.c.b16 %v2613, %v2612
          %v2623 = vpack.c.b16 %v2615, %v2614
          %2632 = vmatprep.subr.bf16.mxu0 0
          %2633 = vmatpush1.bf16.msra.mxu0 %v2616
          %2634 = vmatprep.subr.bf16.mxu0 0
          %2635 = vmatpush1.bf16.msra.mxu0 %v2617
          %2636 = vmatprep.subr.bf16.mxu0 0
          %2637 = vmatpush1.bf16.msra.mxu0 %v2618
          %2638 = vmatprep.subr.bf16.mxu0 0
          %2639 = vmatpush1.bf16.msra.mxu0 %v2619
          %2640 = vmatprep.subr.bf16.mxu0 0
          %2641 = vmatpush1.bf16.msra.mxu0 %v2620
          %2642 = vmatprep.subr.bf16.mxu0 0
          %2643 = vmatpush1.bf16.msra.mxu0 %v2621
          %2644 = vmatprep.subr.bf16.mxu0 0
          %2645 = vmatpush1.bf16.msra.mxu0 %v2622
          %2646 = vmatprep.subr.bf16.mxu0 0
          %2647 = vmatpush1.bf16.msra.mxu0 %v2623
          %2648 = vmatprep.subr.bf16.mxu0 0
          %2649 = vmatpush1.bf16.msra.mxu0 0
          %2650 = vmatprep.subr.bf16.mxu0 0
          %2651 = vmatpush1.bf16.msra.mxu0 0
          %2652 = vmatprep.subr.bf16.mxu0 0
          %2653 = vmatpush1.bf16.msra.mxu0 0
          %2654 = vmatprep.subr.bf16.mxu0 0
          %2655 = vmatpush1.bf16.msra.mxu0 0
          %2656 = vmatprep.subr.bf16.mxu0 0
          %2657 = vmatpush1.bf16.msra.mxu0 0
          %2658 = vmatprep.subr.bf16.mxu0 0
          %2659 = vmatpush1.bf16.msra.mxu0 0
          %2660 = vmatprep.subr.bf16.mxu0 0
          %2661 = vmatpush1.bf16.msra.mxu0 0
          %2662 = vmatprep.subr.bf16.mxu0 0
          %2663 = vmatpush1.bf16.msra.mxu0 0
          %2664 = vmatprep.mubr.bf16.mxu0 0
          %2665 = vmatmul.mubr.bf16.gmra.mrb[0].mxu0 %v2560
          %v2666 = vpop.f32.mrb[0].mxu0
          %v2667 = vadd.f32 %v2582, %v2666
          %v2668 = vpop.f32.mrb[0].mxu0
          %v2669 = vpop.f32.mrb[0].mxu0
          %v2670 = vpop.f32.mrb[0].mxu0
          %2671 = vdwg.mxu0
          %vm2672 = vcmask 58368
          %v2673 = vsel %vm2672, %v2667, -inf
          %2674 = vmax.xlane.f32.xlu0 %v2673
          %v2675 = vpop.xlane.xlu0 %2674
          %v2676 = vsub.f32 %v2667, %v2675
          %v2677 = vmul.f32 %v2676, 1.442695
          %v2678 = vpow.pop %v2677
          %v2679 = vsel %vm2672, %v2678, 0.0
          %2680 = vadd.xlane.f32.xlu0 %v2679
          %v2681 = vpop.xlane.xlu0 %2680
          %v2682 = vlog2.pop %v2681
          %v2683 = vmul.f32 %v2682, 0.6931472
          %v2684 = vsub.f32 %v2676, %v2683
          %2685 = vst.msk [vmem:[#allocation3] sm:$0x3] %vm2672, %v2684
        $region92: #{graph_cnn_forward.1} parent=79 // pred_fallthru
          _
        // Predicated region
        $region93: #{graph_cnn_forward.1} parent=79 // pred_check
          %p2686 = pneg %p366
        $region94: #{graph_cnn_forward.1} parent=79 // pred_check_branch
          %2688 = sbr.rel (%p2686) target = $region96
        $region95: #{graph_cnn_forward.1} parent=79 // pred_region
          %s2690 = ssub.s32 32, 32
          %2691 = vsyncadd [#allocation4], %s2690
          %s2693 = sshll.u32 [#allocation3], 4
          %s2694 = int_to_ptr.vmem [resolvable:$true] %s2693
          %2696 = dma.vmem_to_hbm [thread:$0]  %s2694, 32, %s15, [#allocation4]
        $region96: #{graph_cnn_forward.1} parent=79 // pred_fallthru
          _
        // Predicated region
        $region97: #{graph_cnn_forward.1} parent=79 // pred_check
          %p2697 = pneg %p366
        $region98: #{graph_cnn_forward.1} parent=79 // pred_check_branch
          %2699 = sbr.rel (%p2697) target = $region100
        $region99: #{graph_cnn_forward.1} parent=79 // pred_region
          %2700 = dma.done [#allocation4], 32
        $region100: #{graph_cnn_forward.1} parent=79 // pred_fallthru
          _
      $region80: #{graph_cnn_forward.1} parent=5 // pred_fallthru
        _
      %p2701 = scmp.le.s32.totalorder 2, %s22
      // Predicated region
      $region101: #{graph_cnn_forward.1} parent=5 // pred_check
        %p2702 = pneg %p2701
      $region102: #{graph_cnn_forward.1} parent=5 // pred_check_branch
        %2704 = sbr.rel (%p2702) target = $region104
      $region103: #{graph_cnn_forward.1} parent=5 // pred_region
        %s2705 = ssub.s32 %s22, 2
      $region104: #{graph_cnn_forward.1} parent=5 // pred_fallthru
        _
    $region6: #{graph_cnn_forward.1} parent=1 // loop_footer
      %s26 = sadd.s32 1, %s22
    $region7: #{graph_cnn_forward.1} parent=1 // loop_footer_branch
      %21 = sbr.rel target = $region3
    $region8: #{graph_cnn_forward.1} parent=1 // loop_exit
      _
    %2706 = vsyncpa [#allocation4], 1
    %s2707 = scalar_lea.sflag [#allocation4], 1
    %2708 = vsyncpa %s2707, 1

// kernel: graph_cnn_forward.1
$region0: #{graph_cnn_forward.1}
  #allocation0 [shape = 'u32[]', space=smem, size = 0x4, offset = 0x4, fixed_abs, tag = 'smem constant byte address 0x4 - core index']
  #allocation1 [shape = 'u32[144,128]{1,0:T(1,128)}', space=vmem, size = 0x12000, scoped, tag = 'internal scratch']
  #allocation2 [shape = 'bf16[128,128]{1,0:T(16,128)(2,1)}', space=vmem, size = 0x8000, scoped, tag = 'scratch operand']
  %s0 = inlined_call_operand.vmem [shape: bf16[128,128], index: 0, kind: input, shape index: {}]
  %s1 = inlined_call_operand.vmem [shape: f32[128,1], index: 1, kind: input, shape index: {}]
  %s2 = inlined_call_operand.vmem [shape: bf16[128,128], index: 2, kind: input, shape index: {}]
  %s3 = inlined_call_operand.vmem [shape: bf16[256,128], index: 3, kind: input, shape index: {}]
  %s4 = inlined_call_operand.vmem [shape: bf16[4,256,128], index: 4, kind: input, shape index: {}]
  %s5 = inlined_call_operand.vmem [shape: f32[5,1,128], index: 5, kind: input, shape index: {}]
  %s6 = inlined_call_operand.vmem [shape: bf16[2,128], index: 6, kind: input, shape index: {}]
  %s7 = inlined_call_operand.vmem [shape: f32[2,1], index: 7, kind: input, shape index: {}]
  %s8 = inlined_call_operand.vmem [shape: f32[128,2], index: 8, kind: input, shape index: {}]
  %s9 = inlined_call_operand.vmem [shape: bf16[256,128], index: 9, kind: input, shape index: {}]
  %s10 = inlined_call_operand.vmem [shape: f32[1,128], index: 10, kind: input, shape index: {}]
  %s11 = inlined_call_operand.vmem [shape: bf16[128,128], index: 11, kind: input, shape index: {}]
  %s12 = inlined_call_operand.vmem [shape: f32[1,128], index: 12, kind: input, shape index: {}]
  %s13 = inlined_call_operand.vmem [shape: bf16[128,8], index: 13, kind: input, shape index: {}]
  %s14 = inlined_call_operand.vmem [shape: f32[1,8], index: 14, kind: input, shape index: {}]
  %s15 = inlined_call_operand.hbm [shape: f32[2,8], index: 15, kind: output, shape index: {}]
  %s16 = sld [smem:[#allocation0]]
  $region105: #{graph_cnn_forward.1} parent=0
    _
  %s18 = ssub.s32 1, %s16
  %s19 = scalar_select 0, %s18, %s16
  $region1: #{graph_cnn_forward.1} parent=0
    #allocation3 [shape = 'u8[1024]{0}', space=vmem, size = 0x400, scoped, tag = 'output window, operand 0, single buffered']
    #allocation4 [shape = 's32[2]{0}', space=sflag, size = 0x8, scoped, tag = 'scoped memory for graph_cnn_forward.1']
    %20 = vsyncpa [#allocation4], 0
    loop: start=0, step=1, limit=7
    $region2: #{graph_cnn_forward.1} parent=1 // loop_pre_header
      _
    $region3: #{graph_cnn_forward.1} parent=1 // loop_header
      %s22 = sphi 0, %s26
      %p23 = scmp.ge.s32.totalorder %s22, 7
      %s30 = sphi 0, %s30
      %s32 = sphi 0, %s30
      %s33 = sphi 0, %s32
      %s47 = sphi 0, %s33
      %s51 = sphi 0, %s51
      %s53 = sphi 0, %s51
      %s54 = sphi 0, %s53
      %s68 = sphi 0, %s54
      %s72 = sphi 0, %s72
      %s74 = sphi 0, %s72
      %s75 = sphi 0, %s74
      %s89 = sphi 0, %s75
      %s93 = sphi 0, %s93
      %s95 = sphi 0, %s93
      %s96 = sphi 0, %s95
      %s110 = sphi 0, %s96
      %s122 = sphi 0, %s124
      %s125 = sphi 0, %s122
      %s126 = sphi 0, %s125
      %s142 = sphi 0, %s126
      %s146 = sphi 0, %s146
      %s148 = sphi 0, %s146
      %s149 = sphi 0, %s148
      %s163 = sphi 0, %s149
      %s167 = sphi 0, %s167
      %s169 = sphi 0, %s167
      %s170 = sphi 0, %s169
      %s184 = sphi 0, %s170
      %s188 = sphi 0, %s188
      %s190 = sphi 0, %s188
      %s191 = sphi 0, %s190
      %s205 = sphi 0, %s191
      %s209 = sphi 0, %s209
      %s211 = sphi 0, %s209
      %s212 = sphi 0, %s211
      %s226 = sphi 0, %s212
      %s230 = sphi 0, %s230
      %s232 = sphi 0, %s230
      %s233 = sphi 0, %s232
      %s247 = sphi 0, %s233
      %s251 = sphi 0, %s251
      %s253 = sphi 0, %s251
      %s254 = sphi 0, %s253
      %s268 = sphi 0, %s254
      %s272 = sphi 0, %s272
      %s274 = sphi 0, %s272
      %s275 = sphi 0, %s274
      %s289 = sphi 0, %s275
      %s293 = sphi 0, %s293
      %s295 = sphi 0, %s293
      %s296 = sphi 0, %s295
      %s310 = sphi 0, %s296
      %s314 = sphi 0, %s314
      %s316 = sphi 0, %s314
      %s317 = sphi 0, %s316
      %s331 = sphi 0, %s317
      %s335 = sphi 0, %s335
      %s337 = sphi 0, %s335
      %s338 = sphi 0, %s337
      %s352 = sphi 0, %s338
      %s356 = sphi 0, %s356
      %s358 = sphi 0, %s356
      %s359 = sphi 0, %s358
      %s373 = sphi 0, %s359
    $region4: #{graph_cnn_forward.1} parent=1 // loop_header_branch
      %25 = sbr.rel (%p23) target = $region8
    $region5: #{graph_cnn_forward.1} parent=1 // loop_body
      %s27 = ssub.s32 %s22, 1
      %s28 = ssub.s32 %s22, 2
      %s29 = sadd.s32 %s22, 1
      %s31 = sadd.s32 %s30, 1
      %p34 = scmp.eq.s32.totalorder %s22, 4
      %p35 = scmp.ne.s32.totalorder %s30, %s32
      %p36 = scmp.eq.s32.totalorder %s22, 0
      %p37 = por %p35, %p36
      %p38 = scmp.ne.s32.totalorder %s30, %s32
      %p39 = scmp.eq.s32.totalorder %s27, 4
      %p40 = por %p38, %p39
      %p41 = scmp.ne.s32.totalorder %s32, %s33
      %p42 = scmp.eq.s32.totalorder %s27, 0
      %p43 = por %p41, %p42
      %p44 = scmp.ne.s32.totalorder %s32, %s33
      %p45 = scmp.eq.s32.totalorder %s28, 4
      %p46 = por %p44, %p45
      %p48 = scmp.ne.s32.totalorder %s33, %s47
      %p49 = scmp.eq.s32.totalorder %s28, 0
      %p50 = por %p48, %p49
      %s52 = sadd.s32 %s51, 1
      %p55 = scmp.eq.s32.totalorder %s22, 4
      %p56 = scmp.ne.s32.totalorder %s51, %s53
      %p57 = scmp.eq.s32.totalorder %s22, 0
      %p58 = por %p56, %p57
      %p59 = scmp.ne.s32.totalorder %s51, %s53
      %p60 = scmp.eq.s32.totalorder %s27, 4
      %p61 = por %p59, %p60
      %p62 = scmp.ne.s32.totalorder %s53, %s54
      %p63 = scmp.eq.s32.totalorder %s27, 0
      %p64 = por %p62, %p63
      %p65 = scmp.ne.s32.totalorder %s53, %s54
      %p66 = scmp.eq.s32.totalorder %s28, 4
      %p67 = por %p65, %p66
      %p69 = scmp.ne.s32.totalorder %s54, %s68
      %p70 = scmp.eq.s32.totalorder %s28, 0
      %p71 = por %p69, %p70
      %s73 = sadd.s32 %s72, 1
      %p76 = scmp.eq.s32.totalorder %s22, 4
      %p77 = scmp.ne.s32.totalorder %s72, %s74
      %p78 = scmp.eq.s32.totalorder %s22, 0
      %p79 = por %p77, %p78
      %p80 = scmp.ne.s32.totalorder %s72, %s74
      %p81 = scmp.eq.s32.totalorder %s27, 4
      %p82 = por %p80, %p81
      %p83 = scmp.ne.s32.totalorder %s74, %s75
      %p84 = scmp.eq.s32.totalorder %s27, 0
      %p85 = por %p83, %p84
      %p86 = scmp.ne.s32.totalorder %s74, %s75
      %p87 = scmp.eq.s32.totalorder %s28, 4
      %p88 = por %p86, %p87
      %p90 = scmp.ne.s32.totalorder %s75, %s89
      %p91 = scmp.eq.s32.totalorder %s28, 0
      %p92 = por %p90, %p91
      %s94 = sadd.s32 %s93, 1
      %p97 = scmp.eq.s32.totalorder %s22, 4
      %p98 = scmp.ne.s32.totalorder %s93, %s95
      %p99 = scmp.eq.s32.totalorder %s22, 0
      %p100 = por %p98, %p99
      %p101 = scmp.ne.s32.totalorder %s93, %s95
      %p102 = scmp.eq.s32.totalorder %s27, 4
      %p103 = por %p101, %p102
      %p104 = scmp.ne.s32.totalorder %s95, %s96
      %p105 = scmp.eq.s32.totalorder %s27, 0
      %p106 = por %p104, %p105
      %p107 = scmp.ne.s32.totalorder %s95, %s96
      %p108 = scmp.eq.s32.totalorder %s28, 4
      %p109 = por %p107, %p108
      %p111 = scmp.ne.s32.totalorder %s96, %s110
      %p112 = scmp.eq.s32.totalorder %s28, 0
      %p113 = por %p111, %p112
      %s114 = ssub.s32 %s22, 1
      %p115 = scmp.gt.s32.totalorder %s114, 0
      %s116 = scalar_select %p115, %s114, 0
      %s117 = ssub.s32 %s29, 1
      %p118 = scmp.gt.s32.totalorder %s117, 0
      %s119 = scalar_select %p118, %s117, 0
      %s120 = ssub.s32 %s116, %s119
      %p121 = scmp.eq.s32.totalorder %s120, 0
      %s123 = sadd.s32 %s122, 1
      %s124 = scalar_select %p121, %s122, %s123
      %p127 = pneg %p121
      %p128 = scmp.eq.s32.totalorder %s22, 4
      %p129 = por %p127, %p128
      %p130 = scmp.ne.s32.totalorder %s122, %s125
      %p131 = scmp.eq.s32.totalorder %s22, 0
      %p132 = por %p130, %p131
      %p133 = scmp.ne.s32.totalorder %s122, %s125
      %p134 = scmp.eq.s32.totalorder %s27, 4
      %p135 = por %p133, %p134
      %p136 = scmp.ne.s32.totalorder %s125, %s126
      %p137 = scmp.eq.s32.totalorder %s27, 0
      %p138 = por %p136, %p137
      %p139 = scmp.ne.s32.totalorder %s125, %s126
      %p140 = scmp.eq.s32.totalorder %s28, 4
      %p141 = por %p139, %p140
      %p143 = scmp.ne.s32.totalorder %s126, %s142
      %p144 = scmp.eq.s32.totalorder %s28, 0
      %p145 = por %p143, %p144
      %s147 = sadd.s32 %s146, 1
      %p150 = scmp.eq.s32.totalorder %s22, 4
      %p151 = scmp.ne.s32.totalorder %s146, %s148
      %p152 = scmp.eq.s32.totalorder %s22, 0
      %p153 = por %p151, %p152
      %p154 = scmp.ne.s32.totalorder %s146, %s148
      %p155 = scmp.eq.s32.totalorder %s27, 4
      %p156 = por %p154, %p155
      %p157 = scmp.ne.s32.totalorder %s148, %s149
      %p158 = scmp.eq.s32.totalorder %s27, 0
      %p159 = por %p157, %p158
      %p160 = scmp.ne.s32.totalorder %s148, %s149
      %p161 = scmp.eq.s32.totalorder %s28, 4
      %p162 = por %p160, %p161
      %p164 = scmp.ne.s32.totalorder %s149, %s163
      %p165 = scmp.eq.s32.totalorder %s28, 0
      %p166 = por %p164, %p165
      %s168 = sadd.s32 %s167, 1
      %p171 = scmp.eq.s32.totalorder %s22, 4
      %p172 = scmp.ne.s32.totalorder %s167, %s169
      %p173 = scmp.eq.s32.totalorder %s22, 0
      %p174 = por %p172, %p173
      %p175 = scmp.ne.s32.totalorder %s167, %s169
      %p176 = scmp.eq.s32.totalorder %s27, 4
      %p177 = por %p175, %p176
      %p178 = scmp.ne.s32.totalorder %s169, %s170
      %p179 = scmp.eq.s32.totalorder %s27, 0
      %p180 = por %p178, %p179
      %p181 = scmp.ne.s32.totalorder %s169, %s170
      %p182 = scmp.eq.s32.totalorder %s28, 4
      %p183 = por %p181, %p182
      %p185 = scmp.ne.s32.totalorder %s170, %s184
      %p186 = scmp.eq.s32.totalorder %s28, 0
      %p187 = por %p185, %p186
      %s189 = sadd.s32 %s188, 1
      %p192 = scmp.eq.s32.totalorder %s22, 4
      %p193 = scmp.ne.s32.totalorder %s188, %s190
      %p194 = scmp.eq.s32.totalorder %s22, 0
      %p195 = por %p193, %p194
      %p196 = scmp.ne.s32.totalorder %s188, %s190
      %p197 = scmp.eq.s32.totalorder %s27, 4
      %p198 = por %p196, %p197
      %p199 = scmp.ne.s32.totalorder %s190, %s191
      %p200 = scmp.eq.s32.totalorder %s27, 0
      %p201 = por %p199, %p200
      %p202 = scmp.ne.s32.totalorder %s190, %s191
      %p203 = scmp.eq.s32.totalorder %s28, 4
      %p204 = por %p202, %p203
      %p206 = scmp.ne.s32.totalorder %s191, %s205
      %p207 = scmp.eq.s32.totalorder %s28, 0
      %p208 = por %p206, %p207
      %s210 = sadd.s32 %s209, 1
      %p213 = scmp.eq.s32.totalorder %s22, 4
      %p214 = scmp.ne.s32.totalorder %s209, %s211
      %p215 = scmp.eq.s32.totalorder %s22, 0
      %p216 = por %p214, %p215
      %p217 = scmp.ne.s32.totalorder %s209, %s211
      %p218 = scmp.eq.s32.totalorder %s27, 4
      %p219 = por %p217, %p218
      %p220 = scmp.ne.s32.totalorder %s211, %s212
      %p221 = scmp.eq.s32.totalorder %s27, 0
      %p222 = por %p220, %p221
      %p223 = scmp.ne.s32.totalorder %s211, %s212
      %p224 = scmp.eq.s32.totalorder %s28, 4
      %p225 = por %p223, %p224
      %p227 = scmp.ne.s32.totalorder %s212, %s226
      %p228 = scmp.eq.s32.totalorder %s28, 0
      %p229 = por %p227, %p228
      %s231 = sadd.s32 %s230, 1
      %p234 = scmp.eq.s32.totalorder %s22, 4
      %p235 = scmp.ne.s32.totalorder %s230, %s232
      %p236 = scmp.eq.s32.totalorder %s22, 0
      %p237 = por %p235, %p236
      %p238 = scmp.ne.s32.totalorder %s230, %s232
      %p239 = scmp.eq.s32.totalorder %s27, 4
      %p240 = por %p238, %p239
      %p241 = scmp.ne.s32.totalorder %s232, %s233
      %p242 = scmp.eq.s32.totalorder %s27, 0
      %p243 = por %p241, %p242
      %p244 = scmp.ne.s32.totalorder %s232, %s233
      %p245 = scmp.eq.s32.totalorder %s28, 4
      %p246 = por %p244, %p245
      %p248 = scmp.ne.s32.totalorder %s233, %s247
      %p249 = scmp.eq.s32.totalorder %s28, 0
      %p250 = por %p248, %p249
      %s252 = sadd.s32 %s251, 1
      %p255 = scmp.eq.s32.totalorder %s22, 4
      %p256 = scmp.ne.s32.totalorder %s251, %s253
      %p257 = scmp.eq.s32.totalorder %s22, 0
      %p258 = por %p256, %p257
      %p259 = scmp.ne.s32.totalorder %s251, %s253
      %p260 = scmp.eq.s32.totalorder %s27, 4
      %p261 = por %p259, %p260
      %p262 = scmp.ne.s32.totalorder %s253, %s254
      %p263 = scmp.eq.s32.totalorder %s27, 0
      %p264 = por %p262, %p263
      %p265 = scmp.ne.s32.totalorder %s253, %s254
      %p266 = scmp.eq.s32.totalorder %s28, 4
      %p267 = por %p265, %p266
      %p269 = scmp.ne.s32.totalorder %s254, %s268
      %p270 = scmp.eq.s32.totalorder %s28, 0
      %p271 = por %p269, %p270
      %s273 = sadd.s32 %s272, 1
      %p276 = scmp.eq.s32.totalorder %s22, 4
      %p277 = scmp.ne.s32.totalorder %s272, %s274
      %p278 = scmp.eq.s32.totalorder %s22, 0
      %p279 = por %p277, %p278
      %p280 = scmp.ne.s32.totalorder %s272, %s274
      %p281 = scmp.eq.s32.totalorder %s27, 4
      %p282 = por %p280, %p281
      %p283 = scmp.ne.s32.totalorder %s274, %s275
      %p284 = scmp.eq.s32.totalorder %s27, 0
      %p285 = por %p283, %p284
      %p286 = scmp.ne.s32.totalorder %s274, %s275
      %p287 = scmp.eq.s32.totalorder %s28, 4
      %p288 = por %p286, %p287
      %p290 = scmp.ne.s32.totalorder %s275, %s289
      %p291 = scmp.eq.s32.totalorder %s28, 0
      %p292 = por %p290, %p291
      %s294 = sadd.s32 %s293, 1
      %p297 = scmp.eq.s32.totalorder %s22, 4
      %p298 = scmp.ne.s32.totalorder %s293, %s295
      %p299 = scmp.eq.s32.totalorder %s22, 0
      %p300 = por %p298, %p299
      %p301 = scmp.ne.s32.totalorder %s293, %s295
      %p302 = scmp.eq.s32.totalorder %s27, 4
      %p303 = por %p301, %p302
      %p304 = scmp.ne.s32.totalorder %s295, %s296
      %p305 = scmp.eq.s32.totalorder %s27, 0
      %p306 = por %p304, %p305
      %p307 = scmp.ne.s32.totalorder %s295, %s296
      %p308 = scmp.eq.s32.totalorder %s28, 4
      %p309 = por %p307, %p308
      %p311 = scmp.ne.s32.totalorder %s296, %s310
      %p312 = scmp.eq.s32.totalorder %s28, 0
      %p313 = por %p311, %p312
      %s315 = sadd.s32 %s314, 1
      %p318 = scmp.eq.s32.totalorder %s22, 4
      %p319 = scmp.ne.s32.totalorder %s314, %s316
      %p320 = scmp.eq.s32.totalorder %s22, 0
      %p321 = por %p319, %p320
      %p322 = scmp.ne.s32.totalorder %s314, %s316
      %p323 = scmp.eq.s32.totalorder %s27, 4
      %p324 = por %p322, %p323
      %p325 = scmp.ne.s32.totalorder %s316, %s317
      %p326 = scmp.eq.s32.totalorder %s27, 0
      %p327 = por %p325, %p326
      %p328 = scmp.ne.s32.totalorder %s316, %s317
      %p329 = scmp.eq.s32.totalorder %s28, 4
      %p330 = por %p328, %p329
      %p332 = scmp.ne.s32.totalorder %s317, %s331
      %p333 = scmp.eq.s32.totalorder %s28, 0
      %p334 = por %p332, %p333
      %s336 = sadd.s32 %s335, 1
      %p339 = scmp.eq.s32.totalorder %s22, 4
      %p340 = scmp.ne.s32.totalorder %s335, %s337
      %p341 = scmp.eq.s32.totalorder %s22, 0
      %p342 = por %p340, %p341
      %p343 = scmp.ne.s32.totalorder %s335, %s337
      %p344 = scmp.eq.s32.totalorder %s27, 4
      %p345 = por %p343, %p344
      %p346 = scmp.ne.s32.totalorder %s337, %s338
      %p347 = scmp.eq.s32.totalorder %s27, 0
      %p348 = por %p346, %p347
      %p349 = scmp.ne.s32.totalorder %s337, %s338
      %p350 = scmp.eq.s32.totalorder %s28, 4
      %p351 = por %p349, %p350
      %p353 = scmp.ne.s32.totalorder %s338, %s352
      %p354 = scmp.eq.s32.totalorder %s28, 0
      %p355 = por %p353, %p354
      %s357 = sadd.s32 %s356, 1
      %p360 = scmp.eq.s32.totalorder %s22, 4
      %p361 = scmp.ne.s32.totalorder %s356, %s358
      %p362 = scmp.eq.s32.totalorder %s22, 0
      %p363 = por %p361, %p362
      %p364 = scmp.ne.s32.totalorder %s356, %s358
      %p365 = scmp.eq.s32.totalorder %s27, 4
      %p366 = por %p364, %p365
      %p367 = scmp.ne.s32.totalorder %s358, %s359
      %p368 = scmp.eq.s32.totalorder %s27, 0
      %p369 = por %p367, %p368
      %p370 = scmp.ne.s32.totalorder %s358, %s359
      %p371 = scmp.eq.s32.totalorder %s28, 4
      %p372 = por %p370, %p371
      %p374 = scmp.ne.s32.totalorder %s359, %s373
      %p375 = scmp.eq.s32.totalorder %s28, 0
      %p376 = por %p374, %p375
      %p377 = scmp.le.s32.totalorder 1, %s22
      %p378 = scmp.lt.s32.totalorder %s22, 6
      %p379 = pnand %p377, %p378
      %p380 = pneg %p379
      // Predicated region
      $region9: #{graph_cnn_forward.1} parent=5 // pred_check
        _
      $region10: #{graph_cnn_forward.1} parent=5 // pred_check_branch
        %382 = sbr.rel (%p379) target = $region12
      $region11: #{graph_cnn_forward.1} parent=5 // pred_region
        %s383 = ssub.s32 %s22, 1
        // Predicated region
        $region13: #{graph_cnn_forward.1} parent=11 // pred_check
          %p384 = pneg %p43
        $region14: #{graph_cnn_forward.1} parent=11 // pred_check_branch
          %386 = sbr.rel (%p384) target = $region16
        $region15: #{graph_cnn_forward.1} parent=11 // pred_region
          _
        $region16: #{graph_cnn_forward.1} parent=11 // pred_fallthru
          _
        // Predicated region
        $region17: #{graph_cnn_forward.1} parent=11 // pred_check
          %p387 = pneg %p64
        $region18: #{graph_cnn_forward.1} parent=11 // pred_check_branch
          %389 = sbr.rel (%p387) target = $region20
        $region19: #{graph_cnn_forward.1} parent=11 // pred_region
          _
        $region20: #{graph_cnn_forward.1} parent=11 // pred_fallthru
          _
        // Predicated region
        $region21: #{graph_cnn_forward.1} parent=11 // pred_check
          %p390 = pneg %p85
        $region22: #{graph_cnn_forward.1} parent=11 // pred_check_branch
          %392 = sbr.rel (%p390) target = $region24
        $region23: #{graph_cnn_forward.1} parent=11 // pred_region
          _
        $region24: #{graph_cnn_forward.1} parent=11 // pred_fallthru
          _
        // Predicated region
        $region25: #{graph_cnn_forward.1} parent=11 // pred_check
          %p393 = pneg %p106
        $region26: #{graph_cnn_forward.1} parent=11 // pred_check_branch
          %395 = sbr.rel (%p393) target = $region28
        $region27: #{graph_cnn_forward.1} parent=11 // pred_region
          _
        $region28: #{graph_cnn_forward.1} parent=11 // pred_fallthru
          _
        // Predicated region
        $region29: #{graph_cnn_forward.1} parent=11 // pred_check
          %p396 = pneg %p159
        $region30: #{graph_cnn_forward.1} parent=11 // pred_check_branch
          %398 = sbr.rel (%p396) target = $region32
        $region31: #{graph_cnn_forward.1} parent=11 // pred_region
          _
        $region32: #{graph_cnn_forward.1} parent=11 // pred_fallthru
          _
        // Predicated region
        $region33: #{graph_cnn_forward.1} parent=11 // pred_check
          %p399 = pneg %p180
        $region34: #{graph_cnn_forward.1} parent=11 // pred_check_branch
          %401 = sbr.rel (%p399) target = $region36
        $region35: #{graph_cnn_forward.1} parent=11 // pred_region
          _
        $region36: #{graph_cnn_forward.1} parent=11 // pred_fallthru
          _
        // Predicated region
        $region37: #{graph_cnn_forward.1} parent=11 // pred_check
          %p402 = pneg %p201
        $region38: #{graph_cnn_forward.1} parent=11 // pred_check_branch
          %404 = sbr.rel (%p402) target = $region40
        $region39: #{graph_cnn_forward.1} parent=11 // pred_region
          _
        $region40: #{graph_cnn_forward.1} parent=11 // pred_fallthru
          _
        // Predicated region
        $region41: #{graph_cnn_forward.1} parent=11 // pred_check
          %p405 = pneg %p222
        $region42: #{graph_cnn_forward.1} parent=11 // pred_check_branch
          %407 = sbr.rel (%p405) target = $region44
        $region43: #{graph_cnn_forward.1} parent=11 // pred_region
          _
        $region44: #{graph_cnn_forward.1} parent=11 // pred_fallthru
          _
        // Predicated region
        $region45: #{graph_cnn_forward.1} parent=11 // pred_check
          %p408 = pneg %p243
        $region46: #{graph_cnn_forward.1} parent=11 // pred_check_branch
          %410 = sbr.rel (%p408) target = $region48
        $region47: #{graph_cnn_forward.1} parent=11 // pred_region
          _
        $region48: #{graph_cnn_forward.1} parent=11 // pred_fallthru
          _
        // Predicated region
        $region49: #{graph_cnn_forward.1} parent=11 // pred_check
          %p411 = pneg %p264
        $region50: #{graph_cnn_forward.1} parent=11 // pred_check_branch
          %413 = sbr.rel (%p411) target = $region52
        $region51: #{graph_cnn_forward.1} parent=11 // pred_region
          _
        $region52: #{graph_cnn_forward.1} parent=11 // pred_fallthru
          _
        // Predicated region
        $region53: #{graph_cnn_forward.1} parent=11 // pred_check
          %p414 = pneg %p285
        $region54: #{graph_cnn_forward.1} parent=11 // pred_check_branch
          %416 = sbr.rel (%p414) target = $region56
        $region55: #{graph_cnn_forward.1} parent=11 // pred_region
          _
        $region56: #{graph_cnn_forward.1} parent=11 // pred_fallthru
          _
        // Predicated region
        $region57: #{graph_cnn_forward.1} parent=11 // pred_check
          %p417 = pneg %p306
        $region58: #{graph_cnn_forward.1} parent=11 // pred_check_branch
          %419 = sbr.rel (%p417) target = $region60
        $region59: #{graph_cnn_forward.1} parent=11 // pred_region
          _
        $region60: #{graph_cnn_forward.1} parent=11 // pred_fallthru
          _
        // Predicated region
        $region61: #{graph_cnn_forward.1} parent=11 // pred_check
          %p420 = pneg %p327
        $region62: #{graph_cnn_forward.1} parent=11 // pred_check_branch
          %422 = sbr.rel (%p420) target = $region64
        $region63: #{graph_cnn_forward.1} parent=11 // pred_region
          _
        $region64: #{graph_cnn_forward.1} parent=11 // pred_fallthru
          _
        // Predicated region
        $region65: #{graph_cnn_forward.1} parent=11 // pred_check
          %p423 = pneg %p348
        $region66: #{graph_cnn_forward.1} parent=11 // pred_check_branch
          %425 = sbr.rel (%p423) target = $region68
        $region67: #{graph_cnn_forward.1} parent=11 // pred_region
          _
        $region68: #{graph_cnn_forward.1} parent=11 // pred_fallthru
          _
      $region12: #{graph_cnn_forward.1} parent=5 // pred_fallthru
        _
      %p426 = scmp.lt.s32.totalorder %s22, 5
      // Predicated region
      $region69: #{graph_cnn_forward.1} parent=5 // pred_check
        %p427 = pneg %p426
      $region70: #{graph_cnn_forward.1} parent=5 // pred_check_branch
        %429 = sbr.rel (%p427) target = $region72
      $region71: #{graph_cnn_forward.1} parent=5 // pred_region
        // Predicated region
        $region73: #{graph_cnn_forward.1} parent=71 // pred_check
          %p430 = pneg %p132
        $region74: #{graph_cnn_forward.1} parent=71 // pred_check_branch
          %432 = sbr.rel (%p430) target = $region76
        $region75: #{graph_cnn_forward.1} parent=71 // pred_region
          %s433 = ssub.s32 %s22, 1
          %p434 = scmp.gt.s32.totalorder %s433, 0
          %s435 = scalar_select %p434, %s433, 0
          %p436 = scmp.lt.s32.totalorder %s435, 3
          %s437 = scalar_select %p436, %s435, 3
          %s438 = smul.addr %s437, 32
          %s439 = smul.addr %s438, 4
          %s440 = scalar_lea.vmem %s4, %s439
          %s441 = ssub.s32 %s22, 1
          %p442 = scmp.gt.s32.totalorder %s441, 0
          %s443 = scalar_select %p442, %s441, 0
        $region76: #{graph_cnn_forward.1} parent=71 // pred_fallthru
          _
      $region72: #{graph_cnn_forward.1} parent=5 // pred_fallthru
        _
      %p444 = scmp.le.s32.totalorder 1, %s22
      %p445 = scmp.lt.s32.totalorder %s22, 6
      %p446 = pnand %p444, %p445
      %p447 = pneg %p446
      // Predicated region
      $region77: #{graph_cnn_forward.1} parent=5 // pred_check
        _
      $region78: #{graph_cnn_forward.1} parent=5 // pred_check_branch
        %449 = sbr.rel (%p446) target = $region80
      $region79: #{graph_cnn_forward.1} parent=5 // pred_region
        %s450 = ssub.s32 %s22, 1
        %p451 = pneg %p43
        %p452 = pneg %p40
        %p453 = pneg %p64
        %p454 = pneg %p61
        %p455 = pneg %p85
        %p456 = pneg %p82
        %p457 = pneg %p106
        %p458 = pneg %p103
        %s459 = ssub.s32 %s27, 1
        %p460 = scmp.gt.s32.totalorder %s459, 0
        %s461 = scalar_select %p460, %s459, 0
        %p462 = scmp.lt.s32.totalorder %s461, 3
        %s463 = scalar_select %p462, %s461, 3
        %s464 = smul.addr %s463, 32
        %s465 = smul.addr %s464, 4
        %s466 = scalar_lea.vmem %s4, %s465
        %p467 = pneg %p138
        %p468 = pneg %p135
        %p469 = pneg %p159
        %p470 = pneg %p156
        %p471 = pneg %p180
        %p472 = pneg %p177
        %p473 = pneg %p201
        %p474 = pneg %p198
        %p475 = pneg %p222
        %p476 = pneg %p219
        %p477 = pneg %p243
        %p478 = pneg %p240
        %p479 = pneg %p264
        %p480 = pneg %p261
        %p481 = pneg %p285
        %p482 = pneg %p282
        %p483 = pneg %p306
        %p484 = pneg %p303
        %p485 = pneg %p327
        %p486 = pneg %p324
        %p487 = pneg %p348
        %p488 = pneg %p345
        %p489 = pneg %p369
        %p490 = pneg %p366
        %s491 = ssub.s32 %s27, 1
        %p492 = scmp.gt.s32.totalorder %s491, 0
        %s493 = scalar_select %p492, %s491, 0
        %p494 = scmp.lt.s32.totalorder %s493, 3
        %s495 = scalar_select %p494, %s493, 3
        %s496 = smul.addr %s495, 32
        %s497 = smul.addr %s496, 4
        %s498 = scalar_lea.vmem %s4, %s497
        %s499 = ssub.s32 %s27, 1
        %p500 = scmp.gt.s32.totalorder %s499, 0
        %s501 = scalar_select %p500, %s499, 0
        %p503 = scmp.eq.s32.totalorder %s27, 0
        // Predicated region
        $region81: #{graph_cnn_forward.1} parent=79 // pred_check
          %p504 = pneg %p503
        $region82: #{graph_cnn_forward.1} parent=79 // pred_check_branch
          %506 = sbr.rel (%p504) target = $region84
        $region83: #{graph_cnn_forward.1} parent=79 // pred_region
          %v507 = vld [vmem:[%s2] sm:$0xf]
          %v508 = vld [vmem:[%s2 + $0x4] sm:$0xf]
          %v509 = vld [vmem:[%s2 + $0x8] sm:$0xf]
          %v510 = vld [vmem:[%s2 + $0xc] sm:$0xf]
          %v511 = vld [vmem:[%s2 + $0x10] sm:$0xf]
          %v512 = vld [vmem:[%s2 + $0x14] sm:$0xf]
          %v513 = vld [vmem:[%s2 + $0x18] sm:$0xf]
          %v514 = vld [vmem:[%s2 + $0x1c] sm:$0xf]
          %v515 = vld [vmem:[%s2 + $0x20] sm:$0xf]
          %v516 = vld [vmem:[%s2 + $0x24] sm:$0xf]
          %v517 = vld [vmem:[%s2 + $0x28] sm:$0xf]
          %v518 = vld [vmem:[%s2 + $0x2c] sm:$0xf]
          %v519 = vld [vmem:[%s2 + $0x30] sm:$0xf]
          %v520 = vld [vmem:[%s2 + $0x34] sm:$0xf]
          %v521 = vld [vmem:[%s2 + $0x38] sm:$0xf]
          %v522 = vld [vmem:[%s2 + $0x3c] sm:$0xf]
          %v523 = vld [vmem:[%s3] sm:$0xf]
          %v524 = vld [vmem:[%s3 + $0x4] sm:$0xf]
          %v525 = vld [vmem:[%s3 + $0x8] sm:$0xf]
          %v526 = vld [vmem:[%s3 + $0xc] sm:$0xf]
          %v527 = vld [vmem:[%s3 + $0x10] sm:$0xf]
          %v528 = vld [vmem:[%s3 + $0x14] sm:$0xf]
          %v529 = vld [vmem:[%s3 + $0x18] sm:$0xf]
          %v530 = vld [vmem:[%s3 + $0x1c] sm:$0xf]
          %v531 = vld [vmem:[%s3 + $0x20] sm:$0xf]
          %v532 = vld [vmem:[%s3 + $0x24] sm:$0xf]
          %v533 = vld [vmem:[%s3 + $0x28] sm:$0xf]
          %v534 = vld [vmem:[%s3 + $0x2c] sm:$0xf]
          %v535 = vld [vmem:[%s3 + $0x30] sm:$0xf]
          %v536 = vld [vmem:[%s3 + $0x34] sm:$0xf]
          %v537 = vld [vmem:[%s3 + $0x38] sm:$0xf]
          %v538 = vld [vmem:[%s3 + $0x3c] sm:$0xf]
          %v539 = vld [vmem:[%s3 + $0x40] sm:$0xf]
          %v540 = vld [vmem:[%s3 + $0x44] sm:$0xf]
          %v541 = vld [vmem:[%s3 + $0x48] sm:$0xf]
          %v542 = vld [vmem:[%s3 + $0x4c] sm:$0xf]
          %v543 = vld [vmem:[%s3 + $0x50] sm:$0xf]
          %v544 = vld [vmem:[%s3 + $0x54] sm:$0xf]
          %v545 = vld [vmem:[%s3 + $0x58] sm:$0xf]
          %v546 = vld [vmem:[%s3 + $0x5c] sm:$0xf]
          %v547 = vld [vmem:[%s3 + $0x60] sm:$0xf]
          %v548 = vld [vmem:[%s3 + $0x64] sm:$0xf]
          %v549 = vld [vmem:[%s3 + $0x68] sm:$0xf]
          %v550 = vld [vmem:[%s3 + $0x6c] sm:$0xf]
          %v551 = vld [vmem:[%s3 + $0x70] sm:$0xf]
          %v552 = vld [vmem:[%s3 + $0x74] sm:$0xf]
          %v553 = vld [vmem:[%s3 + $0x78] sm:$0xf]
          %v554 = vld [vmem:[%s3 + $0x7c] sm:$0xf]
          %v555 = vld [vmem:[%s5] sm:$0x1]
          %v556 = vld [vmem:[%s0] sm:$0xf]
          %v557 = vld [vmem:[%s0 + $0x4] sm:$0xf]
          %v558 = vld [vmem:[%s0 + $0x8] sm:$0xf]
          %v559 = vld [vmem:[%s0 + $0xc] sm:$0xf]
          %v560 = vld [vmem:[%s0 + $0x10] sm:$0xf]
          %v561 = vld [vmem:[%s0 + $0x14] sm:$0xf]
          %v562 = vld [vmem:[%s0 + $0x18] sm:$0xf]
          %v563 = vld [vmem:[%s0 + $0x1c] sm:$0xf]
          %v564 = vld [vmem:[%s0 + $0x20] sm:$0xf]
          %v565 = vld [vmem:[%s0 + $0x24] sm:$0xf]
          %v566 = vld [vmem:[%s0 + $0x28] sm:$0xf]
          %v567 = vld [vmem:[%s0 + $0x2c] sm:$0xf]
          %v568 = vld [vmem:[%s0 + $0x30] sm:$0xf]
          %v569 = vld [vmem:[%s0 + $0x34] sm:$0xf]
          %v570 = vld [vmem:[%s0 + $0x38] sm:$0xf]
          %v571 = vld [vmem:[%s0 + $0x3c] sm:$0xf]
          %v588 = vunpack.c.l.b16 %v556
          %v589 = vunpack.c.l.b16 %v557
          %v590 = vunpack.c.l.b16 %v558
          %v591 = vunpack.c.l.b16 %v559
          %v592 = vunpack.c.l.b16 %v560
          %v593 = vunpack.c.l.b16 %v561
          %v594 = vunpack.c.l.b16 %v562
          %v595 = vunpack.c.l.b16 %v563
          %v596 = vunpack.c.l.b16 %v564
          %v597 = vunpack.c.l.b16 %v565
          %v598 = vunpack.c.l.b16 %v566
          %v599 = vunpack.c.l.b16 %v567
          %v600 = vunpack.c.l.b16 %v568
          %v601 = vunpack.c.l.b16 %v569
          %v602 = vunpack.c.l.b16 %v570
          %v603 = vunpack.c.l.b16 %v571
          %v604 = vpack.c.b16 %v589, %v588
          %v605 = vpack.c.b16 %v591, %v590
          %v606 = vpack.c.b16 %v593, %v592
          %v607 = vpack.c.b16 %v595, %v594
          %v608 = vpack.c.b16 %v597, %v596
          %v609 = vpack.c.b16 %v599, %v598
          %v610 = vpack.c.b16 %v601, %v600
          %v611 = vpack.c.b16 %v603, %v602
          %v636 = vunpack.c.l.b16 %v507
          %v637 = vunpack.c.l.b16 %v508
          %v638 = vunpack.c.l.b16 %v509
          %v639 = vunpack.c.l.b16 %v510
          %v640 = vunpack.c.l.b16 %v511
          %v641 = vunpack.c.l.b16 %v512
          %v642 = vunpack.c.l.b16 %v513
          %v643 = vunpack.c.l.b16 %v514
          %v644 = vunpack.c.l.b16 %v515
          %v645 = vunpack.c.l.b16 %v516
          %v646 = vunpack.c.l.b16 %v517
          %v647 = vunpack.c.l.b16 %v518
          %v648 = vunpack.c.l.b16 %v519
          %v649 = vunpack.c.l.b16 %v520
          %v650 = vunpack.c.l.b16 %v521
          %v651 = vunpack.c.l.b16 %v522
          %v652 = vpack.c.b16 %v637, %v636
          %v653 = vpack.c.b16 %v639, %v638
          %v654 = vpack.c.b16 %v641, %v640
          %v655 = vpack.c.b16 %v643, %v642
          %v656 = vpack.c.b16 %v645, %v644
          %v657 = vpack.c.b16 %v647, %v646
          %v658 = vpack.c.b16 %v649, %v648
          %v659 = vpack.c.b16 %v651, %v650
          %668 = vmatprep.subr.bf16.mxu0 0
          %669 = vmatpush1.bf16.msra.mxu0 %v652
          %670 = vmatprep.subr.bf16.mxu0 0
          %671 = vmatpush1.bf16.msra.mxu0 %v653
          %672 = vmatprep.subr.bf16.mxu0 0
          %673 = vmatpush1.bf16.msra.mxu0 %v654
          %674 = vmatprep.subr.bf16.mxu0 0
          %675 = vmatpush1.bf16.msra.mxu0 %v655
          %676 = vmatprep.subr.bf16.mxu0 0
          %677 = vmatpush1.bf16.msra.mxu0 %v656
          %678 = vmatprep.subr.bf16.mxu0 0
          %679 = vmatpush1.bf16.msra.mxu0 %v657
          %680 = vmatprep.subr.bf16.mxu0 0
          %681 = vmatpush1.bf16.msra.mxu0 %v658
          %682 = vmatprep.subr.bf16.mxu0 0
          %683 = vmatpush1.bf16.msra.mxu0 %v659
          %684 = vmatprep.subr.bf16.mxu0 0
          %685 = vmatpush1.bf16.msra.mxu0 0
          %686 = vmatprep.subr.bf16.mxu0 0
          %687 = vmatpush1.bf16.msra.mxu0 0
          %688 = vmatprep.subr.bf16.mxu0 0
          %689 = vmatpush1.bf16.msra.mxu0 0
          %690 = vmatprep.subr.bf16.mxu0 0
          %691 = vmatpush1.bf16.msra.mxu0 0
          %692 = vmatprep.subr.bf16.mxu0 0
          %693 = vmatpush1.bf16.msra.mxu0 0
          %694 = vmatprep.subr.bf16.mxu0 0
          %695 = vmatpush1.bf16.msra.mxu0 0
          %696 = vmatprep.subr.bf16.mxu0 0
          %697 = vmatpush1.bf16.msra.mxu0 0
          %698 = vmatprep.subr.bf16.mxu0 0
          %699 = vmatpush1.bf16.msra.mxu0 0
          %700 = vmatprep.mubr.bf16.mxu0 0
          %701 = vmatmul.mubr.bf16.gmra.mrb[0].mxu0 %v604
          %v702 = vpop.f32.mrb[0].mxu0
          %v703 = vadd.f32 0.0, %v702
          %v704 = vpop.f32.mrb[0].mxu0
          %v705 = vpop.f32.mrb[0].mxu0
          %v706 = vadd.f32 0.0, %v705
          %v707 = vpop.f32.mrb[0].mxu0
          %708 = vmatprep.mubr.bf16.mxu0 0
          %709 = vmatmul.mubr.bf16.gmra.mrb[0].mxu0 %v605
          %v710 = vpop.f32.mrb[0].mxu0
          %v711 = vadd.f32 0.0, %v710
          %v712 = vpop.f32.mrb[0].mxu0
          %v713 = vpop.f32.mrb[0].mxu0
          %v714 = vadd.f32 0.0, %v713
          %v715 = vpop.f32.mrb[0].mxu0
          %716 = vmatprep.mubr.bf16.mxu0 0
          %717 = vmatmul.mubr.bf16.gmra.mrb[0].mxu0 %v606
          %v718 = vpop.f32.mrb[0].mxu0
          %v719 = vadd.f32 0.0, %v718
          %v720 = vpop.f32.mrb[0].mxu0
          %v721 = vpop.f32.mrb[0].mxu0
          %v722 = vadd.f32 0.0, %v721
          %v723 = vpop.f32.mrb[0].mxu0
          %724 = vmatprep.mubr.bf16.mxu0 0
          %725 = vmatmul.mubr.bf16.gmra.mrb[0].mxu0 %v607
          %v726 = vpop.f32.mrb[0].mxu0
          %v727 = vadd.f32 0.0, %v726
          %v728 = vpop.f32.mrb[0].mxu0
          %v729 = vpop.f32.mrb[0].mxu0
          %v730 = vadd.f32 0.0, %v729
          %v731 = vpop.f32.mrb[0].mxu0
          %732 = vmatprep.mubr.bf16.mxu0 0
          %733 = vmatmul.mubr.bf16.gmra.mrb[0].mxu0 %v608
          %v734 = vpop.f32.mrb[0].mxu0
          %v735 = vadd.f32 0.0, %v734
          %v736 = vpop.f32.mrb[0].mxu0
          %v737 = vpop.f32.mrb[0].mxu0
          %v738 = vadd.f32 0.0, %v737
          %v739 = vpop.f32.mrb[0].mxu0
          %740 = vmatprep.mubr.bf16.mxu0 0
          %741 = vmatmul.mubr.bf16.gmra.mrb[0].mxu0 %v609
          %v742 = vpop.f32.mrb[0].mxu0
          %v743 = vadd.f32 0.0, %v742
          %v744 = vpop.f32.mrb[0].mxu0
          %v745 = vpop.f32.mrb[0].mxu0
          %v746 = vadd.f32 0.0, %v745
          %v747 = vpop.f32.mrb[0].mxu0
          %748 = vmatprep.mubr.bf16.mxu0 0
          %749 = vmatmul.mubr.bf16.gmra.mrb[0].mxu0 %v610
          %v750 = vpop.f32.mrb[0].mxu0
          %v751 = vadd.f32 0.0, %v750
          %v752 = vpop.f32.mrb[0].mxu0
          %v753 = vpop.f32.mrb[0].mxu0
          %v754 = vadd.f32 0.0, %v753
          %v755 = vpop.f32.mrb[0].mxu0
          %756 = vmatprep.mubr.bf16.mxu0 0
          %757 = vmatmul.mubr.bf16.gmra.mrb[0].mxu0 %v611
          %v758 = vpop.f32.mrb[0].mxu0
          %v759 = vadd.f32 0.0, %v758
          %v760 = vpop.f32.mrb[0].mxu0
          %v761 = vpop.f32.mrb[0].mxu0
          %v762 = vadd.f32 0.0, %v761
          %v763 = vpop.f32.mrb[0].mxu0
          %764 = vdwg.mxu0
          %v765 = vld [vmem:[%s1] sm:$0xff]
          %v766 = vld [vmem:[%s1 + $0x8] sm:$0xff]
          %v767 = vld [vmem:[%s1 + $0x10] sm:$0xff]
          %v768 = vld [vmem:[%s1 + $0x18] sm:$0xff]
          %v769 = vld [vmem:[%s1 + $0x20] sm:$0xff]
          %v770 = vld [vmem:[%s1 + $0x28] sm:$0xff]
          %v771 = vld [vmem:[%s1 + $0x30] sm:$0xff]
          %v772 = vld [vmem:[%s1 + $0x38] sm:$0xff]
          %v773 = vld [vmem:[%s1 + $0x40] sm:$0xff]
          %v774 = vld [vmem:[%s1 + $0x48] sm:$0xff]
          %v775 = vld [vmem:[%s1 + $0x50] sm:$0xff]
          %v776 = vld [vmem:[%s1 + $0x58] sm:$0xff]
          %v777 = vld [vmem:[%s1 + $0x60] sm:$0xff]
          %v778 = vld [vmem:[%s1 + $0x68] sm:$0xff]
          %v779 = vld [vmem:[%s1 + $0x70] sm:$0xff]
          %v780 = vld [vmem:[%s1 + $0x78] sm:$0xff]
          %782 = vset.pattern.permute.xlu0 0
          %783 = vperm.xlu0 %782, %v765
          %v784 = vpop.permute.xlu0 %783
          %787 = vset.pattern.permute.xlu0 0
          %788 = vperm.xlu0 %787, %v766
          %v789 = vpop.permute.xlu0 %788
          %792 = vset.pattern.permute.xlu0 0
          %793 = vperm.xlu0 %792, %v767
          %v794 = vpop.permute.xlu0 %793
          %797 = vset.pattern.permute.xlu0 0
          %798 = vperm.xlu0 %797, %v768
          %v799 = vpop.permute.xlu0 %798
          %802 = vset.pattern.permute.xlu0 0
          %803 = vperm.xlu0 %802, %v769
          %v804 = vpop.permute.xlu0 %803
          %807 = vset.pattern.permute.xlu0 0
          %808 = vperm.xlu0 %807, %v770
          %v809 = vpop.permute.xlu0 %808
          %812 = vset.pattern.permute.xlu0 0
          %813 = vperm.xlu0 %812, %v771
          %v814 = vpop.permute.xlu0 %813
          %817 = vset.pattern.permute.xlu0 0
          %818 = vperm.xlu0 %817, %v772
          %v819 = vpop.permute.xlu0 %818
          %822 = vset.pattern.permute.xlu0 0
          %823 = vperm.xlu0 %822, %v773
          %v824 = vpop.permute.xlu0 %823
          %827 = vset.pattern.permute.xlu0 0
          %828 = vperm.xlu0 %827, %v774
          %v829 = vpop.permute.xlu0 %828
          %832 = vset.pattern.permute.xlu0 0
          %833 = vperm.xlu0 %832, %v775
          %v834 = vpop.permute.xlu0 %833
          %837 = vset.pattern.permute.xlu0 0
          %838 = vperm.xlu0 %837, %v776
          %v839 = vpop.permute.xlu0 %838
          %842 = vset.pattern.permute.xlu0 0
          %843 = vperm.xlu0 %842, %v777
          %v844 = vpop.permute.xlu0 %843
          %847 = vset.pattern.permute.xlu0 0
          %848 = vperm.xlu0 %847, %v778
          %v849 = vpop.permute.xlu0 %848
          %852 = vset.pattern.permute.xlu0 0
          %853 = vperm.xlu0 %852, %v779
          %v854 = vpop.permute.xlu0 %853
          %857 = vset.pattern.permute.xlu0 0
          %858 = vperm.xlu0 %857, %v780
          %v859 = vpop.permute.xlu0 %858
          %v861 = vmul.f32 %v703, %v784
          %v862 = vmul.f32 %v706, %v789
          %v863 = vmul.f32 %v711, %v794
          %v864 = vmul.f32 %v714, %v799
          %v865 = vmul.f32 %v719, %v804
          %v866 = vmul.f32 %v722, %v809
          %v867 = vmul.f32 %v727, %v814
          %v868 = vmul.f32 %v730, %v819
          %v869 = vmul.f32 %v735, %v824
          %v870 = vmul.f32 %v738, %v829
          %v871 = vmul.f32 %v743, %v834
          %v872 = vmul.f32 %v746, %v839
          %v873 = vmul.f32 %v751, %v844
          %v874 = vmul.f32 %v754, %v849
          %v875 = vmul.f32 %v759, %v854
          %v876 = vmul.f32 %v762, %v859
          %v877 = vpack.c.bf16 %v862, %v861
          %v878 = vpack.c.bf16 %v864, %v863
          %v879 = vpack.c.bf16 %v866, %v865
          %v880 = vpack.c.bf16 %v868, %v867
          %v881 = vpack.c.bf16 %v870, %v869
          %v882 = vpack.c.bf16 %v872, %v871
          %v883 = vpack.c.bf16 %v874, %v873
          %v884 = vpack.c.bf16 %v876, %v875
          %v901 = vunpack.c.l.b16 %v523
          %v902 = vunpack.c.l.b16 %v524
          %v903 = vunpack.c.l.b16 %v525
          %v904 = vunpack.c.l.b16 %v526
          %v905 = vunpack.c.l.b16 %v527
          %v906 = vunpack.c.l.b16 %v528
          %v907 = vunpack.c.l.b16 %v529
          %v908 = vunpack.c.l.b16 %v530
          %v909 = vunpack.c.l.b16 %v531
          %v910 = vunpack.c.l.b16 %v532
          %v911 = vunpack.c.l.b16 %v533
          %v912 = vunpack.c.l.b16 %v534
          %v913 = vunpack.c.l.b16 %v535
          %v914 = vunpack.c.l.b16 %v536
          %v915 = vunpack.c.l.b16 %v537
          %v916 = vunpack.c.l.b16 %v538
          %v917 = vpack.c.b16 %v902, %v901
          %v918 = vpack.c.b16 %v904, %v903
          %v919 = vpack.c.b16 %v906, %v905
          %v920 = vpack.c.b16 %v908, %v907
          %v921 = vpack.c.b16 %v910, %v909
          %v922 = vpack.c.b16 %v912, %v911
          %v923 = vpack.c.b16 %v914, %v913
          %v924 = vpack.c.b16 %v916, %v915
          %933 = vmatprep.subr.bf16.mxu0 0
          %934 = vmatpush1.bf16.msra.mxu0 %v917
          %935 = vmatprep.subr.bf16.mxu0 0
          %936 = vmatpush1.bf16.msra.mxu0 %v918
          %937 = vmatprep.subr.bf16.mxu0 0
          %938 = vmatpush1.bf16.msra.mxu0 %v919
          %939 = vmatprep.subr.bf16.mxu0 0
          %940 = vmatpush1.bf16.msra.mxu0 %v920
          %941 = vmatprep.subr.bf16.mxu0 0
          %942 = vmatpush1.bf16.msra.mxu0 %v921
          %943 = vmatprep.subr.bf16.mxu0 0
          %944 = vmatpush1.bf16.msra.mxu0 %v922
          %945 = vmatprep.subr.bf16.mxu0 0
          %946 = vmatpush1.bf16.msra.mxu0 %v923
          %947 = vmatprep.subr.bf16.mxu0 0
          %948 = vmatpush1.bf16.msra.mxu0 %v924
          %949 = vmatprep.subr.bf16.mxu0 0
          %950 = vmatpush1.bf16.msra.mxu0 0
          %951 = vmatprep.subr.bf16.mxu0 0
          %952 = vmatpush1.bf16.msra.mxu0 0
          %953 = vmatprep.subr.bf16.mxu0 0
          %954 = vmatpush1.bf16.msra.mxu0 0
          %955 = vmatprep.subr.bf16.mxu0 0
          %956 = vmatpush1.bf16.msra.mxu0 0
          %957 = vmatprep.subr.bf16.mxu0 0
          %958 = vmatpush1.bf16.msra.mxu0 0
          %959 = vmatprep.subr.bf16.mxu0 0
          %960 = vmatpush1.bf16.msra.mxu0 0
          %961 = vmatprep.subr.bf16.mxu0 0
          %962 = vmatpush1.bf16.msra.mxu0 0
          %963 = vmatprep.subr.bf16.mxu0 0
          %964 = vmatpush1.bf16.msra.mxu0 0
          %965 = vmatprep.mubr.bf16.mxu0 0
          %966 = vmatmul.mubr.bf16.gmra.mrb[0].mxu0 %v877
          %v967 = vpop.f32.mrb[0].mxu0
          %v968 = vadd.f32 0.0, %v967
          %v969 = vpop.f32.mrb[0].mxu0
          %v970 = vpop.f32.mrb[0].mxu0
          %v971 = vadd.f32 0.0, %v970
          %v972 = vpop.f32.mrb[0].mxu0
          %973 = vmatprep.mubr.bf16.mxu0 0
          %974 = vmatmul.mubr.bf16.gmra.mrb[0].mxu0 %v878
          %v975 = vpop.f32.mrb[0].mxu0
          %v976 = vadd.f32 0.0, %v975
          %v977 = vpop.f32.mrb[0].mxu0
          %v978 = vpop.f32.mrb[0].mxu0
          %v979 = vadd.f32 0.0, %v978
          %v980 = vpop.f32.mrb[0].mxu0
          %981 = vmatprep.mubr.bf16.mxu0 0
          %982 = vmatmul.mubr.bf16.gmra.mrb[0].mxu0 %v879
          %v983 = vpop.f32.mrb[0].mxu0
          %v984 = vadd.f32 0.0, %v983
          %v985 = vpop.f32.mrb[0].mxu0
          %v986 = vpop.f32.mrb[0].mxu0
          %v987 = vadd.f32 0.0, %v986
          %v988 = vpop.f32.mrb[0].mxu0
          %989 = vmatprep.mubr.bf16.mxu0 0
          %990 = vmatmul.mubr.bf16.gmra.mrb[0].mxu0 %v880
          %v991 = vpop.f32.mrb[0].mxu0
          %v992 = vadd.f32 0.0, %v991
          %v993 = vpop.f32.mrb[0].mxu0
          %v994 = vpop.f32.mrb[0].mxu0
          %v995 = vadd.f32 0.0, %v994
          %v996 = vpop.f32.mrb[0].mxu0
          %997 = vmatprep.mubr.bf16.mxu0 0
          %998 = vmatmul.mubr.bf16.gmra.mrb[0].mxu0 %v881
          %v999 = vpop.f32.mrb[0].mxu0
          %v1000 = vadd.f32 0.0, %v999
          %v1001 = vpop.f32.mrb[0].mxu0
          %v1002 = vpop.f32.mrb[0].mxu0
          %v1003 = vadd.f32 0.0, %v1002
          %v1004 = vpop.f32.mrb[0].mxu0
          %1005 = vmatprep.mubr.bf16.mxu0 0
          %1006 = vmatmul.mubr.bf16.gmra.mrb[0].mxu0 %v882
          %v1007 = vpop.f32.mrb[0].mxu0
          %v1008 = vadd.f32 0.0, %v1007
          %v1009 = vpop.f32.mrb[0].mxu0
          %v1010 = vpop.f32.mrb[0].mxu0
          %v1011 = vadd.f32 0.0, %v1010
          %v1012 = vpop.f32.mrb[0].mxu0
          %1013 = vmatprep.mubr.bf16.mxu0 0
          %1014 = vmatmul.mubr.bf16.gmra.mrb[0].mxu0 %v883
          %v1015 = vpop.f32.mrb[0].mxu0
          %v1016 = vadd.f32 0.0, %v1015
          %v1017 = vpop.f32.mrb[0].mxu0
          %v1018 = vpop.f32.mrb[0].mxu0
          %v1019 = vadd.f32 0.0, %v1018
          %v1020 = vpop.f32.mrb[0].mxu0
          %1021 = vmatprep.mubr.bf16.mxu0 0
          %1022 = vmatmul.mubr.bf16.gmra.mrb[0].mxu0 %v884
          %v1023 = vpop.f32.mrb[0].mxu0
          %v1024 = vadd.f32 0.0, %v1023
          %v1025 = vpop.f32.mrb[0].mxu0
          %v1026 = vpop.f32.mrb[0].mxu0
          %v1027 = vadd.f32 0.0, %v1026
          %v1028 = vpop.f32.mrb[0].mxu0
          %1029 = vdwg.mxu0
          %v1046 = vunpack.c.l.b16 %v539
          %v1047 = vunpack.c.l.b16 %v540
          %v1048 = vunpack.c.l.b16 %v541
          %v1049 = vunpack.c.l.b16 %v542
          %v1050 = vunpack.c.l.b16 %v543
          %v1051 = vunpack.c.l.b16 %v544
          %v1052 = vunpack.c.l.b16 %v545
          %v1053 = vunpack.c.l.b16 %v546
          %v1054 = vunpack.c.l.b16 %v547
          %v1055 = vunpack.c.l.b16 %v548
          %v1056 = vunpack.c.l.b16 %v549
          %v1057 = vunpack.c.l.b16 %v550
          %v1058 = vunpack.c.l.b16 %v551
          %v1059 = vunpack.c.l.b16 %v552
          %v1060 = vunpack.c.l.b16 %v553
          %v1061 = vunpack.c.l.b16 %v554
          %v1062 = vpack.c.b16 %v1047, %v1046
          %v1063 = vpack.c.b16 %v1049, %v1048
          %v1064 = vpack.c.b16 %v1051, %v1050
          %v1065 = vpack.c.b16 %v1053, %v1052
          %v1066 = vpack.c.b16 %v1055, %v1054
          %v1067 = vpack.c.b16 %v1057, %v1056
          %v1068 = vpack.c.b16 %v1059, %v1058
          %v1069 = vpack.c.b16 %v1061, %v1060
          %1078 = vmatprep.subr.bf16.mxu0 0
          %1079 = vmatpush1.bf16.msra.mxu0 %v1062
          %1080 = vmatprep.subr.bf16.mxu0 0
          %1081 = vmatpush1.bf16.msra.mxu0 %v1063
          %1082 = vmatprep.subr.bf16.mxu0 0
          %1083 = vmatpush1.bf16.msra.mxu0 %v1064
          %1084 = vmatprep.subr.bf16.mxu0 0
          %1085 = vmatpush1.bf16.msra.mxu0 %v1065
          %1086 = vmatprep.subr.bf16.mxu0 0
          %1087 = vmatpush1.bf16.msra.mxu0 %v1066
          %1088 = vmatprep.subr.bf16.mxu0 0
          %1089 = vmatpush1.bf16.msra.mxu0 %v1067
          %1090 = vmatprep.subr.bf16.mxu0 0
          %1091 = vmatpush1.bf16.msra.mxu0 %v1068
          %1092 = vmatprep.subr.bf16.mxu0 0
          %1093 = vmatpush1.bf16.msra.mxu0 %v1069
          %1094 = vmatprep.subr.bf16.mxu0 0
          %1095 = vmatpush1.bf16.msra.mxu0 0
          %1096 = vmatprep.subr.bf16.mxu0 0
          %1097 = vmatpush1.bf16.msra.mxu0 0
          %1098 = vmatprep.subr.bf16.mxu0 0
          %1099 = vmatpush1.bf16.msra.mxu0 0
          %1100 = vmatprep.subr.bf16.mxu0 0
          %1101 = vmatpush1.bf16.msra.mxu0 0
          %1102 = vmatprep.subr.bf16.mxu0 0
          %1103 = vmatpush1.bf16.msra.mxu0 0
          %1104 = vmatprep.subr.bf16.mxu0 0
          %1105 = vmatpush1.bf16.msra.mxu0 0
          %1106 = vmatprep.subr.bf16.mxu0 0
          %1107 = vmatpush1.bf16.msra.mxu0 0
          %1108 = vmatprep.subr.bf16.mxu0 0
          %1109 = vmatpush1.bf16.msra.mxu0 0
          %1110 = vmatprep.mubr.bf16.mxu0 0
          %1111 = vmatmul.mubr.bf16.gmra.mrb[0].mxu0 %v652
          %v1112 = vpop.f32.mrb[0].mxu0
          %v1113 = vadd.f32 %v968, %v1112
          %v1114 = vpop.f32.mrb[0].mxu0
          %v1115 = vpop.f32.mrb[0].mxu0
          %v1116 = vadd.f32 %v971, %v1115
          %v1117 = vpop.f32.mrb[0].mxu0
          %1118 = vmatprep.mubr.bf16.mxu0 0
          %1119 = vmatmul.mubr.bf16.gmra.mrb[0].mxu0 %v653
          %v1120 = vpop.f32.mrb[0].mxu0
          %v1121 = vadd.f32 %v976, %v1120
          %v1122 = vpop.f32.mrb[0].mxu0
          %v1123 = vpop.f32.mrb[0].mxu0
          %v1124 = vadd.f32 %v979, %v1123
          %v1125 = vpop.f32.mrb[0].mxu0
          %1126 = vmatprep.mubr.bf16.mxu0 0
          %1127 = vmatmul.mubr.bf16.gmra.mrb[0].mxu0 %v654
          %v1128 = vpop.f32.mrb[0].mxu0
          %v1129 = vadd.f32 %v984, %v1128
          %v1130 = vpop.f32.mrb[0].mxu0
          %v1131 = vpop.f32.mrb[0].mxu0
          %v1132 = vadd.f32 %v987, %v1131
          %v1133 = vpop.f32.mrb[0].mxu0
          %1134 = vmatprep.mubr.bf16.mxu0 0
          %1135 = vmatmul.mubr.bf16.gmra.mrb[0].mxu0 %v655
          %v1136 = vpop.f32.mrb[0].mxu0
          %v1137 = vadd.f32 %v992, %v1136
          %v1138 = vpop.f32.mrb[0].mxu0
          %v1139 = vpop.f32.mrb[0].mxu0
          %v1140 = vadd.f32 %v995, %v1139
          %v1141 = vpop.f32.mrb[0].mxu0
          %1142 = vmatprep.mubr.bf16.mxu0 0
          %1143 = vmatmul.mubr.bf16.gmra.mrb[0].mxu0 %v656
          %v1144 = vpop.f32.mrb[0].mxu0
          %v1145 = vadd.f32 %v1000, %v1144
          %v1146 = vpop.f32.mrb[0].mxu0
          %v1147 = vpop.f32.mrb[0].mxu0
          %v1148 = vadd.f32 %v1003, %v1147
          %v1149 = vpop.f32.mrb[0].mxu0
          %1150 = vmatprep.mubr.bf16.mxu0 0
          %1151 = vmatmul.mubr.bf16.gmra.mrb[0].mxu0 %v657
          %v1152 = vpop.f32.mrb[0].mxu0
          %v1153 = vadd.f32 %v1008, %v1152
          %v1154 = vpop.f32.mrb[0].mxu0
          %v1155 = vpop.f32.mrb[0].mxu0
          %v1156 = vadd.f32 %v1011, %v1155
          %v1157 = vpop.f32.mrb[0].mxu0
          %1158 = vmatprep.mubr.bf16.mxu0 0
          %1159 = vmatmul.mubr.bf16.gmra.mrb[0].mxu0 %v658
          %v1160 = vpop.f32.mrb[0].mxu0
          %v1161 = vadd.f32 %v1016, %v1160
          %v1162 = vpop.f32.mrb[0].mxu0
          %v1163 = vpop.f32.mrb[0].mxu0
          %v1164 = vadd.f32 %v1019, %v1163
          %v1165 = vpop.f32.mrb[0].mxu0
          %1166 = vmatprep.mubr.bf16.mxu0 0
          %1167 = vmatmul.mubr.bf16.gmra.mrb[0].mxu0 %v659
          %v1168 = vpop.f32.mrb[0].mxu0
          %v1169 = vadd.f32 %v1024, %v1168
          %v1170 = vpop.f32.mrb[0].mxu0
          %v1171 = vpop.f32.mrb[0].mxu0
          %v1172 = vadd.f32 %v1027, %v1171
          %v1173 = vpop.f32.mrb[0].mxu0
          %1174 = vdwg.mxu0
          %v1176 = vlaneseq
          %v1177 = vshrl.u32 %v1176, 7
          %v1178 = vsub.s32 0, %v1177
          %v1179 = vrot.slane %v555, %v1178
          %v1181 = vadd.f32 %v1113, %v1179
          %v1182 = vadd.f32 %v1116, %v1179
          %v1183 = vadd.f32 %v1121, %v1179
          %v1184 = vadd.f32 %v1124, %v1179
          %v1185 = vadd.f32 %v1129, %v1179
          %v1186 = vadd.f32 %v1132, %v1179
          %v1187 = vadd.f32 %v1137, %v1179
          %v1188 = vadd.f32 %v1140, %v1179
          %v1189 = vadd.f32 %v1145, %v1179
          %v1190 = vadd.f32 %v1148, %v1179
          %v1191 = vadd.f32 %v1153, %v1179
          %v1192 = vadd.f32 %v1156, %v1179
          %v1193 = vadd.f32 %v1161, %v1179
          %v1194 = vadd.f32 %v1164, %v1179
          %v1195 = vadd.f32 %v1169, %v1179
          %v1196 = vadd.f32 %v1172, %v1179
          %v1197 = vtanh.pop %v1181
          %v1198 = vtanh.pop %v1182
          %v1199 = vtanh.pop %v1183
          %v1200 = vtanh.pop %v1184
          %v1201 = vtanh.pop %v1185
          %v1202 = vtanh.pop %v1186
          %v1203 = vtanh.pop %v1187
          %v1204 = vtanh.pop %v1188
          %v1205 = vtanh.pop %v1189
          %v1206 = vtanh.pop %v1190
          %v1207 = vtanh.pop %v1191
          %v1208 = vtanh.pop %v1192
          %v1209 = vtanh.pop %v1193
          %v1210 = vtanh.pop %v1194
          %v1211 = vtanh.pop %v1195
          %v1212 = vtanh.pop %v1196
          %v1213 = vpack.c.bf16 %v1198, %v1197
          %v1214 = vpack.c.bf16 %v1200, %v1199
          %v1215 = vpack.c.bf16 %v1202, %v1201
          %v1216 = vpack.c.bf16 %v1204, %v1203
          %v1217 = vpack.c.bf16 %v1206, %v1205
          %v1218 = vpack.c.bf16 %v1208, %v1207
          %v1219 = vpack.c.bf16 %v1210, %v1209
          %v1220 = vpack.c.bf16 %v1212, %v1211
          %1221 = vst [vmem:[#allocation2] sm:$0xff] %v1213
          %1222 = vst [vmem:[#allocation2 + $0x8] sm:$0xff] %v1214
          %1223 = vst [vmem:[#allocation2 + $0x10] sm:$0xff] %v1215
          %1224 = vst [vmem:[#allocation2 + $0x18] sm:$0xff] %v1216
          %1225 = vst [vmem:[#allocation2 + $0x20] sm:$0xff] %v1217
          %1226 = vst [vmem:[#allocation2 + $0x28] sm:$0xff] %v1218
          %1227 = vst [vmem:[#allocation2 + $0x30] sm:$0xff] %v1219
          %1228 = vst [vmem:[#allocation2 + $0x38] sm:$0xff] %v1220
        $region84: #{graph_cnn_forward.1} parent=79 // pred_fallthru
          _
        %p1229 = scmp.gt.s32.totalorder %s27, 0
        // Predicated region
        $region85: #{graph_cnn_forward.1} parent=79 // pred_check
          %p1230 = pneg %p1229
        $region86: #{graph_cnn_forward.1} parent=79 // pred_check_branch
          %1232 = sbr.rel (%p1230) target = $region88
        $region87: #{graph_cnn_forward.1} parent=79 // pred_region
          %v1233 = vld [vmem:[#allocation2] sm:$0xff]
          %v1234 = vld [vmem:[#allocation2 + $0x8] sm:$0xff]
          %v1235 = vld [vmem:[#allocation2 + $0x10] sm:$0xff]
          %v1236 = vld [vmem:[#allocation2 + $0x18] sm:$0xff]
          %v1237 = vld [vmem:[#allocation2 + $0x20] sm:$0xff]
          %v1238 = vld [vmem:[#allocation2 + $0x28] sm:$0xff]
          %v1239 = vld [vmem:[#allocation2 + $0x30] sm:$0xff]
          %v1240 = vld [vmem:[#allocation2 + $0x38] sm:$0xff]
          %v1241 = vld [vmem:[%s498] sm:$0xf]
          %v1242 = vld [vmem:[%s498 + $0x4] sm:$0xf]
          %v1243 = vld [vmem:[%s498 + $0x8] sm:$0xf]
          %v1244 = vld [vmem:[%s498 + $0xc] sm:$0xf]
          %v1245 = vld [vmem:[%s498 + $0x10] sm:$0xf]
          %v1246 = vld [vmem:[%s498 + $0x14] sm:$0xf]
          %v1247 = vld [vmem:[%s498 + $0x18] sm:$0xf]
          %v1248 = vld [vmem:[%s498 + $0x1c] sm:$0xf]
          %v1249 = vld [vmem:[%s498 + $0x20] sm:$0xf]
          %v1250 = vld [vmem:[%s498 + $0x24] sm:$0xf]
          %v1251 = vld [vmem:[%s498 + $0x28] sm:$0xf]
          %v1252 = vld [vmem:[%s498 + $0x2c] sm:$0xf]
          %v1253 = vld [vmem:[%s498 + $0x30] sm:$0xf]
          %v1254 = vld [vmem:[%s498 + $0x34] sm:$0xf]
          %v1255 = vld [vmem:[%s498 + $0x38] sm:$0xf]
          %v1256 = vld [vmem:[%s498 + $0x3c] sm:$0xf]
          %v1257 = vld [vmem:[%s498 + $0x40] sm:$0xf]
          %v1258 = vld [vmem:[%s498 + $0x44] sm:$0xf]
          %v1259 = vld [vmem:[%s498 + $0x48] sm:$0xf]
          %v1260 = vld [vmem:[%s498 + $0x4c] sm:$0xf]
          %v1261 = vld [vmem:[%s498 + $0x50] sm:$0xf]
          %v1262 = vld [vmem:[%s498 + $0x54] sm:$0xf]
          %v1263 = vld [vmem:[%s498 + $0x58] sm:$0xf]
          %v1264 = vld [vmem:[%s498 + $0x5c] sm:$0xf]
          %v1265 = vld [vmem:[%s498 + $0x60] sm:$0xf]
          %v1266 = vld [vmem:[%s498 + $0x64] sm:$0xf]
          %v1267 = vld [vmem:[%s498 + $0x68] sm:$0xf]
          %v1268 = vld [vmem:[%s498 + $0x6c] sm:$0xf]
          %v1269 = vld [vmem:[%s498 + $0x70] sm:$0xf]
          %v1270 = vld [vmem:[%s498 + $0x74] sm:$0xf]
          %v1271 = vld [vmem:[%s498 + $0x78] sm:$0xf]
          %v1272 = vld [vmem:[%s498 + $0x7c] sm:$0xf]
          %s1273 = scalar_lea.vmem %s5, %s27
          %v1274 = vld [vmem:[%s1273] sm:$0x1]
          %v1275 = vld [vmem:[%s0] sm:$0xf]
          %v1276 = vld [vmem:[%s0 + $0x4] sm:$0xf]
          %v1277 = vld [vmem:[%s0 + $0x8] sm:$0xf]
          %v1278 = vld [vmem:[%s0 + $0xc] sm:$0xf]
          %v1279 = vld [vmem:[%s0 + $0x10] sm:$0xf]
          %v1280 = vld [vmem:[%s0 + $0x14] sm:$0xf]
          %v1281 = vld [vmem:[%s0 + $0x18] sm:$0xf]
          %v1282 = vld [vmem:[%s0 + $0x1c] sm:$0xf]
          %v1283 = vld [vmem:[%s0 + $0x20] sm:$0xf]
          %v1284 = vld [vmem:[%s0 + $0x24] sm:$0xf]
          %v1285 = vld [vmem:[%s0 + $0x28] sm:$0xf]
          %v1286 = vld [vmem:[%s0 + $0x2c] sm:$0xf]
          %v1287 = vld [vmem:[%s0 + $0x30] sm:$0xf]
          %v1288 = vld [vmem:[%s0 + $0x34] sm:$0xf]
          %v1289 = vld [vmem:[%s0 + $0x38] sm:$0xf]
          %v1290 = vld [vmem:[%s0 + $0x3c] sm:$0xf]
          %v1307 = vunpack.c.l.b16 %v1275
          %v1308 = vunpack.c.l.b16 %v1276
          %v1309 = vunpack.c.l.b16 %v1277
          %v1310 = vunpack.c.l.b16 %v1278
          %v1311 = vunpack.c.l.b16 %v1279
          %v1312 = vunpack.c.l.b16 %v1280
          %v1313 = vunpack.c.l.b16 %v1281
          %v1314 = vunpack.c.l.b16 %v1282
          %v1315 = vunpack.c.l.b16 %v1283
          %v1316 = vunpack.c.l.b16 %v1284
          %v1317 = vunpack.c.l.b16 %v1285
          %v1318 = vunpack.c.l.b16 %v1286
          %v1319 = vunpack.c.l.b16 %v1287
          %v1320 = vunpack.c.l.b16 %v1288
          %v1321 = vunpack.c.l.b16 %v1289
          %v1322 = vunpack.c.l.b16 %v1290
          %v1323 = vpack.c.b16 %v1308, %v1307
          %v1324 = vpack.c.b16 %v1310, %v1309
          %v1325 = vpack.c.b16 %v1312, %v1311
          %v1326 = vpack.c.b16 %v1314, %v1313
          %v1327 = vpack.c.b16 %v1316, %v1315
          %v1328 = vpack.c.b16 %v1318, %v1317
          %v1329 = vpack.c.b16 %v1320, %v1319
          %v1330 = vpack.c.b16 %v1322, %v1321
          %1339 = vmatprep.subr.bf16.mxu0 0
          %1340 = vmatpush1.bf16.msra.mxu0 %v1233
          %1341 = vmatprep.subr.bf16.mxu0 0
          %1342 = vmatpush1.bf16.msra.mxu0 %v1234
          %1343 = vmatprep.subr.bf16.mxu0 0
          %1344 = vmatpush1.bf16.msra.mxu0 %v1235
          %1345 = vmatprep.subr.bf16.mxu0 0
          %1346 = vmatpush1.bf16.msra.mxu0 %v1236
          %1347 = vmatprep.subr.bf16.mxu0 0
          %1348 = vmatpush1.bf16.msra.mxu0 %v1237
          %1349 = vmatprep.subr.bf16.mxu0 0
          %1350 = vmatpush1.bf16.msra.mxu0 %v1238
          %1351 = vmatprep.subr.bf16.mxu0 0
          %1352 = vmatpush1.bf16.msra.mxu0 %v1239
          %1353 = vmatprep.subr.bf16.mxu0 0
          %1354 = vmatpush1.bf16.msra.mxu0 %v1240
          %1355 = vmatprep.subr.bf16.mxu0 0
          %1356 = vmatpush1.bf16.msra.mxu0 0
          %1357 = vmatprep.subr.bf16.mxu0 0
          %1358 = vmatpush1.bf16.msra.mxu0 0
          %1359 = vmatprep.subr.bf16.mxu0 0
          %1360 = vmatpush1.bf16.msra.mxu0 0
          %1361 = vmatprep.subr.bf16.mxu0 0
          %1362 = vmatpush1.bf16.msra.mxu0 0
          %1363 = vmatprep.subr.bf16.mxu0 0
          %1364 = vmatpush1.bf16.msra.mxu0 0
          %1365 = vmatprep.subr.bf16.mxu0 0
          %1366 = vmatpush1.bf16.msra.mxu0 0
          %1367 = vmatprep.subr.bf16.mxu0 0
          %1368 = vmatpush1.bf16.msra.mxu0 0
          %1369 = vmatprep.subr.bf16.mxu0 0
          %1370 = vmatpush1.bf16.msra.mxu0 0
          %1371 = vmatprep.mubr.bf16.mxu0 0
          %1372 = vmatmul.mubr.bf16.gmra.mrb[0].mxu0 %v1323
          %v1373 = vpop.f32.mrb[0].mxu0
          %v1374 = vadd.f32 0.0, %v1373
          %v1375 = vpop.f32.mrb[0].mxu0
          %v1376 = vpop.f32.mrb[0].mxu0
          %v1377 = vadd.f32 0.0, %v1376
          %v1378 = vpop.f32.mrb[0].mxu0
          %1379 = vmatprep.mubr.bf16.mxu0 0
          %1380 = vmatmul.mubr.bf16.gmra.mrb[0].mxu0 %v1324
          %v1381 = vpop.f32.mrb[0].mxu0
          %v1382 = vadd.f32 0.0, %v1381
          %v1383 = vpop.f32.mrb[0].mxu0
          %v1384 = vpop.f32.mrb[0].mxu0
          %v1385 = vadd.f32 0.0, %v1384
          %v1386 = vpop.f32.mrb[0].mxu0
          %1387 = vmatprep.mubr.bf16.mxu0 0
          %1388 = vmatmul.mubr.bf16.gmra.mrb[0].mxu0 %v1325
          %v1389 = vpop.f32.mrb[0].mxu0
          %v1390 = vadd.f32 0.0, %v1389
          %v1391 = vpop.f32.mrb[0].mxu0
          %v1392 = vpop.f32.mrb[0].mxu0
          %v1393 = vadd.f32 0.0, %v1392
          %v1394 = vpop.f32.mrb[0].mxu0
          %1395 = vmatprep.mubr.bf16.mxu0 0
          %1396 = vmatmul.mubr.bf16.gmra.mrb[0].mxu0 %v1326
          %v1397 = vpop.f32.mrb[0].mxu0
          %v1398 = vadd.f32 0.0, %v1397
          %v1399 = vpop.f32.mrb[0].mxu0
          %v1400 = vpop.f32.mrb[0].mxu0
          %v1401 = vadd.f32 0.0, %v1400
          %v1402 = vpop.f32.mrb[0].mxu0
          %1403 = vmatprep.mubr.bf16.mxu0 0
          %1404 = vmatmul.mubr.bf16.gmra.mrb[0].mxu0 %v1327
          %v1405 = vpop.f32.mrb[0].mxu0
          %v1406 = vadd.f32 0.0, %v1405
          %v1407 = vpop.f32.mrb[0].mxu0
          %v1408 = vpop.f32.mrb[0].mxu0
          %v1409 = vadd.f32 0.0, %v1408
          %v1410 = vpop.f32.mrb[0].mxu0
          %1411 = vmatprep.mubr.bf16.mxu0 0
          %1412 = vmatmul.mubr.bf16.gmra.mrb[0].mxu0 %v1328
          %v1413 = vpop.f32.mrb[0].mxu0
          %v1414 = vadd.f32 0.0, %v1413
          %v1415 = vpop.f32.mrb[0].mxu0
          %v1416 = vpop.f32.mrb[0].mxu0
          %v1417 = vadd.f32 0.0, %v1416
          %v1418 = vpop.f32.mrb[0].mxu0
          %1419 = vmatprep.mubr.bf16.mxu0 0
          %1420 = vmatmul.mubr.bf16.gmra.mrb[0].mxu0 %v1329
          %v1421 = vpop.f32.mrb[0].mxu0
          %v1422 = vadd.f32 0.0, %v1421
          %v1423 = vpop.f32.mrb[0].mxu0
          %v1424 = vpop.f32.mrb[0].mxu0
          %v1425 = vadd.f32 0.0, %v1424
          %v1426 = vpop.f32.mrb[0].mxu0
          %1427 = vmatprep.mubr.bf16.mxu0 0
          %1428 = vmatmul.mubr.bf16.gmra.mrb[0].mxu0 %v1330
          %v1429 = vpop.f32.mrb[0].mxu0
          %v1430 = vadd.f32 0.0, %v1429
          %v1431 = vpop.f32.mrb[0].mxu0
          %v1432 = vpop.f32.mrb[0].mxu0
          %v1433 = vadd.f32 0.0, %v1432
          %v1434 = vpop.f32.mrb[0].mxu0
          %1435 = vdwg.mxu0
          %v1436 = vld [vmem:[%s1] sm:$0xff]
          %v1437 = vld [vmem:[%s1 + $0x8] sm:$0xff]
          %v1438 = vld [vmem:[%s1 + $0x10] sm:$0xff]
          %v1439 = vld [vmem:[%s1 + $0x18] sm:$0xff]
          %v1440 = vld [vmem:[%s1 + $0x20] sm:$0xff]
          %v1441 = vld [vmem:[%s1 + $0x28] sm:$0xff]
          %v1442 = vld [vmem:[%s1 + $0x30] sm:$0xff]
          %v1443 = vld [vmem:[%s1 + $0x38] sm:$0xff]
          %v1444 = vld [vmem:[%s1 + $0x40] sm:$0xff]
          %v1445 = vld [vmem:[%s1 + $0x48] sm:$0xff]
          %v1446 = vld [vmem:[%s1 + $0x50] sm:$0xff]
          %v1447 = vld [vmem:[%s1 + $0x58] sm:$0xff]
          %v1448 = vld [vmem:[%s1 + $0x60] sm:$0xff]
          %v1449 = vld [vmem:[%s1 + $0x68] sm:$0xff]
          %v1450 = vld [vmem:[%s1 + $0x70] sm:$0xff]
          %v1451 = vld [vmem:[%s1 + $0x78] sm:$0xff]
          %1453 = vset.pattern.permute.xlu0 0
          %1454 = vperm.xlu0 %1453, %v1436
          %v1455 = vpop.permute.xlu0 %1454
          %1458 = vset.pattern.permute.xlu0 0
          %1459 = vperm.xlu0 %1458, %v1437
          %v1460 = vpop.permute.xlu0 %1459
          %1463 = vset.pattern.permute.xlu0 0
          %1464 = vperm.xlu0 %1463, %v1438
          %v1465 = vpop.permute.xlu0 %1464
          %1468 = vset.pattern.permute.xlu0 0
          %1469 = vperm.xlu0 %1468, %v1439
          %v1470 = vpop.permute.xlu0 %1469
          %1473 = vset.pattern.permute.xlu0 0
          %1474 = vperm.xlu0 %1473, %v1440
          %v1475 = vpop.permute.xlu0 %1474
          %1478 = vset.pattern.permute.xlu0 0
          %1479 = vperm.xlu0 %1478, %v1441
          %v1480 = vpop.permute.xlu0 %1479
          %1483 = vset.pattern.permute.xlu0 0
          %1484 = vperm.xlu0 %1483, %v1442
          %v1485 = vpop.permute.xlu0 %1484
          %1488 = vset.pattern.permute.xlu0 0
          %1489 = vperm.xlu0 %1488, %v1443
          %v1490 = vpop.permute.xlu0 %1489
          %1493 = vset.pattern.permute.xlu0 0
          %1494 = vperm.xlu0 %1493, %v1444
          %v1495 = vpop.permute.xlu0 %1494
          %1498 = vset.pattern.permute.xlu0 0
          %1499 = vperm.xlu0 %1498, %v1445
          %v1500 = vpop.permute.xlu0 %1499
          %1503 = vset.pattern.permute.xlu0 0
          %1504 = vperm.xlu0 %1503, %v1446
          %v1505 = vpop.permute.xlu0 %1504
          %1508 = vset.pattern.permute.xlu0 0
          %1509 = vperm.xlu0 %1508, %v1447
          %v1510 = vpop.permute.xlu0 %1509
          %1513 = vset.pattern.permute.xlu0 0
          %1514 = vperm.xlu0 %1513, %v1448
          %v1515 = vpop.permute.xlu0 %1514
          %1518 = vset.pattern.permute.xlu0 0
          %1519 = vperm.xlu0 %1518, %v1449
          %v1520 = vpop.permute.xlu0 %1519
          %1523 = vset.pattern.permute.xlu0 0
          %1524 = vperm.xlu0 %1523, %v1450
          %v1525 = vpop.permute.xlu0 %1524
          %1528 = vset.pattern.permute.xlu0 0
          %1529 = vperm.xlu0 %1528, %v1451
          %v1530 = vpop.permute.xlu0 %1529
          %v1532 = vmul.f32 %v1374, %v1455
          %v1533 = vmul.f32 %v1377, %v1460
          %v1534 = vmul.f32 %v1382, %v1465
          %v1535 = vmul.f32 %v1385, %v1470
          %v1536 = vmul.f32 %v1390, %v1475
          %v1537 = vmul.f32 %v1393, %v1480
          %v1538 = vmul.f32 %v1398, %v1485
          %v1539 = vmul.f32 %v1401, %v1490
          %v1540 = vmul.f32 %v1406, %v1495
          %v1541 = vmul.f32 %v1409, %v1500
          %v1542 = vmul.f32 %v1414, %v1505
          %v1543 = vmul.f32 %v1417, %v1510
          %v1544 = vmul.f32 %v1422, %v1515
          %v1545 = vmul.f32 %v1425, %v1520
          %v1546 = vmul.f32 %v1430, %v1525
          %v1547 = vmul.f32 %v1433, %v1530
          %v1548 = vpack.c.bf16 %v1533, %v1532
          %v1549 = vpack.c.bf16 %v1535, %v1534
          %v1550 = vpack.c.bf16 %v1537, %v1536
          %v1551 = vpack.c.bf16 %v1539, %v1538
          %v1552 = vpack.c.bf16 %v1541, %v1540
          %v1553 = vpack.c.bf16 %v1543, %v1542
          %v1554 = vpack.c.bf16 %v1545, %v1544
          %v1555 = vpack.c.bf16 %v1547, %v1546
          %v1572 = vunpack.c.l.b16 %v1241
          %v1573 = vunpack.c.l.b16 %v1242
          %v1574 = vunpack.c.l.b16 %v1243
          %v1575 = vunpack.c.l.b16 %v1244
          %v1576 = vunpack.c.l.b16 %v1245
          %v1577 = vunpack.c.l.b16 %v1246
          %v1578 = vunpack.c.l.b16 %v1247
          %v1579 = vunpack.c.l.b16 %v1248
          %v1580 = vunpack.c.l.b16 %v1249
          %v1581 = vunpack.c.l.b16 %v1250
          %v1582 = vunpack.c.l.b16 %v1251
          %v1583 = vunpack.c.l.b16 %v1252
          %v1584 = vunpack.c.l.b16 %v1253
          %v1585 = vunpack.c.l.b16 %v1254
          %v1586 = vunpack.c.l.b16 %v1255
          %v1587 = vunpack.c.l.b16 %v1256
          %v1588 = vpack.c.b16 %v1573, %v1572
          %v1589 = vpack.c.b16 %v1575, %v1574
          %v1590 = vpack.c.b16 %v1577, %v1576
          %v1591 = vpack.c.b16 %v1579, %v1578
          %v1592 = vpack.c.b16 %v1581, %v1580
          %v1593 = vpack.c.b16 %v1583, %v1582
          %v1594 = vpack.c.b16 %v1585, %v1584
          %v1595 = vpack.c.b16 %v1587, %v1586
          %1604 = vmatprep.subr.bf16.mxu0 0
          %1605 = vmatpush1.bf16.msra.mxu0 %v1588
          %1606 = vmatprep.subr.bf16.mxu0 0
          %1607 = vmatpush1.bf16.msra.mxu0 %v1589
          %1608 = vmatprep.subr.bf16.mxu0 0
          %1609 = vmatpush1.bf16.msra.mxu0 %v1590
          %1610 = vmatprep.subr.bf16.mxu0 0
          %1611 = vmatpush1.bf16.msra.mxu0 %v1591
          %1612 = vmatprep.subr.bf16.mxu0 0
          %1613 = vmatpush1.bf16.msra.mxu0 %v1592
          %1614 = vmatprep.subr.bf16.mxu0 0
          %1615 = vmatpush1.bf16.msra.mxu0 %v1593
          %1616 = vmatprep.subr.bf16.mxu0 0
          %1617 = vmatpush1.bf16.msra.mxu0 %v1594
          %1618 = vmatprep.subr.bf16.mxu0 0
          %1619 = vmatpush1.bf16.msra.mxu0 %v1595
          %1620 = vmatprep.subr.bf16.mxu0 0
          %1621 = vmatpush1.bf16.msra.mxu0 0
          %1622 = vmatprep.subr.bf16.mxu0 0
          %1623 = vmatpush1.bf16.msra.mxu0 0
          %1624 = vmatprep.subr.bf16.mxu0 0
          %1625 = vmatpush1.bf16.msra.mxu0 0
          %1626 = vmatprep.subr.bf16.mxu0 0
          %1627 = vmatpush1.bf16.msra.mxu0 0
          %1628 = vmatprep.subr.bf16.mxu0 0
          %1629 = vmatpush1.bf16.msra.mxu0 0
          %1630 = vmatprep.subr.bf16.mxu0 0
          %1631 = vmatpush1.bf16.msra.mxu0 0
          %1632 = vmatprep.subr.bf16.mxu0 0
          %1633 = vmatpush1.bf16.msra.mxu0 0
          %1634 = vmatprep.subr.bf16.mxu0 0
          %1635 = vmatpush1.bf16.msra.mxu0 0
          %1636 = vmatprep.mubr.bf16.mxu0 0
          %1637 = vmatmul.mubr.bf16.gmra.mrb[0].mxu0 %v1548
          %v1638 = vpop.f32.mrb[0].mxu0
          %v1639 = vadd.f32 0.0, %v1638
          %v1640 = vpop.f32.mrb[0].mxu0
          %v1641 = vpop.f32.mrb[0].mxu0
          %v1642 = vadd.f32 0.0, %v1641
          %v1643 = vpop.f32.mrb[0].mxu0
          %1644 = vmatprep.mubr.bf16.mxu0 0
          %1645 = vmatmul.mubr.bf16.gmra.mrb[0].mxu0 %v1549
          %v1646 = vpop.f32.mrb[0].mxu0
          %v1647 = vadd.f32 0.0, %v1646
          %v1648 = vpop.f32.mrb[0].mxu0
          %v1649 = vpop.f32.mrb[0].mxu0
          %v1650 = vadd.f32 0.0, %v1649
          %v1651 = vpop.f32.mrb[0].mxu0
          %1652 = vmatprep.mubr.bf16.mxu0 0
          %1653 = vmatmul.mubr.bf16.gmra.mrb[0].mxu0 %v1550
          %v1654 = vpop.f32.mrb[0].mxu0
          %v1655 = vadd.f32 0.0, %v1654
          %v1656 = vpop.f32.mrb[0].mxu0
          %v1657 = vpop.f32.mrb[0].mxu0
          %v1658 = vadd.f32 0.0, %v1657
          %v1659 = vpop.f32.mrb[0].mxu0
          %1660 = vmatprep.mubr.bf16.mxu0 0
          %1661 = vmatmul.mubr.bf16.gmra.mrb[0].mxu0 %v1551
          %v1662 = vpop.f32.mrb[0].mxu0
          %v1663 = vadd.f32 0.0, %v1662
          %v1664 = vpop.f32.mrb[0].mxu0
          %v1665 = vpop.f32.mrb[0].mxu0
          %v1666 = vadd.f32 0.0, %v1665
          %v1667 = vpop.f32.mrb[0].mxu0
          %1668 = vmatprep.mubr.bf16.mxu0 0
          %1669 = vmatmul.mubr.bf16.gmra.mrb[0].mxu0 %v1552
          %v1670 = vpop.f32.mrb[0].mxu0
          %v1671 = vadd.f32 0.0, %v1670
          %v1672 = vpop.f32.mrb[0].mxu0
          %v1673 = vpop.f32.mrb[0].mxu0
          %v1674 = vadd.f32 0.0, %v1673
          %v1675 = vpop.f32.mrb[0].mxu0
          %1676 = vmatprep.mubr.bf16.mxu0 0
          %1677 = vmatmul.mubr.bf16.gmra.mrb[0].mxu0 %v1553
          %v1678 = vpop.f32.mrb[0].mxu0
          %v1679 = vadd.f32 0.0, %v1678
          %v1680 = vpop.f32.mrb[0].mxu0
          %v1681 = vpop.f32.mrb[0].mxu0
          %v1682 = vadd.f32 0.0, %v1681
          %v1683 = vpop.f32.mrb[0].mxu0
          %1684 = vmatprep.mubr.bf16.mxu0 0
          %1685 = vmatmul.mubr.bf16.gmra.mrb[0].mxu0 %v1554
          %v1686 = vpop.f32.mrb[0].mxu0
          %v1687 = vadd.f32 0.0, %v1686
          %v1688 = vpop.f32.mrb[0].mxu0
          %v1689 = vpop.f32.mrb[0].mxu0
          %v1690 = vadd.f32 0.0, %v1689
          %v1691 = vpop.f32.mrb[0].mxu0
          %1692 = vmatprep.mubr.bf16.mxu0 0
          %1693 = vmatmul.mubr.bf16.gmra.mrb[0].mxu0 %v1555
          %v1694 = vpop.f32.mrb[0].mxu0
          %v1695 = vadd.f32 0.0, %v1694
          %v1696 = vpop.f32.mrb[0].mxu0
          %v1697 = vpop.f32.mrb[0].mxu0
          %v1698 = vadd.f32 0.0, %v1697
          %v1699 = vpop.f32.mrb[0].mxu0
          %1700 = vdwg.mxu0
          %v1717 = vunpack.c.l.b16 %v1257
          %v1718 = vunpack.c.l.b16 %v1258
          %v1719 = vunpack.c.l.b16 %v1259
          %v1720 = vunpack.c.l.b16 %v1260
          %v1721 = vunpack.c.l.b16 %v1261
          %v1722 = vunpack.c.l.b16 %v1262
          %v1723 = vunpack.c.l.b16 %v1263
          %v1724 = vunpack.c.l.b16 %v1264
          %v1725 = vunpack.c.l.b16 %v1265
          %v1726 = vunpack.c.l.b16 %v1266
          %v1727 = vunpack.c.l.b16 %v1267
          %v1728 = vunpack.c.l.b16 %v1268
          %v1729 = vunpack.c.l.b16 %v1269
          %v1730 = vunpack.c.l.b16 %v1270
          %v1731 = vunpack.c.l.b16 %v1271
          %v1732 = vunpack.c.l.b16 %v1272
          %v1733 = vpack.c.b16 %v1718, %v1717
          %v1734 = vpack.c.b16 %v1720, %v1719
          %v1735 = vpack.c.b16 %v1722, %v1721
          %v1736 = vpack.c.b16 %v1724, %v1723
          %v1737 = vpack.c.b16 %v1726, %v1725
          %v1738 = vpack.c.b16 %v1728, %v1727
          %v1739 = vpack.c.b16 %v1730, %v1729
          %v1740 = vpack.c.b16 %v1732, %v1731
          %1749 = vmatprep.subr.bf16.mxu0 0
          %1750 = vmatpush1.bf16.msra.mxu0 %v1733
          %1751 = vmatprep.subr.bf16.mxu0 0
          %1752 = vmatpush1.bf16.msra.mxu0 %v1734
          %1753 = vmatprep.subr.bf16.mxu0 0
          %1754 = vmatpush1.bf16.msra.mxu0 %v1735
          %1755 = vmatprep.subr.bf16.mxu0 0
          %1756 = vmatpush1.bf16.msra.mxu0 %v1736
          %1757 = vmatprep.subr.bf16.mxu0 0
          %1758 = vmatpush1.bf16.msra.mxu0 %v1737
          %1759 = vmatprep.subr.bf16.mxu0 0
          %1760 = vmatpush1.bf16.msra.mxu0 %v1738
          %1761 = vmatprep.subr.bf16.mxu0 0
          %1762 = vmatpush1.bf16.msra.mxu0 %v1739
          %1763 = vmatprep.subr.bf16.mxu0 0
          %1764 = vmatpush1.bf16.msra.mxu0 %v1740
          %1765 = vmatprep.subr.bf16.mxu0 0
          %1766 = vmatpush1.bf16.msra.mxu0 0
          %1767 = vmatprep.subr.bf16.mxu0 0
          %1768 = vmatpush1.bf16.msra.mxu0 0
          %1769 = vmatprep.subr.bf16.mxu0 0
          %1770 = vmatpush1.bf16.msra.mxu0 0
          %1771 = vmatprep.subr.bf16.mxu0 0
          %1772 = vmatpush1.bf16.msra.mxu0 0
          %1773 = vmatprep.subr.bf16.mxu0 0
          %1774 = vmatpush1.bf16.msra.mxu0 0
          %1775 = vmatprep.subr.bf16.mxu0 0
          %1776 = vmatpush1.bf16.msra.mxu0 0
          %1777 = vmatprep.subr.bf16.mxu0 0
          %1778 = vmatpush1.bf16.msra.mxu0 0
          %1779 = vmatprep.subr.bf16.mxu0 0
          %1780 = vmatpush1.bf16.msra.mxu0 0
          %1781 = vmatprep.mubr.bf16.mxu0 0
          %1782 = vmatmul.mubr.bf16.gmra.mrb[0].mxu0 %v1233
          %v1783 = vpop.f32.mrb[0].mxu0
          %v1784 = vadd.f32 %v1639, %v1783
          %v1785 = vpop.f32.mrb[0].mxu0
          %v1786 = vpop.f32.mrb[0].mxu0
          %v1787 = vadd.f32 %v1642, %v1786
          %v1788 = vpop.f32.mrb[0].mxu0
          %1789 = vmatprep.mubr.bf16.mxu0 0
          %1790 = vmatmul.mubr.bf16.gmra.mrb[0].mxu0 %v1234
          %v1791 = vpop.f32.mrb[0].mxu0
          %v1792 = vadd.f32 %v1647, %v1791
          %v1793 = vpop.f32.mrb[0].mxu0
          %v1794 = vpop.f32.mrb[0].mxu0
          %v1795 = vadd.f32 %v1650, %v1794
          %v1796 = vpop.f32.mrb[0].mxu0
          %1797 = vmatprep.mubr.bf16.mxu0 0
          %1798 = vmatmul.mubr.bf16.gmra.mrb[0].mxu0 %v1235
          %v1799 = vpop.f32.mrb[0].mxu0
          %v1800 = vadd.f32 %v1655, %v1799
          %v1801 = vpop.f32.mrb[0].mxu0
          %v1802 = vpop.f32.mrb[0].mxu0
          %v1803 = vadd.f32 %v1658, %v1802
          %v1804 = vpop.f32.mrb[0].mxu0
          %1805 = vmatprep.mubr.bf16.mxu0 0
          %1806 = vmatmul.mubr.bf16.gmra.mrb[0].mxu0 %v1236
          %v1807 = vpop.f32.mrb[0].mxu0
          %v1808 = vadd.f32 %v1663, %v1807
          %v1809 = vpop.f32.mrb[0].mxu0
          %v1810 = vpop.f32.mrb[0].mxu0
          %v1811 = vadd.f32 %v1666, %v1810
          %v1812 = vpop.f32.mrb[0].mxu0
          %1813 = vmatprep.mubr.bf16.mxu0 0
          %1814 = vmatmul.mubr.bf16.gmra.mrb[0].mxu0 %v1237
          %v1815 = vpop.f32.mrb[0].mxu0
          %v1816 = vadd.f32 %v1671, %v1815
          %v1817 = vpop.f32.mrb[0].mxu0
          %v1818 = vpop.f32.mrb[0].mxu0
          %v1819 = vadd.f32 %v1674, %v1818
          %v1820 = vpop.f32.mrb[0].mxu0
          %1821 = vmatprep.mubr.bf16.mxu0 0
          %1822 = vmatmul.mubr.bf16.gmra.mrb[0].mxu0 %v1238
          %v1823 = vpop.f32.mrb[0].mxu0
          %v1824 = vadd.f32 %v1679, %v1823
          %v1825 = vpop.f32.mrb[0].mxu0
          %v1826 = vpop.f32.mrb[0].mxu0
          %v1827 = vadd.f32 %v1682, %v1826
          %v1828 = vpop.f32.mrb[0].mxu0
          %1829 = vmatprep.mubr.bf16.mxu0 0
          %1830 = vmatmul.mubr.bf16.gmra.mrb[0].mxu0 %v1239
          %v1831 = vpop.f32.mrb[0].mxu0
          %v1832 = vadd.f32 %v1687, %v1831
          %v1833 = vpop.f32.mrb[0].mxu0
          %v1834 = vpop.f32.mrb[0].mxu0
          %v1835 = vadd.f32 %v1690, %v1834
          %v1836 = vpop.f32.mrb[0].mxu0
          %1837 = vmatprep.mubr.bf16.mxu0 0
          %1838 = vmatmul.mubr.bf16.gmra.mrb[0].mxu0 %v1240
          %v1839 = vpop.f32.mrb[0].mxu0
          %v1840 = vadd.f32 %v1695, %v1839
          %v1841 = vpop.f32.mrb[0].mxu0
          %v1842 = vpop.f32.mrb[0].mxu0
          %v1843 = vadd.f32 %v1698, %v1842
          %v1844 = vpop.f32.mrb[0].mxu0
          %1845 = vdwg.mxu0
          %v1847 = vlaneseq
          %v1848 = vshrl.u32 %v1847, 7
          %v1849 = vsub.s32 0, %v1848
          %v1850 = vrot.slane %v1274, %v1849
          %v1852 = vadd.f32 %v1784, %v1850
          %v1853 = vadd.f32 %v1787, %v1850
          %v1854 = vadd.f32 %v1792, %v1850
          %v1855 = vadd.f32 %v1795, %v1850
          %v1856 = vadd.f32 %v1800, %v1850
          %v1857 = vadd.f32 %v1803, %v1850
          %v1858 = vadd.f32 %v1808, %v1850
          %v1859 = vadd.f32 %v1811, %v1850
          %v1860 = vadd.f32 %v1816, %v1850
          %v1861 = vadd.f32 %v1819, %v1850
          %v1862 = vadd.f32 %v1824, %v1850
          %v1863 = vadd.f32 %v1827, %v1850
          %v1864 = vadd.f32 %v1832, %v1850
          %v1865 = vadd.f32 %v1835, %v1850
          %v1866 = vadd.f32 %v1840, %v1850
          %v1867 = vadd.f32 %v1843, %v1850
          %v1868 = vtanh.pop %v1852
          %v1869 = vtanh.pop %v1853
          %v1870 = vtanh.pop %v1854
          %v1871 = vtanh.pop %v1855
          %v1872 = vtanh.pop %v1856
          %v1873 = vtanh.pop %v1857
          %v1874 = vtanh.pop %v1858
          %v1875 = vtanh.pop %v1859
          %v1876 = vtanh.pop %v1860
          %v1877 = vtanh.pop %v1861
          %v1878 = vtanh.pop %v1862
          %v1879 = vtanh.pop %v1863
          %v1880 = vtanh.pop %v1864
          %v1881 = vtanh.pop %v1865
          %v1882 = vtanh.pop %v1866
          %v1883 = vtanh.pop %v1867
          %v1884 = vpack.c.bf16 %v1869, %v1868
          %v1885 = vpack.c.bf16 %v1871, %v1870
          %v1886 = vpack.c.bf16 %v1873, %v1872
          %v1887 = vpack.c.bf16 %v1875, %v1874
          %v1888 = vpack.c.bf16 %v1877, %v1876
          %v1889 = vpack.c.bf16 %v1879, %v1878
          %v1890 = vpack.c.bf16 %v1881, %v1880
          %v1891 = vpack.c.bf16 %v1883, %v1882
          %1892 = vst [vmem:[#allocation2] sm:$0xff] %v1884
          %1893 = vst [vmem:[#allocation2 + $0x8] sm:$0xff] %v1885
          %1894 = vst [vmem:[#allocation2 + $0x10] sm:$0xff] %v1886
          %1895 = vst [vmem:[#allocation2 + $0x18] sm:$0xff] %v1887
          %1896 = vst [vmem:[#allocation2 + $0x20] sm:$0xff] %v1888
          %1897 = vst [vmem:[#allocation2 + $0x28] sm:$0xff] %v1889
          %1898 = vst [vmem:[#allocation2 + $0x30] sm:$0xff] %v1890
          %1899 = vst [vmem:[#allocation2 + $0x38] sm:$0xff] %v1891
        $region88: #{graph_cnn_forward.1} parent=79 // pred_fallthru
          _
        %p1900 = scmp.eq.s32.totalorder %s27, 4
        // Predicated region
        $region89: #{graph_cnn_forward.1} parent=79 // pred_check
          %p1901 = pneg %p1900
        $region90: #{graph_cnn_forward.1} parent=79 // pred_check_branch
          %1903 = sbr.rel (%p1901) target = $region92
        $region91: #{graph_cnn_forward.1} parent=79 // pred_region
          %v1904 = vld [vmem:[#allocation2] sm:$0xff]
          %v1905 = vld [vmem:[#allocation2 + $0x8] sm:$0xff]
          %v1906 = vld [vmem:[#allocation2 + $0x10] sm:$0xff]
          %v1907 = vld [vmem:[#allocation2 + $0x18] sm:$0xff]
          %v1908 = vld [vmem:[#allocation2 + $0x20] sm:$0xff]
          %v1909 = vld [vmem:[#allocation2 + $0x28] sm:$0xff]
          %v1910 = vld [vmem:[#allocation2 + $0x30] sm:$0xff]
          %v1911 = vld [vmem:[#allocation2 + $0x38] sm:$0xff]
          %v1912 = vunpack.c.l.bf16 %v1904
          %v1913 = vunpack.c.h.bf16 %v1904
          %v1914 = vunpack.c.l.bf16 %v1905
          %v1915 = vunpack.c.h.bf16 %v1905
          %v1916 = vunpack.c.l.bf16 %v1906
          %v1917 = vunpack.c.h.bf16 %v1906
          %v1918 = vunpack.c.l.bf16 %v1907
          %v1919 = vunpack.c.h.bf16 %v1907
          %v1920 = vunpack.c.l.bf16 %v1908
          %v1921 = vunpack.c.h.bf16 %v1908
          %v1922 = vunpack.c.l.bf16 %v1909
          %v1923 = vunpack.c.h.bf16 %v1909
          %v1924 = vunpack.c.l.bf16 %v1910
          %v1925 = vunpack.c.h.bf16 %v1910
          %v1926 = vunpack.c.l.bf16 %v1911
          %v1927 = vunpack.c.h.bf16 %v1911
          %v1928 = vld [vmem:[%s6] sm:$0x1]
          %1929 = vmatprep.subr.bf16.mxu0 0
          %1930 = vmatpush1.bf16.msra.mxu0 %v1904
          %1931 = vmatprep.subr.bf16.mxu0 0
          %1932 = vmatpush1.bf16.msra.mxu0 %v1905
          %1933 = vmatprep.subr.bf16.mxu0 0
          %1934 = vmatpush1.bf16.msra.mxu0 %v1906
          %1935 = vmatprep.subr.bf16.mxu0 0
          %1936 = vmatpush1.bf16.msra.mxu0 %v1907
          %1937 = vmatprep.subr.bf16.mxu0 0
          %1938 = vmatpush1.bf16.msra.mxu0 %v1908
          %1939 = vmatprep.subr.bf16.mxu0 0
          %1940 = vmatpush1.bf16.msra.mxu0 %v1909
          %1941 = vmatprep.subr.bf16.mxu0 0
          %1942 = vmatpush1.bf16.msra.mxu0 %v1910
          %1943 = vmatprep.subr.bf16.mxu0 0
          %1944 = vmatpush1.bf16.msra.mxu0 %v1911
          %1945 = vmatprep.subr.bf16.mxu0 0
          %1946 = vmatpush1.bf16.msra.mxu0 0
          %1947 = vmatprep.subr.bf16.mxu0 0
          %1948 = vmatpush1.bf16.msra.mxu0 0
          %1949 = vmatprep.subr.bf16.mxu0 0
          %1950 = vmatpush1.bf16.msra.mxu0 0
          %1951 = vmatprep.subr.bf16.mxu0 0
          %1952 = vmatpush1.bf16.msra.mxu0 0
          %1953 = vmatprep.subr.bf16.mxu0 0
          %1954 = vmatpush1.bf16.msra.mxu0 0
          %1955 = vmatprep.subr.bf16.mxu0 0
          %1956 = vmatpush1.bf16.msra.mxu0 0
          %1957 = vmatprep.subr.bf16.mxu0 0
          %1958 = vmatpush1.bf16.msra.mxu0 0
          %1959 = vmatprep.subr.bf16.mxu0 0
          %1960 = vmatpush1.bf16.msra.mxu0 0
          %1961 = vmatprep.mubr.bf16.mxu0 0
          %1962 = vmatmul.mubr.bf16.gmra.mrb[0].mxu0 %v1928
          %v1963 = vpop.f32.mrb[0].mxu0
          %v1964 = vadd.f32 0.0, %v1963
          %v1965 = vpop.f32.mrb[0].mxu0
          %v1966 = vpop.f32.mrb[0].mxu0
          %v1967 = vpop.f32.mrb[0].mxu0
          %1968 = vdwg.mxu0
          %v1969 = vld [vmem:[%s7] sm:$0x3]
          %1971 = vset.pattern.permute.xlu0 0
          %1972 = vperm.xlu0 %1971, %v1969
          %v1973 = vpop.permute.xlu0 %1972
          %v1975 = vmul.f32 %v1964, %v1973
          %v1976 = vld [vmem:[%s8] sm:$0xff]
          %v1977 = vld [vmem:[%s8 + $0x8] sm:$0xff]
          %v1978 = vld [vmem:[%s8 + $0x10] sm:$0xff]
          %v1979 = vld [vmem:[%s8 + $0x18] sm:$0xff]
          %v1980 = vld [vmem:[%s8 + $0x20] sm:$0xff]
          %v1981 = vld [vmem:[%s8 + $0x28] sm:$0xff]
          %v1982 = vld [vmem:[%s8 + $0x30] sm:$0xff]
          %v1983 = vld [vmem:[%s8 + $0x38] sm:$0xff]
          %v1984 = vld [vmem:[%s8 + $0x40] sm:$0xff]
          %v1985 = vld [vmem:[%s8 + $0x48] sm:$0xff]
          %v1986 = vld [vmem:[%s8 + $0x50] sm:$0xff]
          %v1987 = vld [vmem:[%s8 + $0x58] sm:$0xff]
          %v1988 = vld [vmem:[%s8 + $0x60] sm:$0xff]
          %v1989 = vld [vmem:[%s8 + $0x68] sm:$0xff]
          %v1990 = vld [vmem:[%s8 + $0x70] sm:$0xff]
          %v1991 = vld [vmem:[%s8 + $0x78] sm:$0xff]
          %vm1992 = vcmp.gt.f32.partialorder %v1976, 0.0
          %vm1993 = vcmp.gt.f32.partialorder %v1977, 0.0
          %vm1994 = vcmp.gt.f32.partialorder %v1978, 0.0
          %vm1995 = vcmp.gt.f32.partialorder %v1979, 0.0
          %vm1996 = vcmp.gt.f32.partialorder %v1980, 0.0
          %vm1997 = vcmp.gt.f32.partialorder %v1981, 0.0
          %vm1998 = vcmp.gt.f32.partialorder %v1982, 0.0
          %vm1999 = vcmp.gt.f32.partialorder %v1983, 0.0
          %vm2000 = vcmp.gt.f32.partialorder %v1984, 0.0
          %vm2001 = vcmp.gt.f32.partialorder %v1985, 0.0
          %vm2002 = vcmp.gt.f32.partialorder %v1986, 0.0
          %vm2003 = vcmp.gt.f32.partialorder %v1987, 0.0
          %vm2004 = vcmp.gt.f32.partialorder %v1988, 0.0
          %vm2005 = vcmp.gt.f32.partialorder %v1989, 0.0
          %vm2006 = vcmp.gt.f32.partialorder %v1990, 0.0
          %vm2007 = vcmp.gt.f32.partialorder %v1991, 0.0
          %v2008 = vsel %vm1992, 1, 0
          %v2009 = vsel %vm1993, 1, 0
          %v2010 = vsel %vm1994, 1, 0
          %v2011 = vsel %vm1995, 1, 0
          %v2012 = vsel %vm1996, 1, 0
          %v2013 = vsel %vm1997, 1, 0
          %v2014 = vsel %vm1998, 1, 0
          %v2015 = vsel %vm1999, 1, 0
          %v2016 = vsel %vm2000, 1, 0
          %v2017 = vsel %vm2001, 1, 0
          %v2018 = vsel %vm2002, 1, 0
          %v2019 = vsel %vm2003, 1, 0
          %v2020 = vsel %vm2004, 1, 0
          %v2021 = vsel %vm2005, 1, 0
          %v2022 = vsel %vm2006, 1, 0
          %v2023 = vsel %vm2007, 1, 0
          %2024 = vset.pattern.permute.xlu0 0
          %2025 = vperm.xlu0 %2024, %v2008
          %v2026 = vpop.permute.xlu0 %2025
          %2027 = vset.pattern.permute.xlu0 0
          %2028 = vperm.xlu0 %2027, %v2009
          %v2029 = vpop.permute.xlu0 %2028
          %2030 = vset.pattern.permute.xlu0 0
          %2031 = vperm.xlu0 %2030, %v2010
          %v2032 = vpop.permute.xlu0 %2031
          %2033 = vset.pattern.permute.xlu0 0
          %2034 = vperm.xlu0 %2033, %v2011
          %v2035 = vpop.permute.xlu0 %2034
          %2036 = vset.pattern.permute.xlu0 0
          %2037 = vperm.xlu0 %2036, %v2012
          %v2038 = vpop.permute.xlu0 %2037
          %2039 = vset.pattern.permute.xlu0 0
          %2040 = vperm.xlu0 %2039, %v2013
          %v2041 = vpop.permute.xlu0 %2040
          %2042 = vset.pattern.permute.xlu0 0
          %2043 = vperm.xlu0 %2042, %v2014
          %v2044 = vpop.permute.xlu0 %2043
          %2045 = vset.pattern.permute.xlu0 0
          %2046 = vperm.xlu0 %2045, %v2015
          %v2047 = vpop.permute.xlu0 %2046
          %2048 = vset.pattern.permute.xlu0 0
          %2049 = vperm.xlu0 %2048, %v2016
          %v2050 = vpop.permute.xlu0 %2049
          %2051 = vset.pattern.permute.xlu0 0
          %2052 = vperm.xlu0 %2051, %v2017
          %v2053 = vpop.permute.xlu0 %2052
          %2054 = vset.pattern.permute.xlu0 0
          %2055 = vperm.xlu0 %2054, %v2018
          %v2056 = vpop.permute.xlu0 %2055
          %2057 = vset.pattern.permute.xlu0 0
          %2058 = vperm.xlu0 %2057, %v2019
          %v2059 = vpop.permute.xlu0 %2058
          %2060 = vset.pattern.permute.xlu0 0
          %2061 = vperm.xlu0 %2060, %v2020
          %v2062 = vpop.permute.xlu0 %2061
          %2063 = vset.pattern.permute.xlu0 0
          %2064 = vperm.xlu0 %2063, %v2021
          %v2065 = vpop.permute.xlu0 %2064
          %2066 = vset.pattern.permute.xlu0 0
          %2067 = vperm.xlu0 %2066, %v2022
          %v2068 = vpop.permute.xlu0 %2067
          %2069 = vset.pattern.permute.xlu0 0
          %2070 = vperm.xlu0 %2069, %v2023
          %v2071 = vpop.permute.xlu0 %2070
          %vm2072 = vcmp.eq.s32.totalorder %v2026, 1
          %vm2073 = vcmp.eq.s32.totalorder %v2029, 1
          %vm2074 = vcmp.eq.s32.totalorder %v2032, 1
          %vm2075 = vcmp.eq.s32.totalorder %v2035, 1
          %vm2076 = vcmp.eq.s32.totalorder %v2038, 1
          %vm2077 = vcmp.eq.s32.totalorder %v2041, 1
          %vm2078 = vcmp.eq.s32.totalorder %v2044, 1
          %vm2079 = vcmp.eq.s32.totalorder %v2047, 1
          %vm2080 = vcmp.eq.s32.totalorder %v2050, 1
          %vm2081 = vcmp.eq.s32.totalorder %v2053, 1
          %vm2082 = vcmp.eq.s32.totalorder %v2056, 1
          %vm2083 = vcmp.eq.s32.totalorder %v2059, 1
          %vm2084 = vcmp.eq.s32.totalorder %v2062, 1
          %vm2085 = vcmp.eq.s32.totalorder %v2065, 1
          %vm2086 = vcmp.eq.s32.totalorder %v2068, 1
          %vm2087 = vcmp.eq.s32.totalorder %v2071, 1
          %v2088 = vsel %vm2072, %v1912, -1e+30
          %v2089 = vsel %vm2073, %v1913, -1e+30
          %v2090 = vsel %vm2074, %v1914, -1e+30
          %v2091 = vsel %vm2075, %v1915, -1e+30
          %v2092 = vsel %vm2076, %v1916, -1e+30
          %v2093 = vsel %vm2077, %v1917, -1e+30
          %v2094 = vsel %vm2078, %v1918, -1e+30
          %v2095 = vsel %vm2079, %v1919, -1e+30
          %v2096 = vsel %vm2080, %v1920, -1e+30
          %v2097 = vsel %vm2081, %v1921, -1e+30
          %v2098 = vsel %vm2082, %v1922, -1e+30
          %v2099 = vsel %vm2083, %v1923, -1e+30
          %v2100 = vsel %vm2084, %v1924, -1e+30
          %v2101 = vsel %vm2085, %v1925, -1e+30
          %v2102 = vsel %vm2086, %v1926, -1e+30
          %v2103 = vsel %vm2087, %v1927, -1e+30
          %v2104 = vmax.f32 %v2088, %v2092
          %v2105 = vmax.f32 %v2089, %v2093
          %v2106 = vmax.f32 %v2090, %v2094
          %v2107 = vmax.f32 %v2091, %v2095
          %v2108 = vmax.f32 %v2104, %v2096
          %v2109 = vmax.f32 %v2105, %v2097
          %v2110 = vmax.f32 %v2106, %v2098
          %v2111 = vmax.f32 %v2107, %v2099
          %v2112 = vmax.f32 %v2108, %v2100
          %v2113 = vmax.f32 %v2109, %v2101
          %v2114 = vmax.f32 %v2110, %v2102
          %v2115 = vmax.f32 %v2111, %v2103
          %v2116 = vmax.f32 %v2112, %v2113
          %v2117 = vmax.f32 %v2114, %v2115
          %v2118 = vmax.f32 %v2116, %v2117
          %v2119 = vrot.slane %v2118, 4
          %v2120 = vmax.f32 %v2118, %v2119
          %v2121 = vrot.slane %v2120, 2
          %v2122 = vmax.f32 %v2120, %v2121
          %v2123 = vrot.slane %v2122, 1
          %v2124 = vmax.f32 %v2122, %v2123
          %2125 = vset.pattern.permute.xlu0 1
          %2126 = vperm.xlu0 %2125, %v2008
          %v2127 = vpop.permute.xlu0 %2126
          %2128 = vset.pattern.permute.xlu0 1
          %2129 = vperm.xlu0 %2128, %v2009
          %v2130 = vpop.permute.xlu0 %2129
          %2131 = vset.pattern.permute.xlu0 1
          %2132 = vperm.xlu0 %2131, %v2010
          %v2133 = vpop.permute.xlu0 %2132
          %2134 = vset.pattern.permute.xlu0 1
          %2135 = vperm.xlu0 %2134, %v2011
          %v2136 = vpop.permute.xlu0 %2135
          %2137 = vset.pattern.permute.xlu0 1
          %2138 = vperm.xlu0 %2137, %v2012
          %v2139 = vpop.permute.xlu0 %2138
          %2140 = vset.pattern.permute.xlu0 1
          %2141 = vperm.xlu0 %2140, %v2013
          %v2142 = vpop.permute.xlu0 %2141
          %2143 = vset.pattern.permute.xlu0 1
          %2144 = vperm.xlu0 %2143, %v2014
          %v2145 = vpop.permute.xlu0 %2144
          %2146 = vset.pattern.permute.xlu0 1
          %2147 = vperm.xlu0 %2146, %v2015
          %v2148 = vpop.permute.xlu0 %2147
          %2149 = vset.pattern.permute.xlu0 1
          %2150 = vperm.xlu0 %2149, %v2016
          %v2151 = vpop.permute.xlu0 %2150
          %2152 = vset.pattern.permute.xlu0 1
          %2153 = vperm.xlu0 %2152, %v2017
          %v2154 = vpop.permute.xlu0 %2153
          %2155 = vset.pattern.permute.xlu0 1
          %2156 = vperm.xlu0 %2155, %v2018
          %v2157 = vpop.permute.xlu0 %2156
          %2158 = vset.pattern.permute.xlu0 1
          %2159 = vperm.xlu0 %2158, %v2019
          %v2160 = vpop.permute.xlu0 %2159
          %2161 = vset.pattern.permute.xlu0 1
          %2162 = vperm.xlu0 %2161, %v2020
          %v2163 = vpop.permute.xlu0 %2162
          %2164 = vset.pattern.permute.xlu0 1
          %2165 = vperm.xlu0 %2164, %v2021
          %v2166 = vpop.permute.xlu0 %2165
          %2167 = vset.pattern.permute.xlu0 1
          %2168 = vperm.xlu0 %2167, %v2022
          %v2169 = vpop.permute.xlu0 %2168
          %2170 = vset.pattern.permute.xlu0 1
          %2171 = vperm.xlu0 %2170, %v2023
          %v2172 = vpop.permute.xlu0 %2171
          %vm2173 = vcmp.eq.s32.totalorder %v2127, 1
          %vm2174 = vcmp.eq.s32.totalorder %v2130, 1
          %vm2175 = vcmp.eq.s32.totalorder %v2133, 1
          %vm2176 = vcmp.eq.s32.totalorder %v2136, 1
          %vm2177 = vcmp.eq.s32.totalorder %v2139, 1
          %vm2178 = vcmp.eq.s32.totalorder %v2142, 1
          %vm2179 = vcmp.eq.s32.totalorder %v2145, 1
          %vm2180 = vcmp.eq.s32.totalorder %v2148, 1
          %vm2181 = vcmp.eq.s32.totalorder %v2151, 1
          %vm2182 = vcmp.eq.s32.totalorder %v2154, 1
          %vm2183 = vcmp.eq.s32.totalorder %v2157, 1
          %vm2184 = vcmp.eq.s32.totalorder %v2160, 1
          %vm2185 = vcmp.eq.s32.totalorder %v2163, 1
          %vm2186 = vcmp.eq.s32.totalorder %v2166, 1
          %vm2187 = vcmp.eq.s32.totalorder %v2169, 1
          %vm2188 = vcmp.eq.s32.totalorder %v2172, 1
          %v2189 = vsel %vm2173, %v1912, -1e+30
          %v2190 = vsel %vm2174, %v1913, -1e+30
          %v2191 = vsel %vm2175, %v1914, -1e+30
          %v2192 = vsel %vm2176, %v1915, -1e+30
          %v2193 = vsel %vm2177, %v1916, -1e+30
          %v2194 = vsel %vm2178, %v1917, -1e+30
          %v2195 = vsel %vm2179, %v1918, -1e+30
          %v2196 = vsel %vm2180, %v1919, -1e+30
          %v2197 = vsel %vm2181, %v1920, -1e+30
          %v2198 = vsel %vm2182, %v1921, -1e+30
          %v2199 = vsel %vm2183, %v1922, -1e+30
          %v2200 = vsel %vm2184, %v1923, -1e+30
          %v2201 = vsel %vm2185, %v1924, -1e+30
          %v2202 = vsel %vm2186, %v1925, -1e+30
          %v2203 = vsel %vm2187, %v1926, -1e+30
          %v2204 = vsel %vm2188, %v1927, -1e+30
          %v2205 = vmax.f32 %v2189, %v2193
          %v2206 = vmax.f32 %v2190, %v2194
          %v2207 = vmax.f32 %v2191, %v2195
          %v2208 = vmax.f32 %v2192, %v2196
          %v2209 = vmax.f32 %v2205, %v2197
          %v2210 = vmax.f32 %v2206, %v2198
          %v2211 = vmax.f32 %v2207, %v2199
          %v2212 = vmax.f32 %v2208, %v2200
          %v2213 = vmax.f32 %v2209, %v2201
          %v2214 = vmax.f32 %v2210, %v2202
          %v2215 = vmax.f32 %v2211, %v2203
          %v2216 = vmax.f32 %v2212, %v2204
          %v2217 = vmax.f32 %v2213, %v2214
          %v2218 = vmax.f32 %v2215, %v2216
          %v2219 = vmax.f32 %v2217, %v2218
          %v2220 = vrot.slane %v2219, 4
          %v2221 = vmax.f32 %v2219, %v2220
          %v2222 = vrot.slane %v2221, 2
          %v2223 = vmax.f32 %v2221, %v2222
          %v2224 = vrot.slane %v2223, 1
          %v2225 = vmax.f32 %v2223, %v2224
          %vm2226 = vcmask 1040384
          %v2227 = vsel %vm2226, %v2124, %v2225
          %v2228 = vpack.c.bf16 %v2227, %v2227
          %v2229 = vld [vmem:[%s9] sm:$0xf]
          %v2230 = vld [vmem:[%s9 + $0x4] sm:$0xf]
          %v2231 = vld [vmem:[%s9 + $0x8] sm:$0xf]
          %v2232 = vld [vmem:[%s9 + $0xc] sm:$0xf]
          %v2233 = vld [vmem:[%s9 + $0x10] sm:$0xf]
          %v2234 = vld [vmem:[%s9 + $0x14] sm:$0xf]
          %v2235 = vld [vmem:[%s9 + $0x18] sm:$0xf]
          %v2236 = vld [vmem:[%s9 + $0x1c] sm:$0xf]
          %v2237 = vld [vmem:[%s9 + $0x20] sm:$0xf]
          %v2238 = vld [vmem:[%s9 + $0x24] sm:$0xf]
          %v2239 = vld [vmem:[%s9 + $0x28] sm:$0xf]
          %v2240 = vld [vmem:[%s9 + $0x2c] sm:$0xf]
          %v2241 = vld [vmem:[%s9 + $0x30] sm:$0xf]
          %v2242 = vld [vmem:[%s9 + $0x34] sm:$0xf]
          %v2243 = vld [vmem:[%s9 + $0x38] sm:$0xf]
          %v2244 = vld [vmem:[%s9 + $0x3c] sm:$0xf]
          %v2245 = vpack.c.bf16 %v1975, %v1975
          %v2246 = vld [vmem:[%s9 + $0x40] sm:$0xf]
          %v2247 = vld [vmem:[%s9 + $0x44] sm:$0xf]
          %v2248 = vld [vmem:[%s9 + $0x48] sm:$0xf]
          %v2249 = vld [vmem:[%s9 + $0x4c] sm:$0xf]
          %v2250 = vld [vmem:[%s9 + $0x50] sm:$0xf]
          %v2251 = vld [vmem:[%s9 + $0x54] sm:$0xf]
          %v2252 = vld [vmem:[%s9 + $0x58] sm:$0xf]
          %v2253 = vld [vmem:[%s9 + $0x5c] sm:$0xf]
          %v2254 = vld [vmem:[%s9 + $0x60] sm:$0xf]
          %v2255 = vld [vmem:[%s9 + $0x64] sm:$0xf]
          %v2256 = vld [vmem:[%s9 + $0x68] sm:$0xf]
          %v2257 = vld [vmem:[%s9 + $0x6c] sm:$0xf]
          %v2258 = vld [vmem:[%s9 + $0x70] sm:$0xf]
          %v2259 = vld [vmem:[%s9 + $0x74] sm:$0xf]
          %v2260 = vld [vmem:[%s9 + $0x78] sm:$0xf]
          %v2261 = vld [vmem:[%s9 + $0x7c] sm:$0xf]
          %v2278 = vunpack.c.l.b16 %v2246
          %v2279 = vunpack.c.l.b16 %v2247
          %v2280 = vunpack.c.l.b16 %v2248
          %v2281 = vunpack.c.l.b16 %v2249
          %v2282 = vunpack.c.l.b16 %v2250
          %v2283 = vunpack.c.l.b16 %v2251
          %v2284 = vunpack.c.l.b16 %v2252
          %v2285 = vunpack.c.l.b16 %v2253
          %v2286 = vunpack.c.l.b16 %v2254
          %v2287 = vunpack.c.l.b16 %v2255
          %v2288 = vunpack.c.l.b16 %v2256
          %v2289 = vunpack.c.l.b16 %v2257
          %v2290 = vunpack.c.l.b16 %v2258
          %v2291 = vunpack.c.l.b16 %v2259
          %v2292 = vunpack.c.l.b16 %v2260
          %v2293 = vunpack.c.l.b16 %v2261
          %v2294 = vpack.c.b16 %v2279, %v2278
          %v2295 = vpack.c.b16 %v2281, %v2280
          %v2296 = vpack.c.b16 %v2283, %v2282
          %v2297 = vpack.c.b16 %v2285, %v2284
          %v2298 = vpack.c.b16 %v2287, %v2286
          %v2299 = vpack.c.b16 %v2289, %v2288
          %v2300 = vpack.c.b16 %v2291, %v2290
          %v2301 = vpack.c.b16 %v2293, %v2292
          %2310 = vmatprep.subr.bf16.mxu0 0
          %2311 = vmatpush1.bf16.msra.mxu0 %v2294
          %2312 = vmatprep.subr.bf16.mxu0 0
          %2313 = vmatpush1.bf16.msra.mxu0 %v2295
          %2314 = vmatprep.subr.bf16.mxu0 0
          %2315 = vmatpush1.bf16.msra.mxu0 %v2296
          %2316 = vmatprep.subr.bf16.mxu0 0
          %2317 = vmatpush1.bf16.msra.mxu0 %v2297
          %2318 = vmatprep.subr.bf16.mxu0 0
          %2319 = vmatpush1.bf16.msra.mxu0 %v2298
          %2320 = vmatprep.subr.bf16.mxu0 0
          %2321 = vmatpush1.bf16.msra.mxu0 %v2299
          %2322 = vmatprep.subr.bf16.mxu0 0
          %2323 = vmatpush1.bf16.msra.mxu0 %v2300
          %2324 = vmatprep.subr.bf16.mxu0 0
          %2325 = vmatpush1.bf16.msra.mxu0 %v2301
          %2326 = vmatprep.subr.bf16.mxu0 0
          %2327 = vmatpush1.bf16.msra.mxu0 0
          %2328 = vmatprep.subr.bf16.mxu0 0
          %2329 = vmatpush1.bf16.msra.mxu0 0
          %2330 = vmatprep.subr.bf16.mxu0 0
          %2331 = vmatpush1.bf16.msra.mxu0 0
          %2332 = vmatprep.subr.bf16.mxu0 0
          %2333 = vmatpush1.bf16.msra.mxu0 0
          %2334 = vmatprep.subr.bf16.mxu0 0
          %2335 = vmatpush1.bf16.msra.mxu0 0
          %2336 = vmatprep.subr.bf16.mxu0 0
          %2337 = vmatpush1.bf16.msra.mxu0 0
          %2338 = vmatprep.subr.bf16.mxu0 0
          %2339 = vmatpush1.bf16.msra.mxu0 0
          %2340 = vmatprep.subr.bf16.mxu0 0
          %2341 = vmatpush1.bf16.msra.mxu0 0
          %2342 = vmatprep.mubr.bf16.mxu0 0
          %2343 = vmatmul.mubr.bf16.gmra.mrb[0].mxu0 %v2245
          %v2344 = vpop.f32.mrb[0].mxu0
          %v2345 = vadd.f32 0.0, %v2344
          %v2346 = vpop.f32.mrb[0].mxu0
          %v2347 = vpop.f32.mrb[0].mxu0
          %v2348 = vpop.f32.mrb[0].mxu0
          %2349 = vdwg.mxu0
          %v2366 = vunpack.c.l.b16 %v2229
          %v2367 = vunpack.c.l.b16 %v2230
          %v2368 = vunpack.c.l.b16 %v2231
          %v2369 = vunpack.c.l.b16 %v2232
          %v2370 = vunpack.c.l.b16 %v2233
          %v2371 = vunpack.c.l.b16 %v2234
          %v2372 = vunpack.c.l.b16 %v2235
          %v2373 = vunpack.c.l.b16 %v2236
          %v2374 = vunpack.c.l.b16 %v2237
          %v2375 = vunpack.c.l.b16 %v2238
          %v2376 = vunpack.c.l.b16 %v2239
          %v2377 = vunpack.c.l.b16 %v2240
          %v2378 = vunpack.c.l.b16 %v2241
          %v2379 = vunpack.c.l.b16 %v2242
          %v2380 = vunpack.c.l.b16 %v2243
          %v2381 = vunpack.c.l.b16 %v2244
          %v2382 = vpack.c.b16 %v2367, %v2366
          %v2383 = vpack.c.b16 %v2369, %v2368
          %v2384 = vpack.c.b16 %v2371, %v2370
          %v2385 = vpack.c.b16 %v2373, %v2372
          %v2386 = vpack.c.b16 %v2375, %v2374
          %v2387 = vpack.c.b16 %v2377, %v2376
          %v2388 = vpack.c.b16 %v2379, %v2378
          %v2389 = vpack.c.b16 %v2381, %v2380
          %2398 = vmatprep.subr.bf16.mxu0 0
          %2399 = vmatpush1.bf16.msra.mxu0 %v2382
          %2400 = vmatprep.subr.bf16.mxu0 0
          %2401 = vmatpush1.bf16.msra.mxu0 %v2383
          %2402 = vmatprep.subr.bf16.mxu0 0
          %2403 = vmatpush1.bf16.msra.mxu0 %v2384
          %2404 = vmatprep.subr.bf16.mxu0 0
          %2405 = vmatpush1.bf16.msra.mxu0 %v2385
          %2406 = vmatprep.subr.bf16.mxu0 0
          %2407 = vmatpush1.bf16.msra.mxu0 %v2386
          %2408 = vmatprep.subr.bf16.mxu0 0
          %2409 = vmatpush1.bf16.msra.mxu0 %v2387
          %2410 = vmatprep.subr.bf16.mxu0 0
          %2411 = vmatpush1.bf16.msra.mxu0 %v2388
          %2412 = vmatprep.subr.bf16.mxu0 0
          %2413 = vmatpush1.bf16.msra.mxu0 %v2389
          %2414 = vmatprep.subr.bf16.mxu0 0
          %2415 = vmatpush1.bf16.msra.mxu0 0
          %2416 = vmatprep.subr.bf16.mxu0 0
          %2417 = vmatpush1.bf16.msra.mxu0 0
          %2418 = vmatprep.subr.bf16.mxu0 0
          %2419 = vmatpush1.bf16.msra.mxu0 0
          %2420 = vmatprep.subr.bf16.mxu0 0
          %2421 = vmatpush1.bf16.msra.mxu0 0
          %2422 = vmatprep.subr.bf16.mxu0 0
          %2423 = vmatpush1.bf16.msra.mxu0 0
          %2424 = vmatprep.subr.bf16.mxu0 0
          %2425 = vmatpush1.bf16.msra.mxu0 0
          %2426 = vmatprep.subr.bf16.mxu0 0
          %2427 = vmatpush1.bf16.msra.mxu0 0
          %2428 = vmatprep.subr.bf16.mxu0 0
          %2429 = vmatpush1.bf16.msra.mxu0 0
          %2430 = vmatprep.mubr.bf16.mxu0 0
          %2431 = vmatmul.mubr.bf16.gmra.mrb[0].mxu0 %v2228
          %v2432 = vpop.f32.mrb[0].mxu0
          %v2433 = vadd.f32 %v2345, %v2432
          %v2434 = vpop.f32.mrb[0].mxu0
          %v2435 = vpop.f32.mrb[0].mxu0
          %v2436 = vpop.f32.mrb[0].mxu0
          %2437 = vdwg.mxu0
          %v2438 = vld [vmem:[%s10] sm:$0x1]
          %v2440 = vlaneseq
          %v2441 = vshrl.u32 %v2440, 7
          %v2442 = vsub.s32 0, %v2441
          %v2443 = vrot.slane %v2438, %v2442
          %v2445 = vadd.f32 %v2433, %v2443
          %v2446 = vtanh.pop %v2445
          %v2447 = vpack.c.bf16 %v2446, %v2446
          %v2448 = vld [vmem:[%s11] sm:$0xf]
          %v2449 = vld [vmem:[%s11 + $0x4] sm:$0xf]
          %v2450 = vld [vmem:[%s11 + $0x8] sm:$0xf]
          %v2451 = vld [vmem:[%s11 + $0xc] sm:$0xf]
          %v2452 = vld [vmem:[%s11 + $0x10] sm:$0xf]
          %v2453 = vld [vmem:[%s11 + $0x14] sm:$0xf]
          %v2454 = vld [vmem:[%s11 + $0x18] sm:$0xf]
          %v2455 = vld [vmem:[%s11 + $0x1c] sm:$0xf]
          %v2456 = vld [vmem:[%s11 + $0x20] sm:$0xf]
          %v2457 = vld [vmem:[%s11 + $0x24] sm:$0xf]
          %v2458 = vld [vmem:[%s11 + $0x28] sm:$0xf]
          %v2459 = vld [vmem:[%s11 + $0x2c] sm:$0xf]
          %v2460 = vld [vmem:[%s11 + $0x30] sm:$0xf]
          %v2461 = vld [vmem:[%s11 + $0x34] sm:$0xf]
          %v2462 = vld [vmem:[%s11 + $0x38] sm:$0xf]
          %v2463 = vld [vmem:[%s11 + $0x3c] sm:$0xf]
          %v2464 = vld [vmem:[%s12] sm:$0x1]
          %v2466 = vlaneseq
          %v2467 = vshrl.u32 %v2466, 7
          %v2468 = vsub.s32 0, %v2467
          %v2469 = vrot.slane %v2464, %v2468
          %v2487 = vunpack.c.l.b16 %v2448
          %v2488 = vunpack.c.l.b16 %v2449
          %v2489 = vunpack.c.l.b16 %v2450
          %v2490 = vunpack.c.l.b16 %v2451
          %v2491 = vunpack.c.l.b16 %v2452
          %v2492 = vunpack.c.l.b16 %v2453
          %v2493 = vunpack.c.l.b16 %v2454
          %v2494 = vunpack.c.l.b16 %v2455
          %v2495 = vunpack.c.l.b16 %v2456
          %v2496 = vunpack.c.l.b16 %v2457
          %v2497 = vunpack.c.l.b16 %v2458
          %v2498 = vunpack.c.l.b16 %v2459
          %v2499 = vunpack.c.l.b16 %v2460
          %v2500 = vunpack.c.l.b16 %v2461
          %v2501 = vunpack.c.l.b16 %v2462
          %v2502 = vunpack.c.l.b16 %v2463
          %v2503 = vpack.c.b16 %v2488, %v2487
          %v2504 = vpack.c.b16 %v2490, %v2489
          %v2505 = vpack.c.b16 %v2492, %v2491
          %v2506 = vpack.c.b16 %v2494, %v2493
          %v2507 = vpack.c.b16 %v2496, %v2495
          %v2508 = vpack.c.b16 %v2498, %v2497
          %v2509 = vpack.c.b16 %v2500, %v2499
          %v2510 = vpack.c.b16 %v2502, %v2501
          %2519 = vmatprep.subr.bf16.mxu0 0
          %2520 = vmatpush1.bf16.msra.mxu0 %v2503
          %2521 = vmatprep.subr.bf16.mxu0 0
          %2522 = vmatpush1.bf16.msra.mxu0 %v2504
          %2523 = vmatprep.subr.bf16.mxu0 0
          %2524 = vmatpush1.bf16.msra.mxu0 %v2505
          %2525 = vmatprep.subr.bf16.mxu0 0
          %2526 = vmatpush1.bf16.msra.mxu0 %v2506
          %2527 = vmatprep.subr.bf16.mxu0 0
          %2528 = vmatpush1.bf16.msra.mxu0 %v2507
          %2529 = vmatprep.subr.bf16.mxu0 0
          %2530 = vmatpush1.bf16.msra.mxu0 %v2508
          %2531 = vmatprep.subr.bf16.mxu0 0
          %2532 = vmatpush1.bf16.msra.mxu0 %v2509
          %2533 = vmatprep.subr.bf16.mxu0 0
          %2534 = vmatpush1.bf16.msra.mxu0 %v2510
          %2535 = vmatprep.subr.bf16.mxu0 0
          %2536 = vmatpush1.bf16.msra.mxu0 0
          %2537 = vmatprep.subr.bf16.mxu0 0
          %2538 = vmatpush1.bf16.msra.mxu0 0
          %2539 = vmatprep.subr.bf16.mxu0 0
          %2540 = vmatpush1.bf16.msra.mxu0 0
          %2541 = vmatprep.subr.bf16.mxu0 0
          %2542 = vmatpush1.bf16.msra.mxu0 0
          %2543 = vmatprep.subr.bf16.mxu0 0
          %2544 = vmatpush1.bf16.msra.mxu0 0
          %2545 = vmatprep.subr.bf16.mxu0 0
          %2546 = vmatpush1.bf16.msra.mxu0 0
          %2547 = vmatprep.subr.bf16.mxu0 0
          %2548 = vmatpush1.bf16.msra.mxu0 0
          %2549 = vmatprep.subr.bf16.mxu0 0
          %2550 = vmatpush1.bf16.msra.mxu0 0
          %2551 = vmatprep.mubr.bf16.mxu0 0
          %2552 = vmatmul.mubr.bf16.gmra.mrb[0].mxu0 %v2447
          %v2553 = vpop.f32.mrb[0].mxu0
          %v2554 = vadd.f32 %v2469, %v2553
          %v2555 = vpop.f32.mrb[0].mxu0
          %v2556 = vpop.f32.mrb[0].mxu0
          %v2557 = vpop.f32.mrb[0].mxu0
          %2558 = vdwg.mxu0
          %v2559 = vtanh.pop %v2554
          %v2560 = vpack.c.bf16 %v2559, %v2559
          %v2561 = vld [vmem:[%s13] sm:$0xf]
          %v2562 = vld [vmem:[%s13 + $0x4] sm:$0xf]
          %v2563 = vld [vmem:[%s13 + $0x8] sm:$0xf]
          %v2564 = vld [vmem:[%s13 + $0xc] sm:$0xf]
          %v2565 = vld [vmem:[%s13 + $0x10] sm:$0xf]
          %v2566 = vld [vmem:[%s13 + $0x14] sm:$0xf]
          %v2567 = vld [vmem:[%s13 + $0x18] sm:$0xf]
          %v2568 = vld [vmem:[%s13 + $0x1c] sm:$0xf]
          %v2569 = vld [vmem:[%s13 + $0x20] sm:$0xf]
          %v2570 = vld [vmem:[%s13 + $0x24] sm:$0xf]
          %v2571 = vld [vmem:[%s13 + $0x28] sm:$0xf]
          %v2572 = vld [vmem:[%s13 + $0x2c] sm:$0xf]
          %v2573 = vld [vmem:[%s13 + $0x30] sm:$0xf]
          %v2574 = vld [vmem:[%s13 + $0x34] sm:$0xf]
          %v2575 = vld [vmem:[%s13 + $0x38] sm:$0xf]
          %v2576 = vld [vmem:[%s13 + $0x3c] sm:$0xf]
          %v2577 = vld [vmem:[%s14] sm:$0x1]
          %v2579 = vlaneseq
          %v2580 = vshrl.u32 %v2579, 7
          %v2581 = vsub.s32 0, %v2580
          %v2582 = vrot.slane %v2577, %v2581
          %v2600 = vunpack.c.l.b16 %v2561
          %v2601 = vunpack.c.l.b16 %v2562
          %v2602 = vunpack.c.l.b16 %v2563
          %v2603 = vunpack.c.l.b16 %v2564
          %v2604 = vunpack.c.l.b16 %v2565
          %v2605 = vunpack.c.l.b16 %v2566
          %v2606 = vunpack.c.l.b16 %v2567
          %v2607 = vunpack.c.l.b16 %v2568
          %v2608 = vunpack.c.l.b16 %v2569
          %v2609 = vunpack.c.l.b16 %v2570
          %v2610 = vunpack.c.l.b16 %v2571
          %v2611 = vunpack.c.l.b16 %v2572
          %v2612 = vunpack.c.l.b16 %v2573
          %v2613 = vunpack.c.l.b16 %v2574
          %v2614 = vunpack.c.l.b16 %v2575
          %v2615 = vunpack.c.l.b16 %v2576
          %v2616 = vpack.c.b16 %v2601, %v2600
          %v2617 = vpack.c.b16 %v2603, %v2602
          %v2618 = vpack.c.b16 %v2605, %v2604
          %v2619 = vpack.c.b16 %v2607, %v2606
          %v2620 = vpack.c.b16 %v2609, %v2608
          %v2621 = vpack.c.b16 %v2611, %v2610
          %v2622 = vpack.c.b16 %v2613, %v2612
          %v2623 = vpack.c.b16 %v2615, %v2614
          %2632 = vmatprep.subr.bf16.mxu0 0
          %2633 = vmatpush1.bf16.msra.mxu0 %v2616
          %2634 = vmatprep.subr.bf16.mxu0 0
          %2635 = vmatpush1.bf16.msra.mxu0 %v2617
          %2636 = vmatprep.subr.bf16.mxu0 0
          %2637 = vmatpush1.bf16.msra.mxu0 %v2618
          %2638 = vmatprep.subr.bf16.mxu0 0
          %2639 = vmatpush1.bf16.msra.mxu0 %v2619
          %2640 = vmatprep.subr.bf16.mxu0 0
          %2641 = vmatpush1.bf16.msra.mxu0 %v2620
          %2642 = vmatprep.subr.bf16.mxu0 0
          %2643 = vmatpush1.bf16.msra.mxu0 %v2621
          %2644 = vmatprep.subr.bf16.mxu0 0
          %2645 = vmatpush1.bf16.msra.mxu0 %v2622
          %2646 = vmatprep.subr.bf16.mxu0 0
          %2647 = vmatpush1.bf16.msra.mxu0 %v2623
          %2648 = vmatprep.subr.bf16.mxu0 0
          %2649 = vmatpush1.bf16.msra.mxu0 0
          %2650 = vmatprep.subr.bf16.mxu0 0
          %2651 = vmatpush1.bf16.msra.mxu0 0
          %2652 = vmatprep.subr.bf16.mxu0 0
          %2653 = vmatpush1.bf16.msra.mxu0 0
          %2654 = vmatprep.subr.bf16.mxu0 0
          %2655 = vmatpush1.bf16.msra.mxu0 0
          %2656 = vmatprep.subr.bf16.mxu0 0
          %2657 = vmatpush1.bf16.msra.mxu0 0
          %2658 = vmatprep.subr.bf16.mxu0 0
          %2659 = vmatpush1.bf16.msra.mxu0 0
          %2660 = vmatprep.subr.bf16.mxu0 0
          %2661 = vmatpush1.bf16.msra.mxu0 0
          %2662 = vmatprep.subr.bf16.mxu0 0
          %2663 = vmatpush1.bf16.msra.mxu0 0
          %2664 = vmatprep.mubr.bf16.mxu0 0
          %2665 = vmatmul.mubr.bf16.gmra.mrb[0].mxu0 %v2560
          %v2666 = vpop.f32.mrb[0].mxu0
          %v2667 = vadd.f32 %v2582, %v2666
          %v2668 = vpop.f32.mrb[0].mxu0
          %v2669 = vpop.f32.mrb[0].mxu0
          %v2670 = vpop.f32.mrb[0].mxu0
          %2671 = vdwg.mxu0
          %vm2672 = vcmask 58368
          %v2673 = vsel %vm2672, %v2667, -inf
          %2674 = vmax.xlane.f32.xlu0 %v2673
          %v2675 = vpop.xlane.xlu0 %2674
          %v2676 = vsub.f32 %v2667, %v2675
          %v2677 = vmul.f32 %v2676, 1.442695
          %v2678 = vpow.pop %v2677
          %v2679 = vsel %vm2672, %v2678, 0.0
          %2680 = vadd.xlane.f32.xlu0 %v2679
          %v2681 = vpop.xlane.xlu0 %2680
          %v2682 = vlog2.pop %v2681
          %v2683 = vmul.f32 %v2682, 0.6931472
          %v2684 = vsub.f32 %v2676, %v2683
          %2685 = vst.msk [vmem:[#allocation3] sm:$0x3] %vm2672, %v2684
        $region92: #{graph_cnn_forward.1} parent=79 // pred_fallthru
          _
        // Predicated region
        $region93: #{graph_cnn_forward.1} parent=79 // pred_check
          %p2686 = pneg %p366
        $region94: #{graph_cnn_forward.1} parent=79 // pred_check_branch
          %2688 = sbr.rel (%p2686) target = $region96
        $region95: #{graph_cnn_forward.1} parent=79 // pred_region
          %s2690 = ssub.s32 32, 32
          %2691 = vsyncadd [#allocation4], %s2690
          %s2693 = sshll.u32 [#allocation3], 4
          %s2694 = int_to_ptr.vmem [resolvable:$true] %s2693
          %2696 = dma.vmem_to_hbm [thread:$0]  %s2694, 32, %s15, [#allocation4]
        $region96: #{graph_cnn_forward.1} parent=79 // pred_fallthru
          _
        // Predicated region
        $region97: #{graph_cnn_forward.1} parent=79 // pred_check
          %p2697 = pneg %p366
        $region98: #{graph_cnn_forward.1} parent=79 // pred_check_branch
          %2699 = sbr.rel (%p2697) target = $region100
        $region99: #{graph_cnn_forward.1} parent=79 // pred_region
          %2700 = dma.done [#allocation4], 32
        $region100: #{graph_cnn_forward.1} parent=79 // pred_fallthru
          _
      $region80: #{graph_cnn_forward.1} parent=5 // pred_fallthru
        _
      %p2701 = scmp.le.s32.totalorder 2, %s22
      // Predicated region
      $region101: #{graph_cnn_forward.1} parent=5 // pred_check
        %p2702 = pneg %p2701
      $region102: #{graph_cnn_forward.1} parent=5 // pred_check_branch
        %2704 = sbr.rel (%p2702) target = $region104
      $region103: #{graph_cnn_forward.1} parent=5 // pred_region
        %s2705 = ssub.s32 %s22, 2
      $region104: #{graph_cnn_forward.1} parent=5 // pred_fallthru
        _
    $region6: #{graph_cnn_forward.1} parent=1 // loop_footer
      %s26 = sadd.s32 1, %s22
    $region7: #{graph_cnn_forward.1} parent=1 // loop_footer_branch
      %21 = sbr.rel target = $region3
    $region8: #{graph_cnn_forward.1} parent=1 // loop_exit
      _
    %2706 = vsyncpa [#allocation4], 1
    %s2707 = scalar_lea.sflag [#allocation4], 1
    %2708 = vsyncpa %s2707, 1

</llo_original>
